<compile_context>
chip_gen: v7x
topology: tpu7x:2x2x1
jax: 0.10.0
libtpu: 0.0.40
codegen_flags: <defaults>
</compile_context>

<pallas_src>
import functools
import math

import jax
import jax.numpy as jnp
from jax.experimental import pallas as pl
from jax.experimental.pallas import tpu as pltpu


# --------------------------------------------------------------------------
# small helpers
# --------------------------------------------------------------------------

def _layernorm(x, gamma, beta, eps=1e-5):
    # torch.nn.LayerNorm over the last dim (biased variance), eps=1e-5
    mean = jnp.mean(x, axis=-1, keepdims=True)
    var = jnp.mean(jnp.square(x - mean), axis=-1, keepdims=True)
    return (x - mean) * jax.lax.rsqrt(var + eps) * gamma + beta


def _round_up(n, m):
    return ((n + m - 1) // m) * m


@functools.lru_cache(maxsize=None)
def _vmem_capacity_bytes():
    """Physical per-core VMEM (128 MiB on v5e/v6e, 64 MiB on v7x)."""
    try:
        info = pltpu.get_tpu_info()
        for name in ("vmem_capacity_bytes", "vmem_size_bytes", "vmem_bytes"):
            cap = getattr(info, name, None)
            if cap:
                return max(int(cap), 32 * 1024 * 1024)
    except Exception:
        pass
    return 64 * 1024 * 1024          # conservative fallback: assume v7x-sized VMEM


@functools.lru_cache(maxsize=None)
def _single_buffered_weights_ok():
    """Probe whether pl.Buffered(1) (single-buffered resident operands) is
    supported by this JAX/Mosaic build; otherwise fall back to the default
    double-buffered weights."""
    if not hasattr(pl, "Buffered"):
        return False
    try:
        def _probe(x_ref, o_ref):
            o_ref[...] = x_ref[...] + 1.0

        x = jnp.zeros((8, 128), jnp.float32)
        out = pl.pallas_call(
            _probe,
            out_shape=jax.ShapeDtypeStruct((8, 128), jnp.float32),
            grid=(2,),
            in_specs=[pl.BlockSpec((8, 128), lambda i: (0, 0),
                                   pipeline_mode=pl.Buffered(1))],
            out_specs=pl.BlockSpec((8, 128), lambda i: (0, 0)),
        )(x)
        jax.block_until_ready(out)
        return bool(jnp.all(out == 1.0))
    except Exception:
        return False


# --------------------------------------------------------------------------
# VMEM footprint model + tile selection (generation aware)
# --------------------------------------------------------------------------

def _layer_vmem_bytes(S, D, F_, H, block_q, block_k, has_dep, weight_bufs):
    """Rough upper bound of the per-grid-step VMEM working set (bytes)."""
    bf16, f32 = 2, 4
    hd = D // H
    lane = lambda n: _round_up(n, 128)
    sub = lambda n: _round_up(n, 8)
    weights = (3 * D * lane(D) + D * lane(F_) + F_ * lane(D)) * bf16 * weight_bufs
    small = (9 * lane(D) + lane(F_)) * f32 * weight_bufs           # biases / LN params
    x_io = sub(S) * lane(D) * bf16 * 2 + sub(block_q) * lane(D) * bf16 * 2
    masks = lane(S) * f32 * 2 + (sub(block_q) * lane(S) * f32 * 2 if has_dep else 0)
    kv = H * (sub(hd) * lane(S) + sub(S) * lane(hd)) * bf16        # K^T + V scratch
    per_tile = (3 * H * sub(block_q) * lane(block_k)               # s / p temporaries
                + 2 * H * sub(block_q) * lane(hd)                  # acc + att
                + 6 * sub(block_q) * lane(D)                       # q, x_q, h1, h2, ...
                + 2 * sub(block_q) * lane(F_)) * f32               # FFN hidden
    return weights + small + x_io + masks + kv + per_tile


def _pick_block_k(S):
    if S <= 512:
        return S
    for c in (512, 256, 128):
        if S % c == 0:
            return c
    return S  # TODO(synk): ragged key tiles for S not divisible by 128/256/512.


def _pick_block_q(S, D, F_, H, block_k, has_dep, weight_bufs, cap):
    budget = max(int(0.70 * (cap - 16 * 1024 * 1024)), 24 * 1024 * 1024)
    cands = []
    if S <= 512:
        cands.append(S)
    cands += [c for c in (512, 256, 128, 64, 32, 16, 8) if c < S and S % c == 0]
    if not cands:
        return S  # TODO(synk): no suitable divisor -> no ragged tail handling.
    for c in cands:
        if _layer_vmem_bytes(S, D, F_, H, c, block_k, has_dep, weight_bufs) <= budget:
            return c
    return cands[-1]


def _vmem_limit_bytes(est, cap):
    lo = 32 * 1024 * 1024
    hi = max(cap - 16 * 1024 * 1024, lo)   # ~112 MiB on v5e/v6e, ~48 MiB on v7x
    return int(min(max(int(1.4 * est), lo), hi))


# --------------------------------------------------------------------------
# kernel
# --------------------------------------------------------------------------

def encoder_layer_kernel(*args, n_heads, block_q, block_k, has_dep):
    """One fused encoder layer; grid = (batch, query-row tiles)."""
    if has_dep:
        (x_ref, pad_ref, dep_ref,
         wq_ref, bq_ref, wk_ref, bk_ref, wv_ref, bv_ref,
         ln1g_ref, ln1b_ref, w1_ref, b1_ref, w2_ref, b2_ref,
         ln2g_ref, ln2b_ref,
         o_ref, k_scr, v_scr) = args
    else:
        dep_ref = None
        (x_ref, pad_ref,
         wq_ref, bq_ref, wk_ref, bk_ref, wv_ref, bv_ref,
         ln1g_ref, ln1b_ref, w1_ref, b1_ref, w2_ref, b2_ref,
         ln2g_ref, ln2b_ref,
         o_ref, k_scr, v_scr) = args

    S, D = x_ref.shape[1], x_ref.shape[2]
    H = n_heads
    hd = D // H
    scale = 1.0 / math.sqrt(hd)
    n_kv = S // block_k
    qi = pl.program_id(1)

    # ---- once per batch element: K/V projection of the full sequence -------
    # TODO(synk): this still serializes two (S,D)x(D,D) matmuls ahead of the
    #             first query tile of each batch element; a dedicated leading
    #             grid sub-step would overlap it with the previous batch.
    @pl.when(qi == 0)
    def _():
        x_full = x_ref[0]                                                # (S, D) bf16
        k = jnp.dot(x_full, wk_ref[...],
                    preferred_element_type=jnp.float32) + bk_ref[...]
        v = jnp.dot(x_full, wv_ref[...],
                    preferred_element_type=jnp.float32) + bv_ref[...]
        # K stored transposed (H, hd, S): lane axis = S (dense even when
        # hd < 128) and the QK^T RHS is already in natural [K, N] layout.
        k_scr[...] = jnp.stack(
            [k[:, h * hd:(h + 1) * hd].T for h in range(H)], axis=0
        ).astype(jnp.bfloat16)                                           # (H, hd, S)
        v_scr[...] = jnp.stack(
            [v[:, h * hd:(h + 1) * hd] for h in range(H)], axis=0
        ).astype(jnp.bfloat16)                                           # (H, S, hd)

    # ---- current tile of query rows -----------------------------------------
    row0 = pl.multiple_of(qi * block_q, block_q)
    x_q = x_ref[0, pl.ds(row0, block_q), :]                              # (tq, D) bf16
    q = jnp.dot(x_q, wq_ref[...],
                preferred_element_type=jnp.float32) + bq_ref[...]        # (tq, D) f32
    qh = jnp.stack([q[:, h * hd:(h + 1) * hd] for h in range(H)], axis=0)
    qh = (qh * scale).astype(jnp.bfloat16)                               # (H, tq, hd)

    pad_row = pad_ref[0]                                                 # (1, S) f32

    # ---- flash-style online softmax over key tiles (static unroll) ---------
    m = jnp.full((H, block_q, 1), -1e30, jnp.float32)
    l = jnp.zeros((H, block_q, 1), jnp.float32)
    acc = jnp.zeros((H, block_q, hd), jnp.float32)
    for kt in range(n_kv):
        ks = kt * block_k                                                # static offset
        kblk = k_scr[:, :, ks:ks + block_k]                              # (H, hd, bk)
        s = jnp.einsum('hqd,hdk->hqk', qh, kblk,
                       preferred_element_type=jnp.float32)               # (H, tq, bk)
        bias = pad_row[:, ks:ks + block_k]                               # (1, bk)
        if has_dep:
            bias = bias + dep_ref[:, ks:ks + block_k]                    # (tq, bk)
        s = s + bias[None]
        m_new = jnp.maximum(m, jnp.max(s, axis=-1, keepdims=True))
        alpha = jnp.exp(m - m_new)
        p_kt = jnp.exp(s - m_new)
        l = alpha * l + jnp.sum(p_kt, axis=-1, keepdims=True)
        vblk = v_scr[:, ks:ks + block_k, :]                              # (H, bk, hd)
        acc = alpha * acc + jnp.einsum('hqk,hkd->hqd', p_kt.astype(jnp.bfloat16),
                                       vblk, preferred_element_type=jnp.float32)
        m = m_new

    # TODO(synk): attention-weight dropout and last_attention_map caching are
    #             training/debug-only side effects; omitted (eval mode).
    att = acc * pl.reciprocal(l, approx=True)                            # (H, tq, hd)
    att_flat = jnp.concatenate([att[h] for h in range(H)], axis=-1)      # (tq, D)

    # residual + first LayerNorm (f32)
    h1 = _layernorm(x_q.astype(jnp.float32) + att_flat, ln1g_ref[...], ln1b_ref[...])

    # feed-forward: Linear -> ReLU -> Linear (bf16 matmuls, f32 accumulate)
    f = jnp.dot(h1.astype(jnp.bfloat16), w1_ref[...],
                preferred_element_type=jnp.float32) + b1_ref[...]
    f = jnp.maximum(f, 0.0)
    f = jnp.dot(f.astype(jnp.bfloat16), w2_ref[...],
                preferred_element_type=jnp.float32) + b2_ref[...]

    # residual + second LayerNorm
    h2 = _layernorm(h1 + f, ln2g_ref[...], ln2b_ref[...])
    o_ref[0] = h2.astype(o_ref.dtype)


# --------------------------------------------------------------------------
# per-layer pallas_call wrapper
# --------------------------------------------------------------------------

def encoder_layer(x, pad_add, dep_mask, p, n_heads, *, block_q, block_k,
                  vmem_limit, weight_mode):
    B, S, D = x.shape
    F_ = p["w1"].shape[1]
    hd = D // n_heads
    n_q = S // block_q
    has_dep = dep_mask is not None

    def wspec(shape):
        n = len(shape)
        idx = lambda b, q, _n=n: (0,) * _n
        if weight_mode is None:
            return pl.BlockSpec(shape, idx)
        # Constant index map -> fetched once; single-buffered to halve the
        # resident weight VMEM (big win on v7x's 64 MiB VMEM).
        return pl.BlockSpec(shape, idx, pipeline_mode=weight_mode)

    in_specs = [
        pl.BlockSpec((1, S, D), lambda b, q: (b, 0, 0)),   # x (full sequence per batch)
        pl.BlockSpec((1, 1, S), lambda b, q: (b, 0, 0)),   # additive key-padding mask
    ]
    operands = [x, pad_add]
    if has_dep:
        in_specs.append(pl.BlockSpec((block_q, S), lambda b, q: (q, 0)))
        operands.append(dep_mask)
    in_specs += [
        wspec((D, D)), wspec((1, D)),       # Wq, bq
        wspec((D, D)), wspec((1, D)),       # Wk, bk
        wspec((D, D)), wspec((1, D)),       # Wv, bv
        wspec((1, D)), wspec((1, D)),       # ln1 gamma, beta
        wspec((D, F_)), wspec((1, F_)),     # W1, b1
        wspec((F_, D)), wspec((1, D)),      # W2, b2
        wspec((1, D)), wspec((1, D)),       # ln2 gamma, beta
    ]
    operands += [p["wq"], p["bq"], p["wk"], p["bk"], p["wv"], p["bv"],
                 p["ln1g"], p["ln1b"], p["w1"], p["b1"], p["w2"], p["b2"],
                 p["ln2g"], p["ln2b"]]

    kernel = functools.partial(encoder_layer_kernel, n_heads=n_heads,
                               block_q=block_q, block_k=block_k, has_dep=has_dep)

    # TODO(synk): with B == 1 the batch axis gives no megacore parallelism on
    #             v7x; splitting the q axis across cores (per-core K/V scratch)
    #             is not implemented.
    return pl.pallas_call(
        kernel,
        out_shape=jax.ShapeDtypeStruct((B, S, D), x.dtype),
        grid=(B, n_q),
        in_specs=in_specs,
        out_specs=pl.BlockSpec((1, block_q, D), lambda b, q: (b, q, 0)),
        scratch_shapes=[
            pltpu.VMEM((n_heads, hd, S), jnp.bfloat16),   # K^T (head-split, lane-dense)
            pltpu.VMEM((n_heads, S, hd), jnp.bfloat16),   # V  (head-split)
        ],
        # Aliasing x to the output is safe here: the (1,S,D) x block has a
        # q-constant index map, so x[b] is fully resident in VMEM before any
        # output tile of batch b is written back to the (aliased) HBM buffer.
        # Do NOT change the x BlockSpec to re-fetch within a batch element.
        input_output_aliases={0: 0},
        compiler_params=pltpu.CompilerParams(
            dimension_semantics=("parallel", "arbitrary"),
            vmem_limit_bytes=vmem_limit),
    )(*operands)


# --------------------------------------------------------------------------
# full encoder (matches TransformerEncoder.forward(sequence, mask, padding))
# --------------------------------------------------------------------------

def transformer_encoder(sequence, mask, src_key_padding_mask, layer_params, n_heads):
    B, S, D = sequence.shape
    F_ = layer_params[0]["w1"].shape[1]
    H = n_heads

    # finite stand-in for -inf: fully-masked rows give a uniform distribution
    # instead of torch's NaN behaviour (those rows are padding anyway).
    neg = jnp.float32(-1e30)
    pad_add = jnp.where(src_key_padding_mask, neg, jnp.float32(0.0))
    pad_add = pad_add.reshape(B, 1, S).astype(jnp.float32)        # (B, 1, S) key mask
    dep = None if mask is None else jnp.asarray(mask, jnp.float32)
    has_dep = dep is not None

    weight_mode = pl.Buffered(1) if _single_buffered_weights_ok() else None
    weight_bufs = 1 if weight_mode is not None else 2
    cap = _vmem_capacity_bytes()
    block_k = _pick_block_k(S)
    block_q = _pick_block_q(S, D, F_, H, block_k, has_dep, weight_bufs, cap)
    est = _layer_vmem_bytes(S, D, F_, H, block_q, block_k, has_dep, weight_bufs)
    vmem_limit = _vmem_limit_bytes(est, cap)

    # TODO(synk): cross-layer weight prefetch (DMA futures or a single
    #             pallas_call with a layer grid axis) is not implemented; each
    #             layer is its own pallas_call, so its weight fetch is cold.
    # TODO(synk): fp8 FFN weights on v7x (2x MXU / half the weight footprint)
    #             not implemented; weights stay bf16 on all generations.
    x = sequence.astype(jnp.bfloat16)       # bf16 inter-layer activations
    for p in layer_params:
        x = encoder_layer(x, pad_add, dep, p, n_heads,
                          block_q=block_q, block_k=block_k,
                          vmem_limit=vmem_limit, weight_mode=weight_mode)
    return x.astype(sequence.dtype)


# --------------------------------------------------------------------------
# deterministic parameter init + pure-JAX reference
# --------------------------------------------------------------------------

def _xavier_uniform(key, shape):
    fan_in, fan_out = shape
    limit = math.sqrt(6.0 / (fan_in + fan_out))
    return jax.random.uniform(key, shape, jnp.float32, -limit, limit)


def init_encoder_params(key, n_layers, model_size, dim_feedforward):
    layers = []
    D, F_ = model_size, dim_feedforward
    for _ in range(n_layers):
        key, kq, kk, kv, k1, k2 = jax.random.split(key, 6)
        layers.append(dict(
            wq=_xavier_uniform(kq, (D, D)).astype(jnp.bfloat16),
            bq=jnp.zeros((1, D), jnp.float32),
            wk=_xavier_uniform(kk, (D, D)).astype(jnp.bfloat16),
            bk=jnp.zeros((1, D), jnp.float32),
            wv=_xavier_uniform(kv, (D, D)).astype(jnp.bfloat16),
            bv=jnp.zeros((1, D), jnp.float32),
            ln1g=jnp.ones((1, D), jnp.float32), ln1b=jnp.zeros((1, D), jnp.float32),
            w1=_xavier_uniform(k1, (D, F_)).astype(jnp.bfloat16),
            b1=jnp.zeros((1, F_), jnp.float32),
            w2=_xavier_uniform(k2, (F_, D)).astype(jnp.bfloat16),
            b2=jnp.zeros((1, D), jnp.float32),
            ln2g=jnp.ones((1, D), jnp.float32), ln2b=jnp.zeros((1, D), jnp.float32),
        ))
    return layers


def _reference_encoder(sequence, mask, src_key_padding_mask, layer_params, n_heads):
    """Pure-JAX f32 reference of the same forward pass (for a sanity check)."""
    B, S, D = sequence.shape
    hd = D // n_heads
    pad = jnp.where(src_key_padding_mask, jnp.float32(-1e30), jnp.float32(0.0))
    pad = pad[:, None, None, :]
    dep = jnp.zeros((S, S), jnp.float32) if mask is None else mask.astype(jnp.float32)
    x = sequence.astype(jnp.float32)
    for p in layer_params:
        def heads(y):
            return y.reshape(B, S, n_heads, hd).transpose(0, 2, 1, 3)
        q = heads(x @ p["wq"].astype(jnp.float32) + p["bq"])
        k = heads(x @ p["wk"].astype(jnp.float32) + p["bk"])
        v = heads(x @ p["wv"].astype(jnp.float32) + p["bv"])
        s = jnp.einsum('bhqd,bhkd->bhqk', q, k) / math.sqrt(hd)
        s = s + dep[None, None, :, :] + pad
        a = jax.nn.softmax(s, axis=-1)
        att = jnp.einsum('bhqk,bhkd->bhqd', a, v).transpose(0, 2, 1, 3).reshape(B, S, D)
        h1 = _layernorm(x + att, p["ln1g"], p["ln1b"])
        f = jnp.maximum(h1 @ p["w1"].astype(jnp.float32) + p["b1"], 0.0)
        f = f @ p["w2"].astype(jnp.float32) + p["b2"]
        x = _layernorm(h1 + f, p["ln2g"], p["ln2b"])
    return x


# --------------------------------------------------------------------------

if __name__ == "__main__":
    # Small shapes consistent with the module's forward.
    B, S, D = 2, 8, 32
    n_heads, dim_feedforward, n_layers = 4, 64, 2

    key = jax.random.PRNGKey(0)
    key, kx = jax.random.split(key)
    sequence = jax.random.normal(kx, (B, S, D), jnp.float32)

    # dependency mask (additive, (S, S)) — no restrictions for the encoder
    dependency_mask = jnp.zeros((S, S), jnp.float32)
    # key-padding mask (bool, (B, S)) — True = padded position
    src_key_padding_mask = jnp.zeros((B, S), bool).at[1, S - 2:].set(True)

    params = init_encoder_params(key, n_layers, D, dim_feedforward)

    # warm trace-time probes (pl.Buffered(1) support, VMEM capacity) outside jit
    _single_buffered_weights_ok()
    _vmem_capacity_bytes()

    fwd = jax.jit(functools.partial(transformer_encoder, n_heads=n_heads))
    out = fwd(sequence, dependency_mask, src_key_padding_mask, params)
    jax.block_until_ready(out)

    ref = _reference_encoder(sequence, dependency_mask, src_key_padding_mask,
                             params, n_heads)
    err = float(jnp.max(jnp.abs(out - ref)))
    assert out.shape == (B, S, D) and out.dtype == jnp.float32
    # bf16 weights/activations + approx reciprocal -> loose tolerance
    assert err < 0.1, f"max abs error vs reference: {err}"
    print("KERNEL_OK")
</pallas_src>

<mosaic_0001>
module attributes {stable_mosaic.version = 11 : i64} {
  func.func @_probe(%arg0: i32, %arg1: memref<8x128xf32, #tpu.memory_space<vmem>>, %arg2: memref<8x128xf32, #tpu.memory_space<vmem>>) attributes {dimension_semantics = [#tpu.dimension_semantics<arbitrary>], iteration_bounds = array<i64: 2>, scalar_prefetch = 0 : i64, scratch_operands = 0 : i64, tpu.core_type = #tpu.core_type<tc>, window_params = [{pipeline_mode = #tpu.pipeline_mode<synchronous>, transform_indices = @transform_0, window_bounds = array<i64: 8, 128>}, {pipeline_mode = #tpu.pipeline_mode<synchronous>, transform_indices = @transform_1, window_bounds = array<i64: 8, 128>}]} {
    %c0 = arith.constant 0 : index
    %c0_0 = arith.constant 0 : index
    %0 = vector.load %arg1[%c0, %c0_0] : memref<8x128xf32, #tpu.memory_space<vmem>>, vector<8x128xf32>
    %cst = arith.constant 1.000000e+00 : f32
    %1 = vector.broadcast %cst : f32 to vector<8x128xf32>
    %2 = arith.addf %0, %1 : vector<8x128xf32>
    %c0_1 = arith.constant 0 : index
    %c0_2 = arith.constant 0 : index
    %3 = vector.load %arg2[%c0_1, %c0_2] : memref<8x128xf32, #tpu.memory_space<vmem>>, vector<8x128xf32>
    tpu.vector_store %arg2[%c0_1, %c0_2], %2 {strides = array<i32>} : memref<8x128xf32, #tpu.memory_space<vmem>>, vector<8x128xf32>,
    return
  }
  func.func @transform_0(%arg0: i32) -> (i32, i32) {
    %c0_i32 = arith.constant 0 : i32
    %c0_i32_0 = arith.constant 0 : i32
    %c0_i32_1 = arith.constant 0 : i32
    return %c0_i32, %c0_i32_0 : i32, i32
  }
  func.func @transform_1(%arg0: i32) -> (i32, i32) {
    %c0_i32 = arith.constant 0 : i32
    %c0_i32_0 = arith.constant 0 : i32
    %c0_i32_1 = arith.constant 0 : i32
    return %c0_i32, %c0_i32_0 : i32, i32
  }
}

module attributes {stable_mosaic.version = 11 : i64} {
  func.func @encoder_layer_kernel(%arg0: i32, %arg1: i32, %arg2: memref<1x8x32xbf16, #tpu.memory_space<vmem>>, %arg3: memref<1x1x8xf32, #tpu.memory_space<vmem>>, %arg4: memref<8x8xf32, #tpu.memory_space<vmem>>, %arg5: memref<32x32xbf16, #tpu.memory_space<vmem>>, %arg6: memref<1x32xf32, #tpu.memory_space<vmem>>, %arg7: memref<32x32xbf16, #tpu.memory_space<vmem>>, %arg8: memref<1x32xf32, #tpu.memory_space<vmem>>, %arg9: memref<32x32xbf16, #tpu.memory_space<vmem>>, %arg10: memref<1x32xf32, #tpu.memory_space<vmem>>, %arg11: memref<1x32xf32, #tpu.memory_space<vmem>>, %arg12: memref<1x32xf32, #tpu.memory_space<vmem>>, %arg13: memref<32x64xbf16, #tpu.memory_space<vmem>>, %arg14: memref<1x64xf32, #tpu.memory_space<vmem>>, %arg15: memref<64x32xbf16, #tpu.memory_space<vmem>>, %arg16: memref<1x32xf32, #tpu.memory_space<vmem>>, %arg17: memref<1x32xf32, #tpu.memory_space<vmem>>, %arg18: memref<1x32xf32, #tpu.memory_space<vmem>>, %arg19: memref<1x8x32xbf16, #tpu.memory_space<vmem>>, %arg20: memref<4x8x8xbf16, #tpu.memory_space<vmem>>, %arg21: memref<4x8x8xbf16, #tpu.memory_space<vmem>>) attributes {dimension_semantics = [#tpu.dimension_semantics<parallel>, #tpu.dimension_semantics<arbitrary>], iteration_bounds = array<i64: 2, 1>, scalar_prefetch = 0 : i64, scratch_operands = 2 : i64, tpu.core_type = #tpu.core_type<tc>, window_params = [{transform_indices = @transform_0, window_bounds = array<i64: 1, 8, 32>}, {transform_indices = @transform_1, window_bounds = array<i64: 1, 1, 8>}, {transform_indices = @transform_2, window_bounds = array<i64: 8, 8>}, {pipeline_mode = #tpu.pipeline_mode<synchronous>, transform_indices = @transform_3, window_bounds = array<i64: 32, 32>}, {pipeline_mode = #tpu.pipeline_mode<synchronous>, transform_indices = @transform_4, window_bounds = array<i64: 1, 32>}, {pipeline_mode = #tpu.pipeline_mode<synchronous>, transform_indices = @transform_5, window_bounds = array<i64: 32, 32>}, {pipeline_mode = #tpu.pipeline_mode<synchronous>, transform_indices = @transform_6, window_bounds = array<i64: 1, 32>}, {pipeline_mode = #tpu.pipeline_mode<synchronous>, transform_indices = @transform_7, window_bounds = array<i64: 32, 32>}, {pipeline_mode = #tpu.pipeline_mode<synchronous>, transform_indices = @transform_8, window_bounds = array<i64: 1, 32>}, {pipeline_mode = #tpu.pipeline_mode<synchronous>, transform_indices = @transform_9, window_bounds = array<i64: 1, 32>}, {pipeline_mode = #tpu.pipeline_mode<synchronous>, transform_indices = @transform_10, window_bounds = array<i64: 1, 32>}, {pipeline_mode = #tpu.pipeline_mode<synchronous>, transform_indices = @transform_11, window_bounds = array<i64: 32, 64>}, {pipeline_mode = #tpu.pipeline_mode<synchronous>, transform_indices = @transform_12, window_bounds = array<i64: 1, 64>}, {pipeline_mode = #tpu.pipeline_mode<synchronous>, transform_indices = @transform_13, window_bounds = array<i64: 64, 32>}, {pipeline_mode = #tpu.pipeline_mode<synchronous>, transform_indices = @transform_14, window_bounds = array<i64: 1, 32>}, {pipeline_mode = #tpu.pipeline_mode<synchronous>, transform_indices = @transform_15, window_bounds = array<i64: 1, 32>}, {pipeline_mode = #tpu.pipeline_mode<synchronous>, transform_indices = @transform_16, window_bounds = array<i64: 1, 32>}, {transform_indices = @transform_17, window_bounds = array<i64: 1, 8, 32>}]} {
    %c0_i32 = arith.constant 0 : i32
    %0 = arith.cmpi eq, %arg1, %c0_i32 : i32
    %1 = arith.extui %0 : i1 to i32
    %c0_i32_0 = arith.constant 0 : i32
    %2 = arith.cmpi ne, %1, %c0_i32_0 : i32
    scf.if %2 {
      %c0_57 = arith.constant 0 : index
      %c0_58 = arith.constant 0 : index
      %c0_59 = arith.constant 0 : index
      %137 = vector.load %arg2[%c0_57, %c0_58, %c0_59] : memref<1x8x32xbf16, #tpu.memory_space<vmem>>, vector<1x8x32xbf16>
      %138 = vector.shape_cast %137 : vector<1x8x32xbf16> to vector<8x32xbf16>
      %c0_60 = arith.constant 0 : index
      %c0_61 = arith.constant 0 : index
      %139 = vector.load %arg7[%c0_60, %c0_61] : memref<32x32xbf16, #tpu.memory_space<vmem>>, vector<32x32xbf16>
      %cst_62 = arith.constant dense<0.000000e+00> : vector<8x32xf32>
      %140 = tpu.matmul %138, %139, %cst_62 {dimension_numbers = #tpu.dot_dimension_numbers<[1], [0], [0], [1], [0, 0, 1, 1], [], []>} : vector<8x32xbf16>, vector<32x32xbf16>, vector<8x32xf32> -> vector<8x32xf32>
      %c0_63 = arith.constant 0 : index
      %c0_64 = arith.constant 0 : index
      %141 = vector.load %arg8[%c0_63, %c0_64] : memref<1x32xf32, #tpu.memory_space<vmem>>, vector<1x32xf32>
      %142 = vector.broadcast %141 : vector<1x32xf32> to vector<8x32xf32>
      %143 = arith.addf %140, %142 : vector<8x32xf32>
      %c0_65 = arith.constant 0 : index
      %c0_66 = arith.constant 0 : index
      %144 = vector.load %arg9[%c0_65, %c0_66] : memref<32x32xbf16, #tpu.memory_space<vmem>>, vector<32x32xbf16>
      %cst_67 = arith.constant dense<0.000000e+00> : vector<8x32xf32>
      %145 = tpu.matmul %138, %144, %cst_67 {dimension_numbers = #tpu.dot_dimension_numbers<[1], [0], [0], [1], [0, 0, 1, 1], [], []>} : vector<8x32xbf16>, vector<32x32xbf16>, vector<8x32xf32> -> vector<8x32xf32>
      %c0_68 = arith.constant 0 : index
      %c0_69 = arith.constant 0 : index
      %146 = vector.load %arg10[%c0_68, %c0_69] : memref<1x32xf32, #tpu.memory_space<vmem>>, vector<1x32xf32>
      %147 = vector.broadcast %146 : vector<1x32xf32> to vector<8x32xf32>
      %148 = arith.addf %145, %147 : vector<8x32xf32>
      %149 = vector.extract_strided_slice %143 {offsets = [0, 0], sizes = [8, 8], strides = [1, 1]} : vector<8x32xf32> to vector<8x8xf32>
      %150 = tpu.transpose %149, [1, 0] : vector<8x8xf32> -> vector<8x8xf32>
      %151 = vector.extract_strided_slice %143 {offsets = [0, 8], sizes = [8, 8], strides = [1, 1]} : vector<8x32xf32> to vector<8x8xf32>
      %152 = tpu.transpose %151, [1, 0] : vector<8x8xf32> -> vector<8x8xf32>
      %153 = vector.extract_strided_slice %143 {offsets = [0, 16], sizes = [8, 8], strides = [1, 1]} : vector<8x32xf32> to vector<8x8xf32>
      %154 = tpu.transpose %153, [1, 0] : vector<8x8xf32> -> vector<8x8xf32>
      %155 = vector.extract_strided_slice %143 {offsets = [0, 24], sizes = [8, 8], strides = [1, 1]} : vector<8x32xf32> to vector<8x8xf32>
      %156 = tpu.transpose %155, [1, 0] : vector<8x8xf32> -> vector<8x8xf32>
      %157 = vector.shape_cast %150 : vector<8x8xf32> to vector<1x8x8xf32>
      %158 = vector.shape_cast %152 : vector<8x8xf32> to vector<1x8x8xf32>
      %159 = vector.shape_cast %154 : vector<8x8xf32> to vector<1x8x8xf32>
      %160 = vector.shape_cast %156 : vector<8x8xf32> to vector<1x8x8xf32>
      %161 = tpu.concatenate %157, %158, %159, %160 in 0 : vector<1x8x8xf32>, vector<1x8x8xf32>, vector<1x8x8xf32>, vector<1x8x8xf32> -> vector<4x8x8xf32>
      %162 = arith.truncf %161 : vector<4x8x8xf32> to vector<4x8x8xbf16>
      %c0_70 = arith.constant 0 : index
      %c0_71 = arith.constant 0 : index
      %c0_72 = arith.constant 0 : index
      %163 = vector.load %arg20[%c0_70, %c0_71, %c0_72] : memref<4x8x8xbf16, #tpu.memory_space<vmem>>, vector<4x8x8xbf16>
      tpu.vector_store %arg20[%c0_70, %c0_71, %c0_72], %162 {strides = array<i32>} : memref<4x8x8xbf16, #tpu.memory_space<vmem>>, vector<4x8x8xbf16>,
      %164 = vector.extract_strided_slice %148 {offsets = [0, 0], sizes = [8, 8], strides = [1, 1]} : vector<8x32xf32> to vector<8x8xf32>
      %165 = vector.extract_strided_slice %148 {offsets = [0, 8], sizes = [8, 8], strides = [1, 1]} : vector<8x32xf32> to vector<8x8xf32>
      %166 = vector.extract_strided_slice %148 {offsets = [0, 16], sizes = [8, 8], strides = [1, 1]} : vector<8x32xf32> to vector<8x8xf32>
      %167 = vector.extract_strided_slice %148 {offsets = [0, 24], sizes = [8, 8], strides = [1, 1]} : vector<8x32xf32> to vector<8x8xf32>
      %168 = vector.shape_cast %164 : vector<8x8xf32> to vector<1x8x8xf32>
      %169 = vector.shape_cast %165 : vector<8x8xf32> to vector<1x8x8xf32>
      %170 = vector.shape_cast %166 : vector<8x8xf32> to vector<1x8x8xf32>
      %171 = vector.shape_cast %167 : vector<8x8xf32> to vector<1x8x8xf32>
      %172 = tpu.concatenate %168, %169, %170, %171 in 0 : vector<1x8x8xf32>, vector<1x8x8xf32>, vector<1x8x8xf32>, vector<1x8x8xf32> -> vector<4x8x8xf32>
      %173 = arith.truncf %172 : vector<4x8x8xf32> to vector<4x8x8xbf16>
      %c0_73 = arith.constant 0 : index
      %c0_74 = arith.constant 0 : index
      %c0_75 = arith.constant 0 : index
      %174 = vector.load %arg21[%c0_73, %c0_74, %c0_75] : memref<4x8x8xbf16, #tpu.memory_space<vmem>>, vector<4x8x8xbf16>
      tpu.vector_store %arg21[%c0_73, %c0_74, %c0_75], %173 {strides = array<i32>} : memref<4x8x8xbf16, #tpu.memory_space<vmem>>, vector<4x8x8xbf16>,
    } else {
    }
    %c8_i32 = arith.constant 8 : i32
    %3 = arith.muli %arg1, %c8_i32 : i32
    %4 = tpu.assume_multiple %3, 8 : i32
    %c0 = arith.constant 0 : index
    %5 = arith.index_cast %4 : i32 to index
    %c0_1 = arith.constant 0 : index
    %6 = vector.load %arg2[%c0, %5, %c0_1] : memref<1x8x32xbf16, #tpu.memory_space<vmem>>, vector<1x8x32xbf16>
    %7 = vector.shape_cast %6 : vector<1x8x32xbf16> to vector<8x32xbf16>
    %c0_2 = arith.constant 0 : index
    %c0_3 = arith.constant 0 : index
    %8 = vector.load %arg5[%c0_2, %c0_3] : memref<32x32xbf16, #tpu.memory_space<vmem>>, vector<32x32xbf16>
    %cst = arith.constant dense<0.000000e+00> : vector<8x32xf32>
    %9 = tpu.matmul %7, %8, %cst {dimension_numbers = #tpu.dot_dimension_numbers<[1], [0], [0], [1], [0, 0, 1, 1], [], []>} : vector<8x32xbf16>, vector<32x32xbf16>, vector<8x32xf32> -> vector<8x32xf32>
    %c0_4 = arith.constant 0 : index
    %c0_5 = arith.constant 0 : index
    %10 = vector.load %arg6[%c0_4, %c0_5] : memref<1x32xf32, #tpu.memory_space<vmem>>, vector<1x32xf32>
    %11 = vector.broadcast %10 : vector<1x32xf32> to vector<8x32xf32>
    %12 = arith.addf %9, %11 : vector<8x32xf32>
    %13 = vector.extract_strided_slice %12 {offsets = [0, 0], sizes = [8, 8], strides = [1, 1]} : vector<8x32xf32> to vector<8x8xf32>
    %14 = vector.extract_strided_slice %12 {offsets = [0, 8], sizes = [8, 8], strides = [1, 1]} : vector<8x32xf32> to vector<8x8xf32>
    %15 = vector.extract_strided_slice %12 {offsets = [0, 16], sizes = [8, 8], strides = [1, 1]} : vector<8x32xf32> to vector<8x8xf32>
    %16 = vector.extract_strided_slice %12 {offsets = [0, 24], sizes = [8, 8], strides = [1, 1]} : vector<8x32xf32> to vector<8x8xf32>
    %17 = vector.shape_cast %13 : vector<8x8xf32> to vector<1x8x8xf32>
    %18 = vector.shape_cast %14 : vector<8x8xf32> to vector<1x8x8xf32>
    %19 = vector.shape_cast %15 : vector<8x8xf32> to vector<1x8x8xf32>
    %20 = vector.shape_cast %16 : vector<8x8xf32> to vector<1x8x8xf32>
    %21 = tpu.concatenate %17, %18, %19, %20 in 0 : vector<1x8x8xf32>, vector<1x8x8xf32>, vector<1x8x8xf32>, vector<1x8x8xf32> -> vector<4x8x8xf32>
    %cst_6 = arith.constant 0.353553385 : f32
    %22 = vector.broadcast %cst_6 : f32 to vector<4x8x8xf32>
    %23 = arith.mulf %21, %22 : vector<4x8x8xf32>
    %24 = arith.truncf %23 : vector<4x8x8xf32> to vector<4x8x8xbf16>
    %c0_7 = arith.constant 0 : index
    %c0_8 = arith.constant 0 : index
    %c0_9 = arith.constant 0 : index
    %25 = vector.load %arg3[%c0_7, %c0_8, %c0_9] : memref<1x1x8xf32, #tpu.memory_space<vmem>>, vector<1x1x8xf32>
    %26 = vector.shape_cast %25 : vector<1x1x8xf32> to vector<1x8xf32>
    %cst_10 = arith.constant -1.000000e+30 : f32
    %27 = vector.broadcast %cst_10 : f32 to vector<4x8x1xf32>
    %cst_11 = arith.constant 0.000000e+00 : f32
    %28 = vector.broadcast %cst_11 : f32 to vector<4x8x1xf32>
    %cst_12 = arith.constant 0.000000e+00 : f32
    %29 = vector.broadcast %cst_12 : f32 to vector<4x8x8xf32>
    %c0_13 = arith.constant 0 : index
    %c0_14 = arith.constant 0 : index
    %c0_15 = arith.constant 0 : index
    %30 = vector.load %arg20[%c0_13, %c0_14, %c0_15] : memref<4x8x8xbf16, #tpu.memory_space<vmem>>, vector<4x8x8xbf16>
    "tpu.trace_start"() <{level = 10 : i32, message = "hqd,hdk->hqk"}> : () -> ()
    %cst_16 = arith.constant dense<0.000000e+00> : vector<4x8x8xf32>
    %31 = tpu.matmul %24, %30, %cst_16 {dimension_numbers = #tpu.dot_dimension_numbers<[2], [1], [1], [2], [0, 0, 0, 1, 1, 2], [0], [0]>} : vector<4x8x8xbf16>, vector<4x8x8xbf16>, vector<4x8x8xf32> -> vector<4x8x8xf32>
    "tpu.trace_stop"() : () -> ()
    %c0_17 = arith.constant 0 : index
    %c0_18 = arith.constant 0 : index
    %32 = vector.load %arg4[%c0_17, %c0_18] : memref<8x8xf32, #tpu.memory_space<vmem>>, vector<8x8xf32>
    %33 = vector.broadcast %26 : vector<1x8xf32> to vector<8x8xf32>
    %34 = arith.addf %33, %32 : vector<8x8xf32>
    %35 = vector.shape_cast %34 : vector<8x8xf32> to vector<1x8x8xf32>
    %36 = vector.broadcast %35 : vector<1x8x8xf32> to vector<4x8x8xf32>
    %37 = arith.addf %31, %36 : vector<4x8x8xf32>
    %cst_19 = arith.constant dense<0xFF800000> : vector<4x8xf32>
    %38 = vector.multi_reduction <maximumf>, %37, %cst_19 [2] : vector<4x8x8xf32> to vector<4x8xf32>
    %39 = vector.shape_cast %38 : vector<4x8xf32> to vector<4x8x1xf32>
    %40 = arith.maximumf %27, %39 : vector<4x8x1xf32>
    %41 = arith.subf %27, %40 : vector<4x8x1xf32>
    %42 = math.exp %41 : vector<4x8x1xf32>
    %43 = vector.broadcast %40 : vector<4x8x1xf32> to vector<4x8x8xf32>
    %44 = arith.subf %37, %43 : vector<4x8x8xf32>
    %45 = math.exp %44 : vector<4x8x8xf32>
    %46 = arith.mulf %42, %28 : vector<4x8x1xf32>
    %cst_20 = arith.constant dense<0.000000e+00> : vector<4x8xf32>
    %47 = vector.multi_reduction <add>, %45, %cst_20 [2] : vector<4x8x8xf32> to vector<4x8xf32>
    %48 = vector.shape_cast %47 : vector<4x8xf32> to vector<4x8x1xf32>
    %49 = arith.addf %46, %48 : vector<4x8x1xf32>
    %c0_21 = arith.constant 0 : index
    %c0_22 = arith.constant 0 : index
    %c0_23 = arith.constant 0 : index
    %50 = vector.load %arg21[%c0_21, %c0_22, %c0_23] : memref<4x8x8xbf16, #tpu.memory_space<vmem>>, vector<4x8x8xbf16>
    %51 = vector.broadcast %42 : vector<4x8x1xf32> to vector<4x8x8xf32>
    %52 = arith.mulf %51, %29 : vector<4x8x8xf32>
    %53 = arith.truncf %45 : vector<4x8x8xf32> to vector<4x8x8xbf16>
    "tpu.trace_start"() <{level = 10 : i32, message = "hqk,hkd->hqd"}> : () -> ()
    %cst_24 = arith.constant dense<0.000000e+00> : vector<4x8x8xf32>
    %54 = tpu.matmul %53, %50, %cst_24 {dimension_numbers = #tpu.dot_dimension_numbers<[2], [1], [1], [2], [0, 0, 0, 1, 1, 2], [0], [0]>} : vector<4x8x8xbf16>, vector<4x8x8xbf16>, vector<4x8x8xf32> -> vector<4x8x8xf32>
    "tpu.trace_stop"() : () -> ()
    %55 = arith.addf %52, %54 : vector<4x8x8xf32>
    %56 = tpu.reciprocal %49 {approx = true} : vector<4x8x1xf32> -> vector<4x8x1xf32>
    %57 = vector.broadcast %56 : vector<4x8x1xf32> to vector<4x8x8xf32>
    %58 = arith.mulf %55, %57 : vector<4x8x8xf32>
    %59 = vector.extract_strided_slice %58 {offsets = [0, 0, 0], sizes = [1, 8, 8], strides = [1, 1, 1]} : vector<4x8x8xf32> to vector<1x8x8xf32>
    %60 = vector.shape_cast %59 : vector<1x8x8xf32> to vector<8x8xf32>
    %61 = vector.extract_strided_slice %58 {offsets = [1, 0, 0], sizes = [1, 8, 8], strides = [1, 1, 1]} : vector<4x8x8xf32> to vector<1x8x8xf32>
    %62 = vector.shape_cast %61 : vector<1x8x8xf32> to vector<8x8xf32>
    %63 = vector.extract_strided_slice %58 {offsets = [2, 0, 0], sizes = [1, 8, 8], strides = [1, 1, 1]} : vector<4x8x8xf32> to vector<1x8x8xf32>
    %64 = vector.shape_cast %63 : vector<1x8x8xf32> to vector<8x8xf32>
    %65 = vector.extract_strided_slice %58 {offsets = [3, 0, 0], sizes = [1, 8, 8], strides = [1, 1, 1]} : vector<4x8x8xf32> to vector<1x8x8xf32>
    %66 = vector.shape_cast %65 : vector<1x8x8xf32> to vector<8x8xf32>
    %67 = tpu.concatenate %60, %62, %64, %66 in 1 : vector<8x8xf32>, vector<8x8xf32>, vector<8x8xf32>, vector<8x8xf32> -> vector<8x32xf32>
    %68 = arith.extf %7 : vector<8x32xbf16> to vector<8x32xf32>
    %69 = arith.addf %68, %67 : vector<8x32xf32>
    %c0_25 = arith.constant 0 : index
    %c0_26 = arith.constant 0 : index
    %70 = vector.load %arg11[%c0_25, %c0_26] : memref<1x32xf32, #tpu.memory_space<vmem>>, vector<1x32xf32>
    %c0_27 = arith.constant 0 : index
    %c0_28 = arith.constant 0 : index
    %71 = vector.load %arg12[%c0_27, %c0_28] : memref<1x32xf32, #tpu.memory_space<vmem>>, vector<1x32xf32>
    %cst_29 = arith.constant dense<0.000000e+00> : vector<8xf32>
    %72 = vector.multi_reduction <add>, %69, %cst_29 [1] : vector<8x32xf32> to vector<8xf32>
    %73 = vector.shape_cast %72 : vector<8xf32> to vector<8x1xf32>
    %cst_30 = arith.constant 3.200000e+01 : f32
    %74 = vector.broadcast %cst_30 : f32 to vector<8x1xf32>
    %75 = arith.divf %73, %74 : vector<8x1xf32>
    %76 = vector.broadcast %75 : vector<8x1xf32> to vector<8x32xf32>
    %77 = arith.subf %69, %76 : vector<8x32xf32>
    %78 = arith.mulf %77, %77 : vector<8x32xf32>
    %cst_31 = arith.constant dense<0.000000e+00> : vector<8xf32>
    %79 = vector.multi_reduction <add>, %78, %cst_31 [1] : vector<8x32xf32> to vector<8xf32>
    %80 = vector.shape_cast %79 : vector<8xf32> to vector<8x1xf32>
    %cst_32 = arith.constant 3.200000e+01 : f32
    %81 = vector.broadcast %cst_32 : f32 to vector<8x1xf32>
    %82 = arith.divf %80, %81 : vector<8x1xf32>
    %83 = vector.broadcast %75 : vector<8x1xf32> to vector<8x32xf32>
    %84 = arith.subf %69, %83 : vector<8x32xf32>
    %cst_33 = arith.constant 9.99999974E-6 : f32
    %85 = vector.broadcast %cst_33 : f32 to vector<8x1xf32>
    %86 = arith.addf %82, %85 : vector<8x1xf32>
    %87 = math.rsqrt %86 : vector<8x1xf32>
    %88 = vector.broadcast %87 : vector<8x1xf32> to vector<8x32xf32>
    %89 = arith.mulf %84, %88 : vector<8x32xf32>
    %90 = vector.broadcast %70 : vector<1x32xf32> to vector<8x32xf32>
    %91 = arith.mulf %89, %90 : vector<8x32xf32>
    %92 = vector.broadcast %71 : vector<1x32xf32> to vector<8x32xf32>
    %93 = arith.addf %91, %92 : vector<8x32xf32>
    %94 = arith.truncf %93 : vector<8x32xf32> to vector<8x32xbf16>
    %c0_34 = arith.constant 0 : index
    %c0_35 = arith.constant 0 : index
    %95 = vector.load %arg13[%c0_34, %c0_35] : memref<32x64xbf16, #tpu.memory_space<vmem>>, vector<32x64xbf16>
    %cst_36 = arith.constant dense<0.000000e+00> : vector<8x64xf32>
    %96 = tpu.matmul %94, %95, %cst_36 {dimension_numbers = #tpu.dot_dimension_numbers<[1], [0], [0], [1], [0, 0, 1, 1], [], []>} : vector<8x32xbf16>, vector<32x64xbf16>, vector<8x64xf32> -> vector<8x64xf32>
    %c0_37 = arith.constant 0 : index
    %c0_38 = arith.constant 0 : index
    %97 = vector.load %arg14[%c0_37, %c0_38] : memref<1x64xf32, #tpu.memory_space<vmem>>, vector<1x64xf32>
    %98 = vector.broadcast %97 : vector<1x64xf32> to vector<8x64xf32>
    %99 = arith.addf %96, %98 : vector<8x64xf32>
    %cst_39 = arith.constant 0.000000e+00 : f32
    %100 = vector.broadcast %cst_39 : f32 to vector<8x64xf32>
    %101 = arith.maximumf %99, %100 : vector<8x64xf32>
    %102 = arith.truncf %101 : vector<8x64xf32> to vector<8x64xbf16>
    %c0_40 = arith.constant 0 : index
    %c0_41 = arith.constant 0 : index
    %103 = vector.load %arg15[%c0_40, %c0_41] : memref<64x32xbf16, #tpu.memory_space<vmem>>, vector<64x32xbf16>
    %cst_42 = arith.constant dense<0.000000e+00> : vector<8x32xf32>
    %104 = tpu.matmul %102, %103, %cst_42 {dimension_numbers = #tpu.dot_dimension_numbers<[1], [0], [0], [1], [0, 0, 1, 1], [], []>} : vector<8x64xbf16>, vector<64x32xbf16>, vector<8x32xf32> -> vector<8x32xf32>
    %c0_43 = arith.constant 0 : index
    %c0_44 = arith.constant 0 : index
    %105 = vector.load %arg16[%c0_43, %c0_44] : memref<1x32xf32, #tpu.memory_space<vmem>>, vector<1x32xf32>
    %106 = vector.broadcast %105 : vector<1x32xf32> to vector<8x32xf32>
    %107 = arith.addf %104, %106 : vector<8x32xf32>
    %108 = arith.addf %93, %107 : vector<8x32xf32>
    %c0_45 = arith.constant 0 : index
    %c0_46 = arith.constant 0 : index
    %109 = vector.load %arg17[%c0_45, %c0_46] : memref<1x32xf32, #tpu.memory_space<vmem>>, vector<1x32xf32>
    %c0_47 = arith.constant 0 : index
    %c0_48 = arith.constant 0 : index
    %110 = vector.load %arg18[%c0_47, %c0_48] : memref<1x32xf32, #tpu.memory_space<vmem>>, vector<1x32xf32>
    %cst_49 = arith.constant dense<0.000000e+00> : vector<8xf32>
    %111 = vector.multi_reduction <add>, %108, %cst_49 [1] : vector<8x32xf32> to vector<8xf32>
    %112 = vector.shape_cast %111 : vector<8xf32> to vector<8x1xf32>
    %cst_50 = arith.constant 3.200000e+01 : f32
    %113 = vector.broadcast %cst_50 : f32 to vector<8x1xf32>
    %114 = arith.divf %112, %113 : vector<8x1xf32>
    %115 = vector.broadcast %114 : vector<8x1xf32> to vector<8x32xf32>
    %116 = arith.subf %108, %115 : vector<8x32xf32>
    %117 = arith.mulf %116, %116 : vector<8x32xf32>
    %cst_51 = arith.constant dense<0.000000e+00> : vector<8xf32>
    %118 = vector.multi_reduction <add>, %117, %cst_51 [1] : vector<8x32xf32> to vector<8xf32>
    %119 = vector.shape_cast %118 : vector<8xf32> to vector<8x1xf32>
    %cst_52 = arith.constant 3.200000e+01 : f32
    %120 = vector.broadcast %cst_52 : f32 to vector<8x1xf32>
    %121 = arith.divf %119, %120 : vector<8x1xf32>
    %122 = vector.broadcast %114 : vector<8x1xf32> to vector<8x32xf32>
    %123 = arith.subf %108, %122 : vector<8x32xf32>
    %cst_53 = arith.constant 9.99999974E-6 : f32
    %124 = vector.broadcast %cst_53 : f32 to vector<8x1xf32>
    %125 = arith.addf %121, %124 : vector<8x1xf32>
    %126 = math.rsqrt %125 : vector<8x1xf32>
    %127 = vector.broadcast %126 : vector<8x1xf32> to vector<8x32xf32>
    %128 = arith.mulf %123, %127 : vector<8x32xf32>
    %129 = vector.broadcast %109 : vector<1x32xf32> to vector<8x32xf32>
    %130 = arith.mulf %128, %129 : vector<8x32xf32>
    %131 = vector.broadcast %110 : vector<1x32xf32> to vector<8x32xf32>
    %132 = arith.addf %130, %131 : vector<8x32xf32>
    %133 = arith.truncf %132 : vector<8x32xf32> to vector<8x32xbf16>
    %c0_54 = arith.constant 0 : index
    %c0_55 = arith.constant 0 : index
    %c0_56 = arith.constant 0 : index
    %134 = vector.load %arg19[%c0_54, %c0_55, %c0_56] : memref<1x8x32xbf16, #tpu.memory_space<vmem>>, vector<1x8x32xbf16>
    %135 = vector.shape_cast %134 : vector<1x8x32xbf16> to vector<8x32xbf16>
    %136 = vector.shape_cast %133 : vector<8x32xbf16> to vector<1x8x32xbf16>
    tpu.vector_store %arg19[%c0_54, %c0_55, %c0_56], %136 {strides = array<i32>} : memref<1x8x32xbf16, #tpu.memory_space<vmem>>, vector<1x8x32xbf16>,
    return
  }
  func.func @transform_0(%arg0: i32, %arg1: i32) -> (i32, i32, i32) {
    %c0_i32 = arith.constant 0 : i32
    %c0_i32_0 = arith.constant 0 : i32
    %c0_i32_1 = arith.constant 0 : i32
    return %arg0, %c0_i32, %c0_i32_0 : i32, i32, i32
  }
  func.func @transform_1(%arg0: i32, %arg1: i32) -> (i32, i32, i32) {
    %c0_i32 = arith.constant 0 : i32
    %c0_i32_0 = arith.constant 0 : i32
    %c0_i32_1 = arith.constant 0 : i32
    return %arg0, %c0_i32, %c0_i32_0 : i32, i32, i32
  }
  func.func @transform_2(%arg0: i32, %arg1: i32) -> (i32, i32) {
    %c0_i32 = arith.constant 0 : i32
    %c0_i32_0 = arith.constant 0 : i32
    return %arg1, %c0_i32 : i32, i32
  }
  func.func @transform_3(%arg0: i32, %arg1: i32) -> (i32, i32) {
    %c0_i32 = arith.constant 0 : i32
    %c0_i32_0 = arith.constant 0 : i32
    %c0_i32_1 = arith.constant 0 : i32
    return %c0_i32, %c0_i32_0 : i32, i32
  }
  func.func @transform_4(%arg0: i32, %arg1: i32) -> (i32, i32) {
    %c0_i32 = arith.constant 0 : i32
    %c0_i32_0 = arith.constant 0 : i32
    %c0_i32_1 = arith.constant 0 : i32
    return %c0_i32, %c0_i32_0 : i32, i32
  }
  func.func @transform_5(%arg0: i32, %arg1: i32) -> (i32, i32) {
    %c0_i32 = arith.constant 0 : i32
    %c0_i32_0 = arith.constant 0 : i32
    %c0_i32_1 = arith.constant 0 : i32
    return %c0_i32, %c0_i32_0 : i32, i32
  }
  func.func @transform_6(%arg0: i32, %arg1: i32) -> (i32, i32) {
    %c0_i32 = arith.constant 0 : i32
    %c0_i32_0 = arith.constant 0 : i32
    %c0_i32_1 = arith.constant 0 : i32
    return %c0_i32, %c0_i32_0 : i32, i32
  }
  func.func @transform_7(%arg0: i32, %arg1: i32) -> (i32, i32) {
    %c0_i32 = arith.constant 0 : i32
    %c0_i32_0 = arith.constant 0 : i32
    %c0_i32_1 = arith.constant 0 : i32
    return %c0_i32, %c0_i32_0 : i32, i32
  }
  func.func @transform_8(%arg0: i32, %arg1: i32) -> (i32, i32) {
    %c0_i32 = arith.constant 0 : i32
    %c0_i32_0 = arith.constant 0 : i32
    %c0_i32_1 = arith.constant 0 : i32
    return %c0_i32, %c0_i32_0 : i32, i32
  }
  func.func @transform_9(%arg0: i32, %arg1: i32) -> (i32, i32) {
    %c0_i32 = arith.constant 0 : i32
    %c0_i32_0 = arith.constant 0 : i32
    %c0_i32_1 = arith.constant 0 : i32
    return %c0_i32, %c0_i32_0 : i32, i32
  }
  func.func @transform_10(%arg0: i32, %arg1: i32) -> (i32, i32) {
    %c0_i32 = arith.constant 0 : i32
    %c0_i32_0 = arith.constant 0 : i32
    %c0_i32_1 = arith.constant 0 : i32
    return %c0_i32, %c0_i32_0 : i32, i32
  }
  func.func @transform_11(%arg0: i32, %arg1: i32) -> (i32, i32) {
    %c0_i32 = arith.constant 0 : i32
    %c0_i32_0 = arith.constant 0 : i32
    %c0_i32_1 = arith.constant 0 : i32
    return %c0_i32, %c0_i32_0 : i32, i32
  }
  func.func @transform_12(%arg0: i32, %arg1: i32) -> (i32, i32) {
    %c0_i32 = arith.constant 0 : i32
    %c0_i32_0 = arith.constant 0 : i32
    %c0_i32_1 = arith.constant 0 : i32
    return %c0_i32, %c0_i32_0 : i32, i32
  }
  func.func @transform_13(%arg0: i32, %arg1: i32) -> (i32, i32) {
    %c0_i32 = arith.constant 0 : i32
    %c0_i32_0 = arith.constant 0 : i32
    %c0_i32_1 = arith.constant 0 : i32
    return %c0_i32, %c0_i32_0 : i32, i32
  }
  func.func @transform_14(%arg0: i32, %arg1: i32) -> (i32, i32) {
    %c0_i32 = arith.constant 0 : i32
    %c0_i32_0 = arith.constant 0 : i32
    %c0_i32_1 = arith.constant 0 : i32
    return %c0_i32, %c0_i32_0 : i32, i32
  }
  func.func @transform_15(%arg0: i32, %arg1: i32) -> (i32, i32) {
    %c0_i32 = arith.constant 0 : i32
    %c0_i32_0 = arith.constant 0 : i32
    %c0_i32_1 = arith.constant 0 : i32
    return %c0_i32, %c0_i32_0 : i32, i32
  }
  func.func @transform_16(%arg0: i32, %arg1: i32) -> (i32, i32) {
    %c0_i32 = arith.constant 0 : i32
    %c0_i32_0 = arith.constant 0 : i32
    %c0_i32_1 = arith.constant 0 : i32
    return %c0_i32, %c0_i32_0 : i32, i32
  }
  func.func @transform_17(%arg0: i32, %arg1: i32) -> (i32, i32, i32) {
    %c0_i32 = arith.constant 0 : i32
    %c0_i32_0 = arith.constant 0 : i32
    return %arg0, %arg1, %c0_i32 : i32, i32, i32
  }
}

module attributes {stable_mosaic.version = 11 : i64} {
  func.func @encoder_layer_kernel(%arg0: i32, %arg1: i32, %arg2: memref<1x8x32xbf16, #tpu.memory_space<vmem>>, %arg3: memref<1x1x8xf32, #tpu.memory_space<vmem>>, %arg4: memref<8x8xf32, #tpu.memory_space<vmem>>, %arg5: memref<32x32xbf16, #tpu.memory_space<vmem>>, %arg6: memref<1x32xf32, #tpu.memory_space<vmem>>, %arg7: memref<32x32xbf16, #tpu.memory_space<vmem>>, %arg8: memref<1x32xf32, #tpu.memory_space<vmem>>, %arg9: memref<32x32xbf16, #tpu.memory_space<vmem>>, %arg10: memref<1x32xf32, #tpu.memory_space<vmem>>, %arg11: memref<1x32xf32, #tpu.memory_space<vmem>>, %arg12: memref<1x32xf32, #tpu.memory_space<vmem>>, %arg13: memref<32x64xbf16, #tpu.memory_space<vmem>>, %arg14: memref<1x64xf32, #tpu.memory_space<vmem>>, %arg15: memref<64x32xbf16, #tpu.memory_space<vmem>>, %arg16: memref<1x32xf32, #tpu.memory_space<vmem>>, %arg17: memref<1x32xf32, #tpu.memory_space<vmem>>, %arg18: memref<1x32xf32, #tpu.memory_space<vmem>>, %arg19: memref<1x8x32xbf16, #tpu.memory_space<vmem>>, %arg20: memref<4x8x8xbf16, #tpu.memory_space<vmem>>, %arg21: memref<4x8x8xbf16, #tpu.memory_space<vmem>>) attributes {dimension_semantics = [#tpu.dimension_semantics<parallel>, #tpu.dimension_semantics<arbitrary>], iteration_bounds = array<i64: 2, 1>, scalar_prefetch = 0 : i64, scratch_operands = 2 : i64, tpu.core_type = #tpu.core_type<tc>, window_params = [{transform_indices = @transform_0, window_bounds = array<i64: 1, 8, 32>}, {transform_indices = @transform_1, window_bounds = array<i64: 1, 1, 8>}, {transform_indices = @transform_2, window_bounds = array<i64: 8, 8>}, {pipeline_mode = #tpu.pipeline_mode<synchronous>, transform_indices = @transform_3, window_bounds = array<i64: 32, 32>}, {pipeline_mode = #tpu.pipeline_mode<synchronous>, transform_indices = @transform_4, window_bounds = array<i64: 1, 32>}, {pipeline_mode = #tpu.pipeline_mode<synchronous>, transform_indices = @transform_5, window_bounds = array<i64: 32, 32>}, {pipeline_mode = #tpu.pipeline_mode<synchronous>, transform_indices = @transform_6, window_bounds = array<i64: 1, 32>}, {pipeline_mode = #tpu.pipeline_mode<synchronous>, transform_indices = @transform_7, window_bounds = array<i64: 32, 32>}, {pipeline_mode = #tpu.pipeline_mode<synchronous>, transform_indices = @transform_8, window_bounds = array<i64: 1, 32>}, {pipeline_mode = #tpu.pipeline_mode<synchronous>, transform_indices = @transform_9, window_bounds = array<i64: 1, 32>}, {pipeline_mode = #tpu.pipeline_mode<synchronous>, transform_indices = @transform_10, window_bounds = array<i64: 1, 32>}, {pipeline_mode = #tpu.pipeline_mode<synchronous>, transform_indices = @transform_11, window_bounds = array<i64: 32, 64>}, {pipeline_mode = #tpu.pipeline_mode<synchronous>, transform_indices = @transform_12, window_bounds = array<i64: 1, 64>}, {pipeline_mode = #tpu.pipeline_mode<synchronous>, transform_indices = @transform_13, window_bounds = array<i64: 64, 32>}, {pipeline_mode = #tpu.pipeline_mode<synchronous>, transform_indices = @transform_14, window_bounds = array<i64: 1, 32>}, {pipeline_mode = #tpu.pipeline_mode<synchronous>, transform_indices = @transform_15, window_bounds = array<i64: 1, 32>}, {pipeline_mode = #tpu.pipeline_mode<synchronous>, transform_indices = @transform_16, window_bounds = array<i64: 1, 32>}, {transform_indices = @transform_17, window_bounds = array<i64: 1, 8, 32>}]} {
    %c0_i32 = arith.constant 0 : i32
    %0 = arith.cmpi eq, %arg1, %c0_i32 : i32
    %1 = arith.extui %0 : i1 to i32
    %c0_i32_0 = arith.constant 0 : i32
    %2 = arith.cmpi ne, %1, %c0_i32_0 : i32
    scf.if %2 {
      %c0_57 = arith.constant 0 : index
      %c0_58 = arith.constant 0 : index
      %c0_59 = arith.constant 0 : index
      %137 = vector.load %arg2[%c0_57, %c0_58, %c0_59] : memref<1x8x32xbf16, #tpu.memory_space<vmem>>, vector<1x8x32xbf16>
      %138 = vector.shape_cast %137 : vector<1x8x32xbf16> to vector<8x32xbf16>
      %c0_60 = arith.constant 0 : index
      %c0_61 = arith.constant 0 : index
      %139 = vector.load %arg7[%c0_60, %c0_61] : memref<32x32xbf16, #tpu.memory_space<vmem>>, vector<32x32xbf16>
      %cst_62 = arith.constant dense<0.000000e+00> : vector<8x32xf32>
      %140 = tpu.matmul %138, %139, %cst_62 {dimension_numbers = #tpu.dot_dimension_numbers<[1], [0], [0], [1], [0, 0, 1, 1], [], []>} : vector<8x32xbf16>, vector<32x32xbf16>, vector<8x32xf32> -> vector<8x32xf32>
      %c0_63 = arith.constant 0 : index
      %c0_64 = arith.constant 0 : index
      %141 = vector.load %arg8[%c0_63, %c0_64] : memref<1x32xf32, #tpu.memory_space<vmem>>, vector<1x32xf32>
      %142 = vector.broadcast %141 : vector<1x32xf32> to vector<8x32xf32>
      %143 = arith.addf %140, %142 : vector<8x32xf32>
      %c0_65 = arith.constant 0 : index
      %c0_66 = arith.constant 0 : index
      %144 = vector.load %arg9[%c0_65, %c0_66] : memref<32x32xbf16, #tpu.memory_space<vmem>>, vector<32x32xbf16>
      %cst_67 = arith.constant dense<0.000000e+00> : vector<8x32xf32>
      %145 = tpu.matmul %138, %144, %cst_67 {dimension_numbers = #tpu.dot_dimension_numbers<[1], [0], [0], [1], [0, 0, 1, 1], [], []>} : vector<8x32xbf16>, vector<32x32xbf16>, vector<8x32xf32> -> vector<8x32xf32>
      %c0_68 = arith.constant 0 : index
      %c0_69 = arith.constant 0 : index
      %146 = vector.load %arg10[%c0_68, %c0_69] : memref<1x32xf32, #tpu.memory_space<vmem>>, vector<1x32xf32>
      %147 = vector.broadcast %146 : vector<1x32xf32> to vector<8x32xf32>
      %148 = arith.addf %145, %147 : vector<8x32xf32>
      %149 = vector.extract_strided_slice %143 {offsets = [0, 0], sizes = [8, 8], strides = [1, 1]} : vector<8x32xf32> to vector<8x8xf32>
      %150 = tpu.transpose %149, [1, 0] : vector<8x8xf32> -> vector<8x8xf32>
      %151 = vector.extract_strided_slice %143 {offsets = [0, 8], sizes = [8, 8], strides = [1, 1]} : vector<8x32xf32> to vector<8x8xf32>
      %152 = tpu.transpose %151, [1, 0] : vector<8x8xf32> -> vector<8x8xf32>
      %153 = vector.extract_strided_slice %143 {offsets = [0, 16], sizes = [8, 8], strides = [1, 1]} : vector<8x32xf32> to vector<8x8xf32>
      %154 = tpu.transpose %153, [1, 0] : vector<8x8xf32> -> vector<8x8xf32>
      %155 = vector.extract_strided_slice %143 {offsets = [0, 24], sizes = [8, 8], strides = [1, 1]} : vector<8x32xf32> to vector<8x8xf32>
      %156 = tpu.transpose %155, [1, 0] : vector<8x8xf32> -> vector<8x8xf32>
      %157 = vector.shape_cast %150 : vector<8x8xf32> to vector<1x8x8xf32>
      %158 = vector.shape_cast %152 : vector<8x8xf32> to vector<1x8x8xf32>
      %159 = vector.shape_cast %154 : vector<8x8xf32> to vector<1x8x8xf32>
      %160 = vector.shape_cast %156 : vector<8x8xf32> to vector<1x8x8xf32>
      %161 = tpu.concatenate %157, %158, %159, %160 in 0 : vector<1x8x8xf32>, vector<1x8x8xf32>, vector<1x8x8xf32>, vector<1x8x8xf32> -> vector<4x8x8xf32>
      %162 = arith.truncf %161 : vector<4x8x8xf32> to vector<4x8x8xbf16>
      %c0_70 = arith.constant 0 : index
      %c0_71 = arith.constant 0 : index
      %c0_72 = arith.constant 0 : index
      %163 = vector.load %arg20[%c0_70, %c0_71, %c0_72] : memref<4x8x8xbf16, #tpu.memory_space<vmem>>, vector<4x8x8xbf16>
      tpu.vector_store %arg20[%c0_70, %c0_71, %c0_72], %162 {strides = array<i32>} : memref<4x8x8xbf16, #tpu.memory_space<vmem>>, vector<4x8x8xbf16>,
      %164 = vector.extract_strided_slice %148 {offsets = [0, 0], sizes = [8, 8], strides = [1, 1]} : vector<8x32xf32> to vector<8x8xf32>
      %165 = vector.extract_strided_slice %148 {offsets = [0, 8], sizes = [8, 8], strides = [1, 1]} : vector<8x32xf32> to vector<8x8xf32>
      %166 = vector.extract_strided_slice %148 {offsets = [0, 16], sizes = [8, 8], strides = [1, 1]} : vector<8x32xf32> to vector<8x8xf32>
      %167 = vector.extract_strided_slice %148 {offsets = [0, 24], sizes = [8, 8], strides = [1, 1]} : vector<8x32xf32> to vector<8x8xf32>
      %168 = vector.shape_cast %164 : vector<8x8xf32> to vector<1x8x8xf32>
      %169 = vector.shape_cast %165 : vector<8x8xf32> to vector<1x8x8xf32>
      %170 = vector.shape_cast %166 : vector<8x8xf32> to vector<1x8x8xf32>
      %171 = vector.shape_cast %167 : vector<8x8xf32> to vector<1x8x8xf32>
      %172 = tpu.concatenate %168, %169, %170, %171 in 0 : vector<1x8x8xf32>, vector<1x8x8xf32>, vector<1x8x8xf32>, vector<1x8x8xf32> -> vector<4x8x8xf32>
      %173 = arith.truncf %172 : vector<4x8x8xf32> to vector<4x8x8xbf16>
      %c0_73 = arith.constant 0 : index
      %c0_74 = arith.constant 0 : index
      %c0_75 = arith.constant 0 : index
      %174 = vector.load %arg21[%c0_73, %c0_74, %c0_75] : memref<4x8x8xbf16, #tpu.memory_space<vmem>>, vector<4x8x8xbf16>
      tpu.vector_store %arg21[%c0_73, %c0_74, %c0_75], %173 {strides = array<i32>} : memref<4x8x8xbf16, #tpu.memory_space<vmem>>, vector<4x8x8xbf16>,
    } else {
    }
    %c8_i32 = arith.constant 8 : i32
    %3 = arith.muli %arg1, %c8_i32 : i32
    %4 = tpu.assume_multiple %3, 8 : i32
    %c0 = arith.constant 0 : index
    %5 = arith.index_cast %4 : i32 to index
    %c0_1 = arith.constant 0 : index
    %6 = vector.load %arg2[%c0, %5, %c0_1] : memref<1x8x32xbf16, #tpu.memory_space<vmem>>, vector<1x8x32xbf16>
    %7 = vector.shape_cast %6 : vector<1x8x32xbf16> to vector<8x32xbf16>
    %c0_2 = arith.constant 0 : index
    %c0_3 = arith.constant 0 : index
    %8 = vector.load %arg5[%c0_2, %c0_3] : memref<32x32xbf16, #tpu.memory_space<vmem>>, vector<32x32xbf16>
    %cst = arith.constant dense<0.000000e+00> : vector<8x32xf32>
    %9 = tpu.matmul %7, %8, %cst {dimension_numbers = #tpu.dot_dimension_numbers<[1], [0], [0], [1], [0, 0, 1, 1], [], []>} : vector<8x32xbf16>, vector<32x32xbf16>, vector<8x32xf32> -> vector<8x32xf32>
    %c0_4 = arith.constant 0 : index
    %c0_5 = arith.constant 0 : index
    %10 = vector.load %arg6[%c0_4, %c0_5] : memref<1x32xf32, #tpu.memory_space<vmem>>, vector<1x32xf32>
    %11 = vector.broadcast %10 : vector<1x32xf32> to vector<8x32xf32>
    %12 = arith.addf %9, %11 : vector<8x32xf32>
    %13 = vector.extract_strided_slice %12 {offsets = [0, 0], sizes = [8, 8], strides = [1, 1]} : vector<8x32xf32> to vector<8x8xf32>
    %14 = vector.extract_strided_slice %12 {offsets = [0, 8], sizes = [8, 8], strides = [1, 1]} : vector<8x32xf32> to vector<8x8xf32>
    %15 = vector.extract_strided_slice %12 {offsets = [0, 16], sizes = [8, 8], strides = [1, 1]} : vector<8x32xf32> to vector<8x8xf32>
    %16 = vector.extract_strided_slice %12 {offsets = [0, 24], sizes = [8, 8], strides = [1, 1]} : vector<8x32xf32> to vector<8x8xf32>
    %17 = vector.shape_cast %13 : vector<8x8xf32> to vector<1x8x8xf32>
    %18 = vector.shape_cast %14 : vector<8x8xf32> to vector<1x8x8xf32>
    %19 = vector.shape_cast %15 : vector<8x8xf32> to vector<1x8x8xf32>
    %20 = vector.shape_cast %16 : vector<8x8xf32> to vector<1x8x8xf32>
    %21 = tpu.concatenate %17, %18, %19, %20 in 0 : vector<1x8x8xf32>, vector<1x8x8xf32>, vector<1x8x8xf32>, vector<1x8x8xf32> -> vector<4x8x8xf32>
    %cst_6 = arith.constant 0.353553385 : f32
    %22 = vector.broadcast %cst_6 : f32 to vector<4x8x8xf32>
    %23 = arith.mulf %21, %22 : vector<4x8x8xf32>
    %24 = arith.truncf %23 : vector<4x8x8xf32> to vector<4x8x8xbf16>
    %c0_7 = arith.constant 0 : index
    %c0_8 = arith.constant 0 : index
    %c0_9 = arith.constant 0 : index
    %25 = vector.load %arg3[%c0_7, %c0_8, %c0_9] : memref<1x1x8xf32, #tpu.memory_space<vmem>>, vector<1x1x8xf32>
    %26 = vector.shape_cast %25 : vector<1x1x8xf32> to vector<1x8xf32>
    %cst_10 = arith.constant -1.000000e+30 : f32
    %27 = vector.broadcast %cst_10 : f32 to vector<4x8x1xf32>
    %cst_11 = arith.constant 0.000000e+00 : f32
    %28 = vector.broadcast %cst_11 : f32 to vector<4x8x1xf32>
    %cst_12 = arith.constant 0.000000e+00 : f32
    %29 = vector.broadcast %cst_12 : f32 to vector<4x8x8xf32>
    %c0_13 = arith.constant 0 : index
    %c0_14 = arith.constant 0 : index
    %c0_15 = arith.constant 0 : index
    %30 = vector.load %arg20[%c0_13, %c0_14, %c0_15] : memref<4x8x8xbf16, #tpu.memory_space<vmem>>, vector<4x8x8xbf16>
    "tpu.trace_start"() <{level = 10 : i32, message = "hqd,hdk->hqk"}> : () -> ()
    %cst_16 = arith.constant dense<0.000000e+00> : vector<4x8x8xf32>
    %31 = tpu.matmul %24, %30, %cst_16 {dimension_numbers = #tpu.dot_dimension_numbers<[2], [1], [1], [2], [0, 0, 0, 1, 1, 2], [0], [0]>} : vector<4x8x8xbf16>, vector<4x8x8xbf16>, vector<4x8x8xf32> -> vector<4x8x8xf32>
    "tpu.trace_stop"() : () -> ()
    %c0_17 = arith.constant 0 : index
    %c0_18 = arith.constant 0 : index
    %32 = vector.load %arg4[%c0_17, %c0_18] : memref<8x8xf32, #tpu.memory_space<vmem>>, vector<8x8xf32>
    %33 = vector.broadcast %26 : vector<1x8xf32> to vector<8x8xf32>
    %34 = arith.addf %33, %32 : vector<8x8xf32>
    %35 = vector.shape_cast %34 : vector<8x8xf32> to vector<1x8x8xf32>
    %36 = vector.broadcast %35 : vector<1x8x8xf32> to vector<4x8x8xf32>
    %37 = arith.addf %31, %36 : vector<4x8x8xf32>
    %cst_19 = arith.constant dense<0xFF800000> : vector<4x8xf32>
    %38 = vector.multi_reduction <maximumf>, %37, %cst_19 [2] : vector<4x8x8xf32> to vector<4x8xf32>
    %39 = vector.shape_cast %38 : vector<4x8xf32> to vector<4x8x1xf32>
    %40 = arith.maximumf %27, %39 : vector<4x8x1xf32>
    %41 = arith.subf %27, %40 : vector<4x8x1xf32>
    %42 = math.exp %41 : vector<4x8x1xf32>
    %43 = vector.broadcast %40 : vector<4x8x1xf32> to vector<4x8x8xf32>
    %44 = arith.subf %37, %43 : vector<4x8x8xf32>
    %45 = math.exp %44 : vector<4x8x8xf32>
    %46 = arith.mulf %42, %28 : vector<4x8x1xf32>
    %cst_20 = arith.constant dense<0.000000e+00> : vector<4x8xf32>
    %47 = vector.multi_reduction <add>, %45, %cst_20 [2] : vector<4x8x8xf32> to vector<4x8xf32>
    %48 = vector.shape_cast %47 : vector<4x8xf32> to vector<4x8x1xf32>
    %49 = arith.addf %46, %48 : vector<4x8x1xf32>
    %c0_21 = arith.constant 0 : index
    %c0_22 = arith.constant 0 : index
    %c0_23 = arith.constant 0 : index
    %50 = vector.load %arg21[%c0_21, %c0_22, %c0_23] : memref<4x8x8xbf16, #tpu.memory_space<vmem>>, vector<4x8x8xbf16>
    %51 = vector.broadcast %42 : vector<4x8x1xf32> to vector<4x8x8xf32>
    %52 = arith.mulf %51, %29 : vector<4x8x8xf32>
    %53 = arith.truncf %45 : vector<4x8x8xf32> to vector<4x8x8xbf16>
    "tpu.trace_start"() <{level = 10 : i32, message = "hqk,hkd->hqd"}> : () -> ()
    %cst_24 = arith.constant dense<0.000000e+00> : vector<4x8x8xf32>
    %54 = tpu.matmul %53, %50, %cst_24 {dimension_numbers = #tpu.dot_dimension_numbers<[2], [1], [1], [2], [0, 0, 0, 1, 1, 2], [0], [0]>} : vector<4x8x8xbf16>, vector<4x8x8xbf16>, vector<4x8x8xf32> -> vector<4x8x8xf32>
    "tpu.trace_stop"() : () -> ()
    %55 = arith.addf %52, %54 : vector<4x8x8xf32>
    %56 = tpu.reciprocal %49 {approx = true} : vector<4x8x1xf32> -> vector<4x8x1xf32>
    %57 = vector.broadcast %56 : vector<4x8x1xf32> to vector<4x8x8xf32>
    %58 = arith.mulf %55, %57 : vector<4x8x8xf32>
    %59 = vector.extract_strided_slice %58 {offsets = [0, 0, 0], sizes = [1, 8, 8], strides = [1, 1, 1]} : vector<4x8x8xf32> to vector<1x8x8xf32>
    %60 = vector.shape_cast %59 : vector<1x8x8xf32> to vector<8x8xf32>
    %61 = vector.extract_strided_slice %58 {offsets = [1, 0, 0], sizes = [1, 8, 8], strides = [1, 1, 1]} : vector<4x8x8xf32> to vector<1x8x8xf32>
    %62 = vector.shape_cast %61 : vector<1x8x8xf32> to vector<8x8xf32>
    %63 = vector.extract_strided_slice %58 {offsets = [2, 0, 0], sizes = [1, 8, 8], strides = [1, 1, 1]} : vector<4x8x8xf32> to vector<1x8x8xf32>
    %64 = vector.shape_cast %63 : vector<1x8x8xf32> to vector<8x8xf32>
    %65 = vector.extract_strided_slice %58 {offsets = [3, 0, 0], sizes = [1, 8, 8], strides = [1, 1, 1]} : vector<4x8x8xf32> to vector<1x8x8xf32>
    %66 = vector.shape_cast %65 : vector<1x8x8xf32> to vector<8x8xf32>
    %67 = tpu.concatenate %60, %62, %64, %66 in 1 : vector<8x8xf32>, vector<8x8xf32>, vector<8x8xf32>, vector<8x8xf32> -> vector<8x32xf32>
    %68 = arith.extf %7 : vector<8x32xbf16> to vector<8x32xf32>
    %69 = arith.addf %68, %67 : vector<8x32xf32>
    %c0_25 = arith.constant 0 : index
    %c0_26 = arith.constant 0 : index
    %70 = vector.load %arg11[%c0_25, %c0_26] : memref<1x32xf32, #tpu.memory_space<vmem>>, vector<1x32xf32>
    %c0_27 = arith.constant 0 : index
    %c0_28 = arith.constant 0 : index
    %71 = vector.load %arg12[%c0_27, %c0_28] : memref<1x32xf32, #tpu.memory_space<vmem>>, vector<1x32xf32>
    %cst_29 = arith.constant dense<0.000000e+00> : vector<8xf32>
    %72 = vector.multi_reduction <add>, %69, %cst_29 [1] : vector<8x32xf32> to vector<8xf32>
    %73 = vector.shape_cast %72 : vector<8xf32> to vector<8x1xf32>
    %cst_30 = arith.constant 3.200000e+01 : f32
    %74 = vector.broadcast %cst_30 : f32 to vector<8x1xf32>
    %75 = arith.divf %73, %74 : vector<8x1xf32>
    %76 = vector.broadcast %75 : vector<8x1xf32> to vector<8x32xf32>
    %77 = arith.subf %69, %76 : vector<8x32xf32>
    %78 = arith.mulf %77, %77 : vector<8x32xf32>
    %cst_31 = arith.constant dense<0.000000e+00> : vector<8xf32>
    %79 = vector.multi_reduction <add>, %78, %cst_31 [1] : vector<8x32xf32> to vector<8xf32>
    %80 = vector.shape_cast %79 : vector<8xf32> to vector<8x1xf32>
    %cst_32 = arith.constant 3.200000e+01 : f32
    %81 = vector.broadcast %cst_32 : f32 to vector<8x1xf32>
    %82 = arith.divf %80, %81 : vector<8x1xf32>
    %83 = vector.broadcast %75 : vector<8x1xf32> to vector<8x32xf32>
    %84 = arith.subf %69, %83 : vector<8x32xf32>
    %cst_33 = arith.constant 9.99999974E-6 : f32
    %85 = vector.broadcast %cst_33 : f32 to vector<8x1xf32>
    %86 = arith.addf %82, %85 : vector<8x1xf32>
    %87 = math.rsqrt %86 : vector<8x1xf32>
    %88 = vector.broadcast %87 : vector<8x1xf32> to vector<8x32xf32>
    %89 = arith.mulf %84, %88 : vector<8x32xf32>
    %90 = vector.broadcast %70 : vector<1x32xf32> to vector<8x32xf32>
    %91 = arith.mulf %89, %90 : vector<8x32xf32>
    %92 = vector.broadcast %71 : vector<1x32xf32> to vector<8x32xf32>
    %93 = arith.addf %91, %92 : vector<8x32xf32>
    %94 = arith.truncf %93 : vector<8x32xf32> to vector<8x32xbf16>
    %c0_34 = arith.constant 0 : index
    %c0_35 = arith.constant 0 : index
    %95 = vector.load %arg13[%c0_34, %c0_35] : memref<32x64xbf16, #tpu.memory_space<vmem>>, vector<32x64xbf16>
    %cst_36 = arith.constant dense<0.000000e+00> : vector<8x64xf32>
    %96 = tpu.matmul %94, %95, %cst_36 {dimension_numbers = #tpu.dot_dimension_numbers<[1], [0], [0], [1], [0, 0, 1, 1], [], []>} : vector<8x32xbf16>, vector<32x64xbf16>, vector<8x64xf32> -> vector<8x64xf32>
    %c0_37 = arith.constant 0 : index
    %c0_38 = arith.constant 0 : index
    %97 = vector.load %arg14[%c0_37, %c0_38] : memref<1x64xf32, #tpu.memory_space<vmem>>, vector<1x64xf32>
    %98 = vector.broadcast %97 : vector<1x64xf32> to vector<8x64xf32>
    %99 = arith.addf %96, %98 : vector<8x64xf32>
    %cst_39 = arith.constant 0.000000e+00 : f32
    %100 = vector.broadcast %cst_39 : f32 to vector<8x64xf32>
    %101 = arith.maximumf %99, %100 : vector<8x64xf32>
    %102 = arith.truncf %101 : vector<8x64xf32> to vector<8x64xbf16>
    %c0_40 = arith.constant 0 : index
    %c0_41 = arith.constant 0 : index
    %103 = vector.load %arg15[%c0_40, %c0_41] : memref<64x32xbf16, #tpu.memory_space<vmem>>, vector<64x32xbf16>
    %cst_42 = arith.constant dense<0.000000e+00> : vector<8x32xf32>
    %104 = tpu.matmul %102, %103, %cst_42 {dimension_numbers = #tpu.dot_dimension_numbers<[1], [0], [0], [1], [0, 0, 1, 1], [], []>} : vector<8x64xbf16>, vector<64x32xbf16>, vector<8x32xf32> -> vector<8x32xf32>
    %c0_43 = arith.constant 0 : index
    %c0_44 = arith.constant 0 : index
    %105 = vector.load %arg16[%c0_43, %c0_44] : memref<1x32xf32, #tpu.memory_space<vmem>>, vector<1x32xf32>
    %106 = vector.broadcast %105 : vector<1x32xf32> to vector<8x32xf32>
    %107 = arith.addf %104, %106 : vector<8x32xf32>
    %108 = arith.addf %93, %107 : vector<8x32xf32>
    %c0_45 = arith.constant 0 : index
    %c0_46 = arith.constant 0 : index
    %109 = vector.load %arg17[%c0_45, %c0_46] : memref<1x32xf32, #tpu.memory_space<vmem>>, vector<1x32xf32>
    %c0_47 = arith.constant 0 : index
    %c0_48 = arith.constant 0 : index
    %110 = vector.load %arg18[%c0_47, %c0_48] : memref<1x32xf32, #tpu.memory_space<vmem>>, vector<1x32xf32>
    %cst_49 = arith.constant dense<0.000000e+00> : vector<8xf32>
    %111 = vector.multi_reduction <add>, %108, %cst_49 [1] : vector<8x32xf32> to vector<8xf32>
    %112 = vector.shape_cast %111 : vector<8xf32> to vector<8x1xf32>
    %cst_50 = arith.constant 3.200000e+01 : f32
    %113 = vector.broadcast %cst_50 : f32 to vector<8x1xf32>
    %114 = arith.divf %112, %113 : vector<8x1xf32>
    %115 = vector.broadcast %114 : vector<8x1xf32> to vector<8x32xf32>
    %116 = arith.subf %108, %115 : vector<8x32xf32>
    %117 = arith.mulf %116, %116 : vector<8x32xf32>
    %cst_51 = arith.constant dense<0.000000e+00> : vector<8xf32>
    %118 = vector.multi_reduction <add>, %117, %cst_51 [1] : vector<8x32xf32> to vector<8xf32>
    %119 = vector.shape_cast %118 : vector<8xf32> to vector<8x1xf32>
    %cst_52 = arith.constant 3.200000e+01 : f32
    %120 = vector.broadcast %cst_52 : f32 to vector<8x1xf32>
    %121 = arith.divf %119, %120 : vector<8x1xf32>
    %122 = vector.broadcast %114 : vector<8x1xf32> to vector<8x32xf32>
    %123 = arith.subf %108, %122 : vector<8x32xf32>
    %cst_53 = arith.constant 9.99999974E-6 : f32
    %124 = vector.broadcast %cst_53 : f32 to vector<8x1xf32>
    %125 = arith.addf %121, %124 : vector<8x1xf32>
    %126 = math.rsqrt %125 : vector<8x1xf32>
    %127 = vector.broadcast %126 : vector<8x1xf32> to vector<8x32xf32>
    %128 = arith.mulf %123, %127 : vector<8x32xf32>
    %129 = vector.broadcast %109 : vector<1x32xf32> to vector<8x32xf32>
    %130 = arith.mulf %128, %129 : vector<8x32xf32>
    %131 = vector.broadcast %110 : vector<1x32xf32> to vector<8x32xf32>
    %132 = arith.addf %130, %131 : vector<8x32xf32>
    %133 = arith.truncf %132 : vector<8x32xf32> to vector<8x32xbf16>
    %c0_54 = arith.constant 0 : index
    %c0_55 = arith.constant 0 : index
    %c0_56 = arith.constant 0 : index
    %134 = vector.load %arg19[%c0_54, %c0_55, %c0_56] : memref<1x8x32xbf16, #tpu.memory_space<vmem>>, vector<1x8x32xbf16>
    %135 = vector.shape_cast %134 : vector<1x8x32xbf16> to vector<8x32xbf16>
    %136 = vector.shape_cast %133 : vector<8x32xbf16> to vector<1x8x32xbf16>
    tpu.vector_store %arg19[%c0_54, %c0_55, %c0_56], %136 {strides = array<i32>} : memref<1x8x32xbf16, #tpu.memory_space<vmem>>, vector<1x8x32xbf16>,
    return
  }
  func.func @transform_0(%arg0: i32, %arg1: i32) -> (i32, i32, i32) {
    %c0_i32 = arith.constant 0 : i32
    %c0_i32_0 = arith.constant 0 : i32
    %c0_i32_1 = arith.constant 0 : i32
    return %arg0, %c0_i32, %c0_i32_0 : i32, i32, i32
  }
  func.func @transform_1(%arg0: i32, %arg1: i32) -> (i32, i32, i32) {
    %c0_i32 = arith.constant 0 : i32
    %c0_i32_0 = arith.constant 0 : i32
    %c0_i32_1 = arith.constant 0 : i32
    return %arg0, %c0_i32, %c0_i32_0 : i32, i32, i32
  }
  func.func @transform_2(%arg0: i32, %arg1: i32) -> (i32, i32) {
    %c0_i32 = arith.constant 0 : i32
    %c0_i32_0 = arith.constant 0 : i32
    return %arg1, %c0_i32 : i32, i32
  }
  func.func @transform_3(%arg0: i32, %arg1: i32) -> (i32, i32) {
    %c0_i32 = arith.constant 0 : i32
    %c0_i32_0 = arith.constant 0 : i32
    %c0_i32_1 = arith.constant 0 : i32
    return %c0_i32, %c0_i32_0 : i32, i32
  }
  func.func @transform_4(%arg0: i32, %arg1: i32) -> (i32, i32) {
    %c0_i32 = arith.constant 0 : i32
    %c0_i32_0 = arith.constant 0 : i32
    %c0_i32_1 = arith.constant 0 : i32
    return %c0_i32, %c0_i32_0 : i32, i32
  }
  func.func @transform_5(%arg0: i32, %arg1: i32) -> (i32, i32) {
    %c0_i32 = arith.constant 0 : i32
    %c0_i32_0 = arith.constant 0 : i32
    %c0_i32_1 = arith.constant 0 : i32
    return %c0_i32, %c0_i32_0 : i32, i32
  }
  func.func @transform_6(%arg0: i32, %arg1: i32) -> (i32, i32) {
    %c0_i32 = arith.constant 0 : i32
    %c0_i32_0 = arith.constant 0 : i32
    %c0_i32_1 = arith.constant 0 : i32
    return %c0_i32, %c0_i32_0 : i32, i32
  }
  func.func @transform_7(%arg0: i32, %arg1: i32) -> (i32, i32) {
    %c0_i32 = arith.constant 0 : i32
    %c0_i32_0 = arith.constant 0 : i32
    %c0_i32_1 = arith.constant 0 : i32
    return %c0_i32, %c0_i32_0 : i32, i32
  }
  func.func @transform_8(%arg0: i32, %arg1: i32) -> (i32, i32) {
    %c0_i32 = arith.constant 0 : i32
    %c0_i32_0 = arith.constant 0 : i32
    %c0_i32_1 = arith.constant 0 : i32
    return %c0_i32, %c0_i32_0 : i32, i32
  }
  func.func @transform_9(%arg0: i32, %arg1: i32) -> (i32, i32) {
    %c0_i32 = arith.constant 0 : i32
    %c0_i32_0 = arith.constant 0 : i32
    %c0_i32_1 = arith.constant 0 : i32
    return %c0_i32, %c0_i32_0 : i32, i32
  }
  func.func @transform_10(%arg0: i32, %arg1: i32) -> (i32, i32) {
    %c0_i32 = arith.constant 0 : i32
    %c0_i32_0 = arith.constant 0 : i32
    %c0_i32_1 = arith.constant 0 : i32
    return %c0_i32, %c0_i32_0 : i32, i32
  }
  func.func @transform_11(%arg0: i32, %arg1: i32) -> (i32, i32) {
    %c0_i32 = arith.constant 0 : i32
    %c0_i32_0 = arith.constant 0 : i32
    %c0_i32_1 = arith.constant 0 : i32
    return %c0_i32, %c0_i32_0 : i32, i32
  }
  func.func @transform_12(%arg0: i32, %arg1: i32) -> (i32, i32) {
    %c0_i32 = arith.constant 0 : i32
    %c0_i32_0 = arith.constant 0 : i32
    %c0_i32_1 = arith.constant 0 : i32
    return %c0_i32, %c0_i32_0 : i32, i32
  }
  func.func @transform_13(%arg0: i32, %arg1: i32) -> (i32, i32) {
    %c0_i32 = arith.constant 0 : i32
    %c0_i32_0 = arith.constant 0 : i32
    %c0_i32_1 = arith.constant 0 : i32
    return %c0_i32, %c0_i32_0 : i32, i32
  }
  func.func @transform_14(%arg0: i32, %arg1: i32) -> (i32, i32) {
    %c0_i32 = arith.constant 0 : i32
    %c0_i32_0 = arith.constant 0 : i32
    %c0_i32_1 = arith.constant 0 : i32
    return %c0_i32, %c0_i32_0 : i32, i32
  }
  func.func @transform_15(%arg0: i32, %arg1: i32) -> (i32, i32) {
    %c0_i32 = arith.constant 0 : i32
    %c0_i32_0 = arith.constant 0 : i32
    %c0_i32_1 = arith.constant 0 : i32
    return %c0_i32, %c0_i32_0 : i32, i32
  }
  func.func @transform_16(%arg0: i32, %arg1: i32) -> (i32, i32) {
    %c0_i32 = arith.constant 0 : i32
    %c0_i32_0 = arith.constant 0 : i32
    %c0_i32_1 = arith.constant 0 : i32
    return %c0_i32, %c0_i32_0 : i32, i32
  }
  func.func @transform_17(%arg0: i32, %arg1: i32) -> (i32, i32, i32) {
    %c0_i32 = arith.constant 0 : i32
    %c0_i32_0 = arith.constant 0 : i32
    return %arg0, %arg1, %c0_i32 : i32, i32, i32
  }
}

</mosaic_0001>

<llo_original>
// kernel: tpu_custom_call.1
$region0: #{tpu_custom_call.1}
  #allocation0 [shape = 'u32[]', space=smem, size = 0x4, offset = 0x4, fixed_abs, tag = 'smem constant byte address 0x4 - core index']
  #allocation1 [shape = 'u32[144,128]{1,0:T(1,128)}', space=vmem, size = 0x12000, scoped, tag = 'internal scratch']
  %s0 = inlined_call_operand.hbm [shape: f32[8,128], index: 0, kind: input, shape index: {}]
  %s1 = inlined_call_operand.hbm [shape: f32[8,128], index: 1, kind: output, shape index: {}]
  %s2 = sld [smem:[#allocation0]]
  $region41: #{tpu_custom_call.1} parent=0
    _
  %s4 = ssub.s32 1, %s2
  %s5 = scalar_select 0, %s4, %s2
  $region1: #{tpu_custom_call.1} parent=0
    #allocation2 [shape = 'u8[4096]{0}', space=vmem, size = 0x1000, scoped, tag = 'input window, operand 0, single buffered']
    #allocation3 [shape = 's32[2]{0}', space=sflag, size = 0x8, scoped, tag = 'scoped memory for tpu_custom_call.1']
    #allocation4 [shape = 's32[2]{0}', space=sflag, size = 0x8, scoped, tag = 'scoped memory for tpu_custom_call.1']
    #allocation5 [shape = 'u8[4096]{0}', space=vmem, size = 0x1000, scoped, tag = 'output window, operand 0, single buffered']
    %6 = vsyncpa [#allocation3], 0
    %7 = vsyncpa [#allocation4], 0
    loop: start=0, step=1, limit=4
    $region2: #{tpu_custom_call.1} parent=1 // loop_pre_header
      _
    $region3: #{tpu_custom_call.1} parent=1 // loop_header
      %s9 = sphi 0, %s13
      %p10 = scmp.ge.s32.totalorder %s9, 4
      %s17 = sphi 0, %s17
      %s19 = sphi 0, %s17
      %s20 = sphi 0, %s19
      %s34 = sphi 0, %s20
      %s38 = sphi 0, %s38
      %s40 = sphi 0, %s38
      %s41 = sphi 0, %s40
      %s55 = sphi 0, %s41
    $region4: #{tpu_custom_call.1} parent=1 // loop_header_branch
      %12 = sbr.rel (%p10) target = $region8
    $region5: #{tpu_custom_call.1} parent=1 // loop_body
      %s14 = ssub.s32 %s9, 1
      %s15 = ssub.s32 %s9, 2
      %s16 = sadd.s32 %s9, 1
      %s18 = sadd.s32 %s17, 1
      %p21 = scmp.eq.s32.totalorder %s9, 1
      %p22 = scmp.ne.s32.totalorder %s17, %s19
      %p23 = scmp.eq.s32.totalorder %s9, 0
      %p24 = por %p22, %p23
      %p25 = scmp.ne.s32.totalorder %s17, %s19
      %p26 = scmp.eq.s32.totalorder %s14, 1
      %p27 = por %p25, %p26
      %p28 = scmp.ne.s32.totalorder %s19, %s20
      %p29 = scmp.eq.s32.totalorder %s14, 0
      %p30 = por %p28, %p29
      %p31 = scmp.ne.s32.totalorder %s19, %s20
      %p32 = scmp.eq.s32.totalorder %s15, 1
      %p33 = por %p31, %p32
      %p35 = scmp.ne.s32.totalorder %s20, %s34
      %p36 = scmp.eq.s32.totalorder %s15, 0
      %p37 = por %p35, %p36
      %s39 = sadd.s32 %s38, 1
      %p42 = scmp.eq.s32.totalorder %s9, 1
      %p43 = scmp.ne.s32.totalorder %s38, %s40
      %p44 = scmp.eq.s32.totalorder %s9, 0
      %p45 = por %p43, %p44
      %p46 = scmp.ne.s32.totalorder %s38, %s40
      %p47 = scmp.eq.s32.totalorder %s14, 1
      %p48 = por %p46, %p47
      %p49 = scmp.ne.s32.totalorder %s40, %s41
      %p50 = scmp.eq.s32.totalorder %s14, 0
      %p51 = por %p49, %p50
      %p52 = scmp.ne.s32.totalorder %s40, %s41
      %p53 = scmp.eq.s32.totalorder %s15, 1
      %p54 = por %p52, %p53
      %p56 = scmp.ne.s32.totalorder %s41, %s55
      %p57 = scmp.eq.s32.totalorder %s15, 0
      %p58 = por %p56, %p57
      %p59 = scmp.le.s32.totalorder 1, %s9
      %p60 = scmp.lt.s32.totalorder %s9, 3
      %p61 = pnand %p59, %p60
      %p62 = pneg %p61
      // Predicated region
      $region9: #{tpu_custom_call.1} parent=5 // pred_check
        _
      $region10: #{tpu_custom_call.1} parent=5 // pred_check_branch
        %64 = sbr.rel (%p61) target = $region12
      $region11: #{tpu_custom_call.1} parent=5 // pred_region
        %s65 = ssub.s32 %s9, 1
        // Predicated region
        $region13: #{tpu_custom_call.1} parent=11 // pred_check
          %p66 = pneg %p30
        $region14: #{tpu_custom_call.1} parent=11 // pred_check_branch
          %68 = sbr.rel (%p66) target = $region16
        $region15: #{tpu_custom_call.1} parent=11 // pred_region
          %s70 = ssub.s32 128, 128
          %71 = vsyncadd [#allocation3], %s70
          %s73 = sshll.u32 [#allocation2], 4
          %s74 = int_to_ptr.vmem [resolvable:$true] %s73
          %76 = dma.hbm_to_vmem [thread:$0]  %s0, 128, %s74, [#allocation3]
        $region16: #{tpu_custom_call.1} parent=11 // pred_fallthru
          _
      $region12: #{tpu_custom_call.1} parent=5 // pred_fallthru
        _
      %p77 = scmp.lt.s32.totalorder %s9, 2
      // Predicated region
      $region17: #{tpu_custom_call.1} parent=5 // pred_check
        %p78 = pneg %p77
      $region18: #{tpu_custom_call.1} parent=5 // pred_check_branch
        %80 = sbr.rel (%p78) target = $region20
      $region19: #{tpu_custom_call.1} parent=5 // pred_region
        _
      $region20: #{tpu_custom_call.1} parent=5 // pred_fallthru
        _
      %p81 = scmp.le.s32.totalorder 1, %s9
      %p82 = scmp.lt.s32.totalorder %s9, 3
      %p83 = pnand %p81, %p82
      %p84 = pneg %p83
      // Predicated region
      $region21: #{tpu_custom_call.1} parent=5 // pred_check
        _
      $region22: #{tpu_custom_call.1} parent=5 // pred_check_branch
        %86 = sbr.rel (%p83) target = $region24
      $region23: #{tpu_custom_call.1} parent=5 // pred_region
        %s87 = ssub.s32 %s9, 1
        // Predicated region
        $region25: #{tpu_custom_call.1} parent=23 // pred_check
          %p88 = pneg %p30
        $region26: #{tpu_custom_call.1} parent=23 // pred_check_branch
          %90 = sbr.rel (%p88) target = $region28
        $region27: #{tpu_custom_call.1} parent=23 // pred_region
          %91 = dma.done [#allocation3], 128
        $region28: #{tpu_custom_call.1} parent=23 // pred_fallthru
          _
        %p92 = pneg %p30
        %p93 = pneg %p27
        %p94 = pneg %p51
        %p95 = pneg %p48
        %v96 = vld [vmem:[#allocation2] sm:$0xff]
        %v97 = vadd.f32 %v96, 1.0
        %98 = vst [vmem:[#allocation5] sm:$0xff] %v97
        // Predicated region
        $region29: #{tpu_custom_call.1} parent=23 // pred_check
          %p99 = pneg %p48
        $region30: #{tpu_custom_call.1} parent=23 // pred_check_branch
          %101 = sbr.rel (%p99) target = $region32
        $region31: #{tpu_custom_call.1} parent=23 // pred_region
          %s103 = ssub.s32 128, 128
          %104 = vsyncadd [#allocation4], %s103
          %s106 = sshll.u32 [#allocation5], 4
          %s107 = int_to_ptr.vmem [resolvable:$true] %s106
          %109 = dma.vmem_to_hbm [thread:$0]  %s107, 128, %s1, [#allocation4]
        $region32: #{tpu_custom_call.1} parent=23 // pred_fallthru
          _
        // Predicated region
        $region33: #{tpu_custom_call.1} parent=23 // pred_check
          %p110 = pneg %p48
        $region34: #{tpu_custom_call.1} parent=23 // pred_check_branch
          %112 = sbr.rel (%p110) target = $region36
        $region35: #{tpu_custom_call.1} parent=23 // pred_region
          %113 = dma.done [#allocation4], 128
        $region36: #{tpu_custom_call.1} parent=23 // pred_fallthru
          _
      $region24: #{tpu_custom_call.1} parent=5 // pred_fallthru
        _
      %p114 = scmp.le.s32.totalorder 2, %s9
      // Predicated region
      $region37: #{tpu_custom_call.1} parent=5 // pred_check
        %p115 = pneg %p114
      $region38: #{tpu_custom_call.1} parent=5 // pred_check_branch
        %117 = sbr.rel (%p115) target = $region40
      $region39: #{tpu_custom_call.1} parent=5 // pred_region
        %s118 = ssub.s32 %s9, 2
      $region40: #{tpu_custom_call.1} parent=5 // pred_fallthru
        _
    $region6: #{tpu_custom_call.1} parent=1 // loop_footer
      %s13 = sadd.s32 1, %s9
    $region7: #{tpu_custom_call.1} parent=1 // loop_footer_branch
      %8 = sbr.rel target = $region3
    $region8: #{tpu_custom_call.1} parent=1 // loop_exit
      _
    %119 = vsyncpa [#allocation3], 1
    %s120 = scalar_lea.sflag [#allocation3], 1
    %121 = vsyncpa %s120, 1
    %122 = vsyncpa [#allocation4], 1
    %s123 = scalar_lea.sflag [#allocation4], 1
    %124 = vsyncpa %s123, 1

// kernel: transformer_encoder.2
$region0: #{transformer_encoder.2}
  #allocation0 [shape = 'u32[]', space=smem, size = 0x4, offset = 0x4, fixed_abs, tag = 'smem constant byte address 0x4 - core index']
  #allocation1 [shape = 'u32[144,128]{1,0:T(1,128)}', space=vmem, size = 0x12000, scoped, tag = 'internal scratch']
  #allocation2 [shape = 'bf16[4,8,8]{2,1,0:T(8,128)(2,1)}', space=vmem, size = 0x2000, scoped, tag = 'scratch operand']
  #allocation3 [shape = 'bf16[4,8,8]{2,1,0:T(8,128)(2,1)}', space=vmem, size = 0x2000, scoped, tag = 'scratch operand']
  %s0 = inlined_call_operand.vmem [shape: bf16[2,8,32], index: 0, kind: input, shape index: {}, may-alias: {0,17}]
  %s1 = inlined_call_operand.vmem [shape: f32[2,1,8], index: 1, kind: input, shape index: {}]
  %s2 = inlined_call_operand.vmem [shape: f32[8,8], index: 2, kind: input, shape index: {}]
  %s3 = inlined_call_operand.vmem [shape: bf16[32,32], index: 3, kind: input, shape index: {}]
  %s4 = inlined_call_operand.vmem [shape: f32[1,32], index: 4, kind: input, shape index: {}]
  %s5 = inlined_call_operand.vmem [shape: bf16[32,32], index: 5, kind: input, shape index: {}]
  %s6 = inlined_call_operand.vmem [shape: f32[1,32], index: 6, kind: input, shape index: {}]
  %s7 = inlined_call_operand.vmem [shape: bf16[32,32], index: 7, kind: input, shape index: {}]
  %s8 = inlined_call_operand.vmem [shape: f32[1,32], index: 8, kind: input, shape index: {}]
  %s9 = inlined_call_operand.vmem [shape: f32[1,32], index: 9, kind: input, shape index: {}]
  %s10 = inlined_call_operand.vmem [shape: f32[1,32], index: 10, kind: input, shape index: {}]
  %s11 = inlined_call_operand.vmem [shape: bf16[32,64], index: 11, kind: input, shape index: {}]
  %s12 = inlined_call_operand.hbm [shape: f32[1,64], index: 12, kind: input, shape index: {}]
  %s13 = inlined_call_operand.vmem [shape: bf16[64,32], index: 13, kind: input, shape index: {}]
  %s14 = inlined_call_operand.hbm [shape: f32[1,32], index: 14, kind: input, shape index: {}]
  %s15 = inlined_call_operand.vmem [shape: f32[1,32], index: 15, kind: input, shape index: {}]
  %s16 = inlined_call_operand.vmem [shape: f32[1,32], index: 16, kind: input, shape index: {}]
  %s17 = inlined_call_operand.vmem [shape: bf16[2,8,32], index: 17, kind: output, shape index: {}, may-alias: {0,17}]
  %s18 = sld [smem:[#allocation0]]
  $region113: #{transformer_encoder.2} parent=0
    _
  %s20 = ssub.s32 1, %s18
  %s21 = scalar_select 0, %s20, %s18
  $region1: #{transformer_encoder.2} parent=0
    #allocation4 [shape = 'u8[512]{0}', space=vmem, size = 0x400, scoped, tag = 'input window, operand 12, single buffered']
    #allocation5 [shape = 's32[2]{0}', space=sflag, size = 0x8, scoped, tag = 'scoped memory for transformer_encoder.2']
    #allocation6 [shape = 'u8[512]{0}', space=vmem, size = 0x400, scoped, tag = 'input window, operand 14, single buffered']
    #allocation7 [shape = 's32[1]{0}', space=sflag, size = 0x4, scoped, tag = 'scoped memory for transformer_encoder.2']
    %22 = vsyncpa [#allocation5], 0
    %23 = vsyncpa [#allocation7], 0
    loop: start=0, step=1, limit=4
    $region2: #{transformer_encoder.2} parent=1 // loop_pre_header
      _
    $region3: #{transformer_encoder.2} parent=1 // loop_header
      %s25 = sphi 0, %s29
      %p26 = scmp.ge.s32.totalorder %s25, 4
      %s32 = sphi 0, %s44
      %s33 = sphi 0, %s40
      %s34 = sphi 0, %s32
      %s35 = sphi 0, %s33
      %s36 = sphi 0, %s34
      %s37 = sphi 0, %s35
      %s47 = sphi 0, %s49
      %s50 = sphi 0, %s47
      %s51 = sphi 0, %s50
      %s67 = sphi 0, %s51
      %s73 = sphi 0, %s75
      %s76 = sphi 0, %s73
      %s77 = sphi 0, %s76
      %s93 = sphi 0, %s77
      %s99 = sphi 0, %s101
      %s102 = sphi 0, %s99
      %s103 = sphi 0, %s102
      %s119 = sphi 0, %s103
      %s123 = sphi 0, %s123
      %s125 = sphi 0, %s123
      %s126 = sphi 0, %s125
      %s140 = sphi 0, %s126
      %s144 = sphi 0, %s144
      %s146 = sphi 0, %s144
      %s147 = sphi 0, %s146
      %s161 = sphi 0, %s147
      %s165 = sphi 0, %s165
      %s167 = sphi 0, %s165
      %s168 = sphi 0, %s167
      %s182 = sphi 0, %s168
      %s186 = sphi 0, %s186
      %s188 = sphi 0, %s186
      %s189 = sphi 0, %s188
      %s203 = sphi 0, %s189
      %s207 = sphi 0, %s207
      %s209 = sphi 0, %s207
      %s210 = sphi 0, %s209
      %s224 = sphi 0, %s210
      %s228 = sphi 0, %s228
      %s230 = sphi 0, %s228
      %s231 = sphi 0, %s230
      %s245 = sphi 0, %s231
      %s249 = sphi 0, %s249
      %s251 = sphi 0, %s249
      %s252 = sphi 0, %s251
      %s266 = sphi 0, %s252
      %s270 = sphi 0, %s270
      %s272 = sphi 0, %s270
      %s273 = sphi 0, %s272
      %s287 = sphi 0, %s273
      %s291 = sphi 0, %s291
      %s293 = sphi 0, %s291
      %s294 = sphi 0, %s293
      %s308 = sphi 0, %s294
      %s312 = sphi 0, %s312
      %s314 = sphi 0, %s312
      %s315 = sphi 0, %s314
      %s329 = sphi 0, %s315
      %s333 = sphi 0, %s333
      %s335 = sphi 0, %s333
      %s336 = sphi 0, %s335
      %s350 = sphi 0, %s336
      %s354 = sphi 0, %s354
      %s356 = sphi 0, %s354
      %s357 = sphi 0, %s356
      %s371 = sphi 0, %s357
      %s375 = sphi 0, %s375
      %s377 = sphi 0, %s375
      %s378 = sphi 0, %s377
      %s392 = sphi 0, %s378
      %s396 = sphi 0, %s396
      %s398 = sphi 0, %s396
      %s399 = sphi 0, %s398
      %s413 = sphi 0, %s399
      %s421 = sphi 0, %s423
      %s424 = sphi 0, %s421
      %s425 = sphi 0, %s424
      %s441 = sphi 0, %s425
    $region4: #{transformer_encoder.2} parent=1 // loop_header_branch
      %28 = sbr.rel (%p26) target = $region8
    $region5: #{transformer_encoder.2} parent=1 // loop_body
      %s30 = ssub.s32 %s25, 1
      %s31 = ssub.s32 %s25, 2
      %s38 = sadd.s32 1, %s33
      %p39 = scmp.ge.s32.totalorder %s38, 1
      %s40 = scalar_select %p39, 0, %s38
      %s41 = sadd.s32 1, %s32
      %s42 = scalar_select %p39, %s41, %s32
      %p43 = scmp.ge.s32.totalorder %s42, 2
      %s44 = scalar_select %p43, 0, %s42
      %s45 = ssub.s32 %s32, %s44
      %p46 = scmp.eq.s32.totalorder %s45, 0
      %s48 = sadd.s32 %s47, 1
      %s49 = scalar_select %p46, %s47, %s48
      %p52 = pneg %p46
      %p53 = scmp.eq.s32.totalorder %s25, 1
      %p54 = por %p52, %p53
      %p55 = scmp.ne.s32.totalorder %s47, %s50
      %p56 = scmp.eq.s32.totalorder %s25, 0
      %p57 = por %p55, %p56
      %p58 = scmp.ne.s32.totalorder %s47, %s50
      %p59 = scmp.eq.s32.totalorder %s30, 1
      %p60 = por %p58, %p59
      %p61 = scmp.ne.s32.totalorder %s50, %s51
      %p62 = scmp.eq.s32.totalorder %s30, 0
      %p63 = por %p61, %p62
      %p64 = scmp.ne.s32.totalorder %s50, %s51
      %p65 = scmp.eq.s32.totalorder %s31, 1
      %p66 = por %p64, %p65
      %p68 = scmp.ne.s32.totalorder %s51, %s67
      %p69 = scmp.eq.s32.totalorder %s31, 0
      %p70 = por %p68, %p69
      %s71 = ssub.s32 %s32, %s44
      %p72 = scmp.eq.s32.totalorder %s71, 0
      %s74 = sadd.s32 %s73, 1
      %s75 = scalar_select %p72, %s73, %s74
      %p78 = pneg %p72
      %p79 = scmp.eq.s32.totalorder %s25, 1
      %p80 = por %p78, %p79
      %p81 = scmp.ne.s32.totalorder %s73, %s76
      %p82 = scmp.eq.s32.totalorder %s25, 0
      %p83 = por %p81, %p82
      %p84 = scmp.ne.s32.totalorder %s73, %s76
      %p85 = scmp.eq.s32.totalorder %s30, 1
      %p86 = por %p84, %p85
      %p87 = scmp.ne.s32.totalorder %s76, %s77
      %p88 = scmp.eq.s32.totalorder %s30, 0
      %p89 = por %p87, %p88
      %p90 = scmp.ne.s32.totalorder %s76, %s77
      %p91 = scmp.eq.s32.totalorder %s31, 1
      %p92 = por %p90, %p91
      %p94 = scmp.ne.s32.totalorder %s77, %s93
      %p95 = scmp.eq.s32.totalorder %s31, 0
      %p96 = por %p94, %p95
      %s97 = ssub.s32 %s33, %s40
      %p98 = scmp.eq.s32.totalorder %s97, 0
      %s100 = sadd.s32 %s99, 1
      %s101 = scalar_select %p98, %s99, %s100
      %p104 = pneg %p98
      %p105 = scmp.eq.s32.totalorder %s25, 1
      %p106 = por %p104, %p105
      %p107 = scmp.ne.s32.totalorder %s99, %s102
      %p108 = scmp.eq.s32.totalorder %s25, 0
      %p109 = por %p107, %p108
      %p110 = scmp.ne.s32.totalorder %s99, %s102
      %p111 = scmp.eq.s32.totalorder %s30, 1
      %p112 = por %p110, %p111
      %p113 = scmp.ne.s32.totalorder %s102, %s103
      %p114 = scmp.eq.s32.totalorder %s30, 0
      %p115 = por %p113, %p114
      %p116 = scmp.ne.s32.totalorder %s102, %s103
      %p117 = scmp.eq.s32.totalorder %s31, 1
      %p118 = por %p116, %p117
      %p120 = scmp.ne.s32.totalorder %s103, %s119
      %p121 = scmp.eq.s32.totalorder %s31, 0
      %p122 = por %p120, %p121
      %s124 = sadd.s32 %s123, 1
      %p127 = scmp.eq.s32.totalorder %s25, 1
      %p128 = scmp.ne.s32.totalorder %s123, %s125
      %p129 = scmp.eq.s32.totalorder %s25, 0
      %p130 = por %p128, %p129
      %p131 = scmp.ne.s32.totalorder %s123, %s125
      %p132 = scmp.eq.s32.totalorder %s30, 1
      %p133 = por %p131, %p132
      %p134 = scmp.ne.s32.totalorder %s125, %s126
      %p135 = scmp.eq.s32.totalorder %s30, 0
      %p136 = por %p134, %p135
      %p137 = scmp.ne.s32.totalorder %s125, %s126
      %p138 = scmp.eq.s32.totalorder %s31, 1
      %p139 = por %p137, %p138
      %p141 = scmp.ne.s32.totalorder %s126, %s140
      %p142 = scmp.eq.s32.totalorder %s31, 0
      %p143 = por %p141, %p142
      %s145 = sadd.s32 %s144, 1
      %p148 = scmp.eq.s32.totalorder %s25, 1
      %p149 = scmp.ne.s32.totalorder %s144, %s146
      %p150 = scmp.eq.s32.totalorder %s25, 0
      %p151 = por %p149, %p150
      %p152 = scmp.ne.s32.totalorder %s144, %s146
      %p153 = scmp.eq.s32.totalorder %s30, 1
      %p154 = por %p152, %p153
      %p155 = scmp.ne.s32.totalorder %s146, %s147
      %p156 = scmp.eq.s32.totalorder %s30, 0
      %p157 = por %p155, %p156
      %p158 = scmp.ne.s32.totalorder %s146, %s147
      %p159 = scmp.eq.s32.totalorder %s31, 1
      %p160 = por %p158, %p159
      %p162 = scmp.ne.s32.totalorder %s147, %s161
      %p163 = scmp.eq.s32.totalorder %s31, 0
      %p164 = por %p162, %p163
      %s166 = sadd.s32 %s165, 1
      %p169 = scmp.eq.s32.totalorder %s25, 1
      %p170 = scmp.ne.s32.totalorder %s165, %s167
      %p171 = scmp.eq.s32.totalorder %s25, 0
      %p172 = por %p170, %p171
      %p173 = scmp.ne.s32.totalorder %s165, %s167
      %p174 = scmp.eq.s32.totalorder %s30, 1
      %p175 = por %p173, %p174
      %p176 = scmp.ne.s32.totalorder %s167, %s168
      %p177 = scmp.eq.s32.totalorder %s30, 0
      %p178 = por %p176, %p177
      %p179 = scmp.ne.s32.totalorder %s167, %s168
      %p180 = scmp.eq.s32.totalorder %s31, 1
      %p181 = por %p179, %p180
      %p183 = scmp.ne.s32.totalorder %s168, %s182
      %p184 = scmp.eq.s32.totalorder %s31, 0
      %p185 = por %p183, %p184
      %s187 = sadd.s32 %s186, 1
      %p190 = scmp.eq.s32.totalorder %s25, 1
      %p191 = scmp.ne.s32.totalorder %s186, %s188
      %p192 = scmp.eq.s32.totalorder %s25, 0
      %p193 = por %p191, %p192
      %p194 = scmp.ne.s32.totalorder %s186, %s188
      %p195 = scmp.eq.s32.totalorder %s30, 1
      %p196 = por %p194, %p195
      %p197 = scmp.ne.s32.totalorder %s188, %s189
      %p198 = scmp.eq.s32.totalorder %s30, 0
      %p199 = por %p197, %p198
      %p200 = scmp.ne.s32.totalorder %s188, %s189
      %p201 = scmp.eq.s32.totalorder %s31, 1
      %p202 = por %p200, %p201
      %p204 = scmp.ne.s32.totalorder %s189, %s203
      %p205 = scmp.eq.s32.totalorder %s31, 0
      %p206 = por %p204, %p205
      %s208 = sadd.s32 %s207, 1
      %p211 = scmp.eq.s32.totalorder %s25, 1
      %p212 = scmp.ne.s32.totalorder %s207, %s209
      %p213 = scmp.eq.s32.totalorder %s25, 0
      %p214 = por %p212, %p213
      %p215 = scmp.ne.s32.totalorder %s207, %s209
      %p216 = scmp.eq.s32.totalorder %s30, 1
      %p217 = por %p215, %p216
      %p218 = scmp.ne.s32.totalorder %s209, %s210
      %p219 = scmp.eq.s32.totalorder %s30, 0
      %p220 = por %p218, %p219
      %p221 = scmp.ne.s32.totalorder %s209, %s210
      %p222 = scmp.eq.s32.totalorder %s31, 1
      %p223 = por %p221, %p222
      %p225 = scmp.ne.s32.totalorder %s210, %s224
      %p226 = scmp.eq.s32.totalorder %s31, 0
      %p227 = por %p225, %p226
      %s229 = sadd.s32 %s228, 1
      %p232 = scmp.eq.s32.totalorder %s25, 1
      %p233 = scmp.ne.s32.totalorder %s228, %s230
      %p234 = scmp.eq.s32.totalorder %s25, 0
      %p235 = por %p233, %p234
      %p236 = scmp.ne.s32.totalorder %s228, %s230
      %p237 = scmp.eq.s32.totalorder %s30, 1
      %p238 = por %p236, %p237
      %p239 = scmp.ne.s32.totalorder %s230, %s231
      %p240 = scmp.eq.s32.totalorder %s30, 0
      %p241 = por %p239, %p240
      %p242 = scmp.ne.s32.totalorder %s230, %s231
      %p243 = scmp.eq.s32.totalorder %s31, 1
      %p244 = por %p242, %p243
      %p246 = scmp.ne.s32.totalorder %s231, %s245
      %p247 = scmp.eq.s32.totalorder %s31, 0
      %p248 = por %p246, %p247
      %s250 = sadd.s32 %s249, 1
      %p253 = scmp.eq.s32.totalorder %s25, 1
      %p254 = scmp.ne.s32.totalorder %s249, %s251
      %p255 = scmp.eq.s32.totalorder %s25, 0
      %p256 = por %p254, %p255
      %p257 = scmp.ne.s32.totalorder %s249, %s251
      %p258 = scmp.eq.s32.totalorder %s30, 1
      %p259 = por %p257, %p258
      %p260 = scmp.ne.s32.totalorder %s251, %s252
      %p261 = scmp.eq.s32.totalorder %s30, 0
      %p262 = por %p260, %p261
      %p263 = scmp.ne.s32.totalorder %s251, %s252
      %p264 = scmp.eq.s32.totalorder %s31, 1
      %p265 = por %p263, %p264
      %p267 = scmp.ne.s32.totalorder %s252, %s266
      %p268 = scmp.eq.s32.totalorder %s31, 0
      %p269 = por %p267, %p268
      %s271 = sadd.s32 %s270, 1
      %p274 = scmp.eq.s32.totalorder %s25, 1
      %p275 = scmp.ne.s32.totalorder %s270, %s272
      %p276 = scmp.eq.s32.totalorder %s25, 0
      %p277 = por %p275, %p276
      %p278 = scmp.ne.s32.totalorder %s270, %s272
      %p279 = scmp.eq.s32.totalorder %s30, 1
      %p280 = por %p278, %p279
      %p281 = scmp.ne.s32.totalorder %s272, %s273
      %p282 = scmp.eq.s32.totalorder %s30, 0
      %p283 = por %p281, %p282
      %p284 = scmp.ne.s32.totalorder %s272, %s273
      %p285 = scmp.eq.s32.totalorder %s31, 1
      %p286 = por %p284, %p285
      %p288 = scmp.ne.s32.totalorder %s273, %s287
      %p289 = scmp.eq.s32.totalorder %s31, 0
      %p290 = por %p288, %p289
      %s292 = sadd.s32 %s291, 1
      %p295 = scmp.eq.s32.totalorder %s25, 1
      %p296 = scmp.ne.s32.totalorder %s291, %s293
      %p297 = scmp.eq.s32.totalorder %s25, 0
      %p298 = por %p296, %p297
      %p299 = scmp.ne.s32.totalorder %s291, %s293
      %p300 = scmp.eq.s32.totalorder %s30, 1
      %p301 = por %p299, %p300
      %p302 = scmp.ne.s32.totalorder %s293, %s294
      %p303 = scmp.eq.s32.totalorder %s30, 0
      %p304 = por %p302, %p303
      %p305 = scmp.ne.s32.totalorder %s293, %s294
      %p306 = scmp.eq.s32.totalorder %s31, 1
      %p307 = por %p305, %p306
      %p309 = scmp.ne.s32.totalorder %s294, %s308
      %p310 = scmp.eq.s32.totalorder %s31, 0
      %p311 = por %p309, %p310
      %s313 = sadd.s32 %s312, 1
      %p316 = scmp.eq.s32.totalorder %s25, 1
      %p317 = scmp.ne.s32.totalorder %s312, %s314
      %p318 = scmp.eq.s32.totalorder %s25, 0
      %p319 = por %p317, %p318
      %p320 = scmp.ne.s32.totalorder %s312, %s314
      %p321 = scmp.eq.s32.totalorder %s30, 1
      %p322 = por %p320, %p321
      %p323 = scmp.ne.s32.totalorder %s314, %s315
      %p324 = scmp.eq.s32.totalorder %s30, 0
      %p325 = por %p323, %p324
      %p326 = scmp.ne.s32.totalorder %s314, %s315
      %p327 = scmp.eq.s32.totalorder %s31, 1
      %p328 = por %p326, %p327
      %p330 = scmp.ne.s32.totalorder %s315, %s329
      %p331 = scmp.eq.s32.totalorder %s31, 0
      %p332 = por %p330, %p331
      %s334 = sadd.s32 %s333, 1
      %p337 = scmp.eq.s32.totalorder %s25, 1
      %p338 = scmp.ne.s32.totalorder %s333, %s335
      %p339 = scmp.eq.s32.totalorder %s25, 0
      %p340 = por %p338, %p339
      %p341 = scmp.ne.s32.totalorder %s333, %s335
      %p342 = scmp.eq.s32.totalorder %s30, 1
      %p343 = por %p341, %p342
      %p344 = scmp.ne.s32.totalorder %s335, %s336
      %p345 = scmp.eq.s32.totalorder %s30, 0
      %p346 = por %p344, %p345
      %p347 = scmp.ne.s32.totalorder %s335, %s336
      %p348 = scmp.eq.s32.totalorder %s31, 1
      %p349 = por %p347, %p348
      %p351 = scmp.ne.s32.totalorder %s336, %s350
      %p352 = scmp.eq.s32.totalorder %s31, 0
      %p353 = por %p351, %p352
      %s355 = sadd.s32 %s354, 1
      %p358 = scmp.eq.s32.totalorder %s25, 1
      %p359 = scmp.ne.s32.totalorder %s354, %s356
      %p360 = scmp.eq.s32.totalorder %s25, 0
      %p361 = por %p359, %p360
      %p362 = scmp.ne.s32.totalorder %s354, %s356
      %p363 = scmp.eq.s32.totalorder %s30, 1
      %p364 = por %p362, %p363
      %p365 = scmp.ne.s32.totalorder %s356, %s357
      %p366 = scmp.eq.s32.totalorder %s30, 0
      %p367 = por %p365, %p366
      %p368 = scmp.ne.s32.totalorder %s356, %s357
      %p369 = scmp.eq.s32.totalorder %s31, 1
      %p370 = por %p368, %p369
      %p372 = scmp.ne.s32.totalorder %s357, %s371
      %p373 = scmp.eq.s32.totalorder %s31, 0
      %p374 = por %p372, %p373
      %s376 = sadd.s32 %s375, 1
      %p379 = scmp.eq.s32.totalorder %s25, 1
      %p380 = scmp.ne.s32.totalorder %s375, %s377
      %p381 = scmp.eq.s32.totalorder %s25, 0
      %p382 = por %p380, %p381
      %p383 = scmp.ne.s32.totalorder %s375, %s377
      %p384 = scmp.eq.s32.totalorder %s30, 1
      %p385 = por %p383, %p384
      %p386 = scmp.ne.s32.totalorder %s377, %s378
      %p387 = scmp.eq.s32.totalorder %s30, 0
      %p388 = por %p386, %p387
      %p389 = scmp.ne.s32.totalorder %s377, %s378
      %p390 = scmp.eq.s32.totalorder %s31, 1
      %p391 = por %p389, %p390
      %p393 = scmp.ne.s32.totalorder %s378, %s392
      %p394 = scmp.eq.s32.totalorder %s31, 0
      %p395 = por %p393, %p394
      %s397 = sadd.s32 %s396, 1
      %p400 = scmp.eq.s32.totalorder %s25, 1
      %p401 = scmp.ne.s32.totalorder %s396, %s398
      %p402 = scmp.eq.s32.totalorder %s25, 0
      %p403 = por %p401, %p402
      %p404 = scmp.ne.s32.totalorder %s396, %s398
      %p405 = scmp.eq.s32.totalorder %s30, 1
      %p406 = por %p404, %p405
      %p407 = scmp.ne.s32.totalorder %s398, %s399
      %p408 = scmp.eq.s32.totalorder %s30, 0
      %p409 = por %p407, %p408
      %p410 = scmp.ne.s32.totalorder %s398, %s399
      %p411 = scmp.eq.s32.totalorder %s31, 1
      %p412 = por %p410, %p411
      %p414 = scmp.ne.s32.totalorder %s399, %s413
      %p415 = scmp.eq.s32.totalorder %s31, 0
      %p416 = por %p414, %p415
      %s417 = ssub.s32 %s32, %s44
      %s418 = ssub.s32 %s33, %s40
      %s419 = sor.u32 %s417, %s418
      %p420 = scmp.eq.s32.totalorder %s419, 0
      %s422 = sadd.s32 %s421, 1
      %s423 = scalar_select %p420, %s421, %s422
      %p426 = pneg %p420
      %p427 = scmp.eq.s32.totalorder %s25, 1
      %p428 = por %p426, %p427
      %p429 = scmp.ne.s32.totalorder %s421, %s424
      %p430 = scmp.eq.s32.totalorder %s25, 0
      %p431 = por %p429, %p430
      %p432 = scmp.ne.s32.totalorder %s421, %s424
      %p433 = scmp.eq.s32.totalorder %s30, 1
      %p434 = por %p432, %p433
      %p435 = scmp.ne.s32.totalorder %s424, %s425
      %p436 = scmp.eq.s32.totalorder %s30, 0
      %p437 = por %p435, %p436
      %p438 = scmp.ne.s32.totalorder %s424, %s425
      %p439 = scmp.eq.s32.totalorder %s31, 1
      %p440 = por %p438, %p439
      %p442 = scmp.ne.s32.totalorder %s425, %s441
      %p443 = scmp.eq.s32.totalorder %s31, 0
      %p444 = por %p442, %p443
      %p445 = scmp.le.s32.totalorder 1, %s25
      %p446 = scmp.lt.s32.totalorder %s25, 3
      %p447 = pnand %p445, %p446
      %p448 = pneg %p447
      // Predicated region
      $region9: #{transformer_encoder.2} parent=5 // pred_check
        _
      $region10: #{transformer_encoder.2} parent=5 // pred_check_branch
        %450 = sbr.rel (%p447) target = $region12
      $region11: #{transformer_encoder.2} parent=5 // pred_region
        %s451 = ssub.s32 %s25, 1
        // Predicated region
        $region13: #{transformer_encoder.2} parent=11 // pred_check
          %p452 = pneg %p115
        $region14: #{transformer_encoder.2} parent=11 // pred_check_branch
          %454 = sbr.rel (%p452) target = $region16
        $region15: #{transformer_encoder.2} parent=11 // pred_region
          %p455 = scmp.lt.s32.totalorder %s35, 0
          %s456 = scalar_select %p455, %s35, 0
          %s457 = smul.addr %s456, 8
          %s458 = scalar_lea.vmem %s2, %s457
        $region16: #{transformer_encoder.2} parent=11 // pred_fallthru
          _
        // Predicated region
        $region17: #{transformer_encoder.2} parent=11 // pred_check
          %p459 = pneg %p136
        $region18: #{transformer_encoder.2} parent=11 // pred_check_branch
          %461 = sbr.rel (%p459) target = $region20
        $region19: #{transformer_encoder.2} parent=11 // pred_region
          _
        $region20: #{transformer_encoder.2} parent=11 // pred_fallthru
          _
        // Predicated region
        $region21: #{transformer_encoder.2} parent=11 // pred_check
          %p462 = pneg %p157
        $region22: #{transformer_encoder.2} parent=11 // pred_check_branch
          %464 = sbr.rel (%p462) target = $region24
        $region23: #{transformer_encoder.2} parent=11 // pred_region
          _
        $region24: #{transformer_encoder.2} parent=11 // pred_fallthru
          _
        // Predicated region
        $region25: #{transformer_encoder.2} parent=11 // pred_check
          %p465 = pneg %p178
        $region26: #{transformer_encoder.2} parent=11 // pred_check_branch
          %467 = sbr.rel (%p465) target = $region28
        $region27: #{transformer_encoder.2} parent=11 // pred_region
          _
        $region28: #{transformer_encoder.2} parent=11 // pred_fallthru
          _
        // Predicated region
        $region29: #{transformer_encoder.2} parent=11 // pred_check
          %p468 = pneg %p199
        $region30: #{transformer_encoder.2} parent=11 // pred_check_branch
          %470 = sbr.rel (%p468) target = $region32
        $region31: #{transformer_encoder.2} parent=11 // pred_region
          _
        $region32: #{transformer_encoder.2} parent=11 // pred_fallthru
          _
        // Predicated region
        $region33: #{transformer_encoder.2} parent=11 // pred_check
          %p471 = pneg %p220
        $region34: #{transformer_encoder.2} parent=11 // pred_check_branch
          %473 = sbr.rel (%p471) target = $region36
        $region35: #{transformer_encoder.2} parent=11 // pred_region
          _
        $region36: #{transformer_encoder.2} parent=11 // pred_fallthru
          _
        // Predicated region
        $region37: #{transformer_encoder.2} parent=11 // pred_check
          %p474 = pneg %p241
        $region38: #{transformer_encoder.2} parent=11 // pred_check_branch
          %476 = sbr.rel (%p474) target = $region40
        $region39: #{transformer_encoder.2} parent=11 // pred_region
          _
        $region40: #{transformer_encoder.2} parent=11 // pred_fallthru
          _
        // Predicated region
        $region41: #{transformer_encoder.2} parent=11 // pred_check
          %p477 = pneg %p262
        $region42: #{transformer_encoder.2} parent=11 // pred_check_branch
          %479 = sbr.rel (%p477) target = $region44
        $region43: #{transformer_encoder.2} parent=11 // pred_region
          _
        $region44: #{transformer_encoder.2} parent=11 // pred_fallthru
          _
        // Predicated region
        $region45: #{transformer_encoder.2} parent=11 // pred_check
          %p480 = pneg %p283
        $region46: #{transformer_encoder.2} parent=11 // pred_check_branch
          %482 = sbr.rel (%p480) target = $region48
        $region47: #{transformer_encoder.2} parent=11 // pred_region
          _
        $region48: #{transformer_encoder.2} parent=11 // pred_fallthru
          _
        // Predicated region
        $region49: #{transformer_encoder.2} parent=11 // pred_check
          %p483 = pneg %p304
        $region50: #{transformer_encoder.2} parent=11 // pred_check_branch
          %485 = sbr.rel (%p483) target = $region52
        $region51: #{transformer_encoder.2} parent=11 // pred_region
          _
        $region52: #{transformer_encoder.2} parent=11 // pred_fallthru
          _
        // Predicated region
        $region53: #{transformer_encoder.2} parent=11 // pred_check
          %p486 = pneg %p325
        $region54: #{transformer_encoder.2} parent=11 // pred_check_branch
          %488 = sbr.rel (%p486) target = $region56
        $region55: #{transformer_encoder.2} parent=11 // pred_region
          %s490 = ssub.s32 16, 16
          %491 = vsyncadd [#allocation5], %s490
          %s493 = sshll.u32 [#allocation4], 4
          %s494 = int_to_ptr.vmem [resolvable:$true] %s493
          %496 = dma.hbm_to_vmem [thread:$0]  %s12, 16, %s494, [#allocation5]
        $region56: #{transformer_encoder.2} parent=11 // pred_fallthru
          _
        // Predicated region
        $region57: #{transformer_encoder.2} parent=11 // pred_check
          %p497 = pneg %p346
        $region58: #{transformer_encoder.2} parent=11 // pred_check_branch
          %499 = sbr.rel (%p497) target = $region60
        $region59: #{transformer_encoder.2} parent=11 // pred_region
          _
        $region60: #{transformer_encoder.2} parent=11 // pred_fallthru
          _
        // Predicated region
        $region61: #{transformer_encoder.2} parent=11 // pred_check
          %p500 = pneg %p367
        $region62: #{transformer_encoder.2} parent=11 // pred_check_branch
          %502 = sbr.rel (%p500) target = $region64
        $region63: #{transformer_encoder.2} parent=11 // pred_region
          %s504 = ssub.s32 16, 16
          %505 = vsyncadd [#allocation7], %s504
          %s507 = sshll.u32 [#allocation6], 4
          %s508 = int_to_ptr.vmem [resolvable:$true] %s507
          %510 = dma.hbm_to_vmem [thread:$0]  %s14, 16, %s508, [#allocation7]
        $region64: #{transformer_encoder.2} parent=11 // pred_fallthru
          _
        // Predicated region
        $region65: #{transformer_encoder.2} parent=11 // pred_check
          %p511 = pneg %p388
        $region66: #{transformer_encoder.2} parent=11 // pred_check_branch
          %513 = sbr.rel (%p511) target = $region68
        $region67: #{transformer_encoder.2} parent=11 // pred_region
          _
        $region68: #{transformer_encoder.2} parent=11 // pred_fallthru
          _
        // Predicated region
        $region69: #{transformer_encoder.2} parent=11 // pred_check
          %p514 = pneg %p409
        $region70: #{transformer_encoder.2} parent=11 // pred_check_branch
          %516 = sbr.rel (%p514) target = $region72
        $region71: #{transformer_encoder.2} parent=11 // pred_region
          _
        $region72: #{transformer_encoder.2} parent=11 // pred_fallthru
          _
      $region12: #{transformer_encoder.2} parent=5 // pred_fallthru
        _
      %p517 = scmp.lt.s32.totalorder %s25, 2
      // Predicated region
      $region73: #{transformer_encoder.2} parent=5 // pred_check
        %p518 = pneg %p517
      $region74: #{transformer_encoder.2} parent=5 // pred_check_branch
        %520 = sbr.rel (%p518) target = $region76
      $region75: #{transformer_encoder.2} parent=5 // pred_region
        // Predicated region
        $region77: #{transformer_encoder.2} parent=75 // pred_check
          %p521 = pneg %p57
        $region78: #{transformer_encoder.2} parent=75 // pred_check_branch
          %523 = sbr.rel (%p521) target = $region80
        $region79: #{transformer_encoder.2} parent=75 // pred_region
          %p524 = scmp.lt.s32.totalorder %s32, 1
          %s525 = scalar_select %p524, %s32, 1
          %s526 = smul.addr %s525, 4
          %s527 = scalar_lea.vmem %s0, %s526
        $region80: #{transformer_encoder.2} parent=75 // pred_fallthru
          _
        // Predicated region
        $region81: #{transformer_encoder.2} parent=75 // pred_check
          %p528 = pneg %p83
        $region82: #{transformer_encoder.2} parent=75 // pred_check_branch
          %530 = sbr.rel (%p528) target = $region84
        $region83: #{transformer_encoder.2} parent=75 // pred_region
          %p531 = scmp.lt.s32.totalorder %s32, 1
          %s532 = scalar_select %p531, %s32, 1
          %s533 = scalar_lea.vmem %s1, %s532
        $region84: #{transformer_encoder.2} parent=75 // pred_fallthru
          _
      $region76: #{transformer_encoder.2} parent=5 // pred_fallthru
        _
      %p534 = scmp.le.s32.totalorder 1, %s25
      %p535 = scmp.lt.s32.totalorder %s25, 3
      %p536 = pnand %p534, %p535
      %p537 = pneg %p536
      // Predicated region
      $region85: #{transformer_encoder.2} parent=5 // pred_check
        _
      $region86: #{transformer_encoder.2} parent=5 // pred_check_branch
        %539 = sbr.rel (%p536) target = $region88
      $region87: #{transformer_encoder.2} parent=5 // pred_region
        %s540 = ssub.s32 %s25, 1
        // Predicated region
        $region89: #{transformer_encoder.2} parent=87 // pred_check
          %p541 = pneg %p325
        $region90: #{transformer_encoder.2} parent=87 // pred_check_branch
          %543 = sbr.rel (%p541) target = $region92
        $region91: #{transformer_encoder.2} parent=87 // pred_region
          %544 = dma.done [#allocation5], 16
        $region92: #{transformer_encoder.2} parent=87 // pred_fallthru
          _
        // Predicated region
        $region93: #{transformer_encoder.2} parent=87 // pred_check
          %p545 = pneg %p367
        $region94: #{transformer_encoder.2} parent=87 // pred_check_branch
          %547 = sbr.rel (%p545) target = $region96
        $region95: #{transformer_encoder.2} parent=87 // pred_region
          %548 = dma.done [#allocation7], 16
        $region96: #{transformer_encoder.2} parent=87 // pred_fallthru
          _
        %p549 = scmp.lt.s32.totalorder %s34, 1
        %s550 = scalar_select %p549, %s34, 1
        %s551 = smul.addr %s550, 4
        %s552 = scalar_lea.vmem %s0, %s551
        %p553 = pneg %p63
        %p554 = pneg %p60
        %p555 = scmp.lt.s32.totalorder %s34, 1
        %s556 = scalar_select %p555, %s34, 1
        %s557 = scalar_lea.vmem %s1, %s556
        %p558 = pneg %p89
        %p559 = pneg %p86
        %p560 = scmp.lt.s32.totalorder %s35, 0
        %s561 = scalar_select %p560, %s35, 0
        %s562 = smul.addr %s561, 8
        %s563 = scalar_lea.vmem %s2, %s562
        %p564 = pneg %p115
        %p565 = pneg %p112
        %p566 = pneg %p136
        %p567 = pneg %p133
        %p568 = pneg %p157
        %p569 = pneg %p154
        %p570 = pneg %p178
        %p571 = pneg %p175
        %p572 = pneg %p199
        %p573 = pneg %p196
        %p574 = pneg %p220
        %p575 = pneg %p217
        %p576 = pneg %p241
        %p577 = pneg %p238
        %p578 = pneg %p262
        %p579 = pneg %p259
        %p580 = pneg %p283
        %p581 = pneg %p280
        %p582 = pneg %p304
        %p583 = pneg %p301
        %p584 = pneg %p325
        %p585 = pneg %p322
        %p586 = pneg %p346
        %p587 = pneg %p343
        %p588 = pneg %p367
        %p589 = pneg %p364
        %p590 = pneg %p388
        %p591 = pneg %p385
        %p592 = pneg %p409
        %p593 = pneg %p406
        %p594 = pneg %p437
        %p595 = pneg %p434
        %p596 = scmp.lt.s32.totalorder %s34, 1
        %s597 = scalar_select %p596, %s34, 1
        %p598 = scmp.lt.s32.totalorder %s35, 0
        %s599 = scalar_select %p598, %s35, 0
        %s600 = sadd.s32 %s599, %s597
        %s601 = smul.addr %s600, 4
        %s602 = scalar_lea.vmem %s17, %s601
        %p603 = scmp.lt.s32.totalorder %s34, 1
        %s604 = scalar_select %p603, %s34, 1
        %s605 = smul.addr %s604, 4
        %s606 = scalar_lea.vmem %s0, %s605
        %p607 = scmp.lt.s32.totalorder %s34, 1
        %s608 = scalar_select %p607, %s34, 1
        %s609 = scalar_lea.vmem %s1, %s608
        %p610 = scmp.lt.s32.totalorder %s35, 0
        %s611 = scalar_select %p610, %s35, 0
        %s612 = smul.addr %s611, 8
        %s613 = scalar_lea.vmem %s2, %s612
        %p614 = scmp.lt.s32.totalorder %s34, 1
        %s615 = scalar_select %p614, %s34, 1
        %p616 = scmp.lt.s32.totalorder %s35, 0
        %s617 = scalar_select %p616, %s35, 0
        %s618 = sadd.s32 %s617, %s615
        %s619 = smul.addr %s618, 4
        %s620 = scalar_lea.vmem %s17, %s619
        %p622 = scmp.eq.s32.totalorder %s35, 0
        // Predicated region
        $region97: #{transformer_encoder.2} parent=87 // pred_check
          %p623 = pneg %p622
        $region98: #{transformer_encoder.2} parent=87 // pred_check_branch
          %625 = sbr.rel (%p623) target = $region100
        $region99: #{transformer_encoder.2} parent=87 // pred_region
          %v626 = vld [vmem:[%s606] sm:$0xf]
          %v627 = vld [vmem:[%s5] sm:$0xf]
          %v628 = vld [vmem:[%s5 + $0x4] sm:$0xf]
          %v629 = vld [vmem:[%s5 + $0x8] sm:$0xf]
          %v630 = vld [vmem:[%s5 + $0xc] sm:$0xf]
          %v631 = vld [vmem:[%s6] sm:$0x1]
          %v633 = vlaneseq
          %v634 = vshrl.u32 %v633, 7
          %v635 = vsub.s32 0, %v634
          %v636 = vrot.slane %v631, %v635
          %v642 = vunpack.c.l.b16 %v627
          %v643 = vunpack.c.l.b16 %v628
          %v644 = vunpack.c.l.b16 %v629
          %v645 = vunpack.c.l.b16 %v630
          %v646 = vpack.c.b16 %v643, %v642
          %v647 = vpack.c.b16 %v645, %v644
          %vm650 = vcmask 261120
          %v652 = vsel %vm650, %v626, 0
          %654 = vmatprep.subr.bf16.mxu0 0
          %655 = vmatpush1.bf16.msra.mxu0 %v646
          %656 = vmatprep.subr.bf16.mxu0 0
          %657 = vmatpush1.bf16.msra.mxu0 %v647
          %658 = vmatprep.subr.bf16.mxu0 0
          %659 = vmatpush1.bf16.msra.mxu0 0
          %660 = vmatprep.subr.bf16.mxu0 0
          %661 = vmatpush1.bf16.msra.mxu0 0
          %662 = vmatprep.subr.bf16.mxu0 0
          %663 = vmatpush1.bf16.msra.mxu0 0
          %664 = vmatprep.subr.bf16.mxu0 0
          %665 = vmatpush1.bf16.msra.mxu0 0
          %666 = vmatprep.subr.bf16.mxu0 0
          %667 = vmatpush1.bf16.msra.mxu0 0
          %668 = vmatprep.subr.bf16.mxu0 0
          %669 = vmatpush1.bf16.msra.mxu0 0
          %670 = vmatprep.subr.bf16.mxu0 0
          %671 = vmatpush1.bf16.msra.mxu0 0
          %672 = vmatprep.subr.bf16.mxu0 0
          %673 = vmatpush1.bf16.msra.mxu0 0
          %674 = vmatprep.subr.bf16.mxu0 0
          %675 = vmatpush1.bf16.msra.mxu0 0
          %676 = vmatprep.subr.bf16.mxu0 0
          %677 = vmatpush1.bf16.msra.mxu0 0
          %678 = vmatprep.subr.bf16.mxu0 0
          %679 = vmatpush1.bf16.msra.mxu0 0
          %680 = vmatprep.subr.bf16.mxu0 0
          %681 = vmatpush1.bf16.msra.mxu0 0
          %682 = vmatprep.subr.bf16.mxu0 0
          %683 = vmatpush1.bf16.msra.mxu0 0
          %684 = vmatprep.subr.bf16.mxu0 0
          %685 = vmatpush1.bf16.msra.mxu0 0
          %686 = vmatprep.mubr.bf16.mxu0 0
          %687 = vmatmul.mubr.bf16.gmra.mrb[0].mxu0 %v652
          %v688 = vpop.f32.mrb[0].mxu0
          %v689 = vadd.f32 %v636, %v688
          %v690 = vpop.f32.mrb[0].mxu0
          %v691 = vpop.f32.mrb[0].mxu0
          %v692 = vpop.f32.mrb[0].mxu0
          %693 = vdwg.mxu0
          %v694 = vld [vmem:[%s7] sm:$0xf]
          %v695 = vld [vmem:[%s7 + $0x4] sm:$0xf]
          %v696 = vld [vmem:[%s7 + $0x8] sm:$0xf]
          %v697 = vld [vmem:[%s7 + $0xc] sm:$0xf]
          %v698 = vld [vmem:[%s8] sm:$0x1]
          %v700 = vlaneseq
          %v701 = vshrl.u32 %v700, 7
          %v702 = vsub.s32 0, %v701
          %v703 = vrot.slane %v698, %v702
          %v709 = vunpack.c.l.b16 %v694
          %v710 = vunpack.c.l.b16 %v695
          %v711 = vunpack.c.l.b16 %v696
          %v712 = vunpack.c.l.b16 %v697
          %v713 = vpack.c.b16 %v710, %v709
          %v714 = vpack.c.b16 %v712, %v711
          %717 = vmatprep.subr.bf16.mxu0 0
          %718 = vmatpush1.bf16.msra.mxu0 %v713
          %719 = vmatprep.subr.bf16.mxu0 0
          %720 = vmatpush1.bf16.msra.mxu0 %v714
          %721 = vmatprep.subr.bf16.mxu0 0
          %722 = vmatpush1.bf16.msra.mxu0 0
          %723 = vmatprep.subr.bf16.mxu0 0
          %724 = vmatpush1.bf16.msra.mxu0 0
          %725 = vmatprep.subr.bf16.mxu0 0
          %726 = vmatpush1.bf16.msra.mxu0 0
          %727 = vmatprep.subr.bf16.mxu0 0
          %728 = vmatpush1.bf16.msra.mxu0 0
          %729 = vmatprep.subr.bf16.mxu0 0
          %730 = vmatpush1.bf16.msra.mxu0 0
          %731 = vmatprep.subr.bf16.mxu0 0
          %732 = vmatpush1.bf16.msra.mxu0 0
          %733 = vmatprep.subr.bf16.mxu0 0
          %734 = vmatpush1.bf16.msra.mxu0 0
          %735 = vmatprep.subr.bf16.mxu0 0
          %736 = vmatpush1.bf16.msra.mxu0 0
          %737 = vmatprep.subr.bf16.mxu0 0
          %738 = vmatpush1.bf16.msra.mxu0 0
          %739 = vmatprep.subr.bf16.mxu0 0
          %740 = vmatpush1.bf16.msra.mxu0 0
          %741 = vmatprep.subr.bf16.mxu0 0
          %742 = vmatpush1.bf16.msra.mxu0 0
          %743 = vmatprep.subr.bf16.mxu0 0
          %744 = vmatpush1.bf16.msra.mxu0 0
          %745 = vmatprep.subr.bf16.mxu0 0
          %746 = vmatpush1.bf16.msra.mxu0 0
          %747 = vmatprep.subr.bf16.mxu0 0
          %748 = vmatpush1.bf16.msra.mxu0 0
          %749 = vmatprep.mubr.bf16.mxu0 0
          %750 = vmatmul.mubr.bf16.gmra.mrb[0].mxu0 %v652
          %v751 = vpop.f32.mrb[0].mxu0
          %v752 = vadd.f32 %v703, %v751
          %v753 = vpop.f32.mrb[0].mxu0
          %v754 = vpop.f32.mrb[0].mxu0
          %v755 = vpop.f32.mrb[0].mxu0
          %756 = vdwg.mxu0
          %757 = vxpose.xlu0.b32.start [1/16] %v689, 128
          %758 = vxpose.xlu0.b32.cont [2/16] 0.0, 128
          %759 = vxpose.xlu0.b32.cont [3/16] 0.0, 128
          %760 = vxpose.xlu0.b32.cont [4/16] 0.0, 128
          %761 = vxpose.xlu0.b32.cont [5/16] 0.0, 128
          %762 = vxpose.xlu0.b32.cont [6/16] 0.0, 128
          %763 = vxpose.xlu0.b32.cont [7/16] 0.0, 128
          %764 = vxpose.xlu0.b32.cont [8/16] 0.0, 128
          %765 = vxpose.xlu0.b32.cont [9/16] 0.0, 128
          %766 = vxpose.xlu0.b32.cont [10/16] 0.0, 128
          %767 = vxpose.xlu0.b32.cont [11/16] 0.0, 128
          %768 = vxpose.xlu0.b32.cont [12/16] 0.0, 128
          %769 = vxpose.xlu0.b32.cont [13/16] 0.0, 128
          %770 = vxpose.xlu0.b32.cont [14/16] 0.0, 128
          %771 = vxpose.xlu0.b32.cont [15/16] 0.0, 128
          %772 = vxpose.xlu0.b32.end [16/16] 0.0, 128
          %v773 = vpop.trf.xlu0
          %v774 = vpop.trf.xlu0
          %v775 = vpop.trf.xlu0
          %v776 = vpop.trf.xlu0
          %v777 = vpop.trf.xlu0
          %v778 = vpop.trf.xlu0
          %v779 = vpop.trf.xlu0
          %v780 = vpop.trf.xlu0
          %v781 = vpop.trf.xlu0
          %v782 = vpop.trf.xlu0
          %v783 = vpop.trf.xlu0
          %v784 = vpop.trf.xlu0
          %v785 = vpop.trf.xlu0
          %v786 = vpop.trf.xlu0
          %v787 = vpop.trf.xlu0
          %v788 = vpop.trf.xlu0
          %790 = vrot.lane.b32.xlu0 %v689, 120
          %v791 = vpop.permute.xlu0 %790
          %793 = vxpose.xlu0.b32.start [1/16] %v791, 128
          %794 = vxpose.xlu0.b32.cont [2/16] 0.0, 128
          %795 = vxpose.xlu0.b32.cont [3/16] 0.0, 128
          %796 = vxpose.xlu0.b32.cont [4/16] 0.0, 128
          %797 = vxpose.xlu0.b32.cont [5/16] 0.0, 128
          %798 = vxpose.xlu0.b32.cont [6/16] 0.0, 128
          %799 = vxpose.xlu0.b32.cont [7/16] 0.0, 128
          %800 = vxpose.xlu0.b32.cont [8/16] 0.0, 128
          %801 = vxpose.xlu0.b32.cont [9/16] 0.0, 128
          %802 = vxpose.xlu0.b32.cont [10/16] 0.0, 128
          %803 = vxpose.xlu0.b32.cont [11/16] 0.0, 128
          %804 = vxpose.xlu0.b32.cont [12/16] 0.0, 128
          %805 = vxpose.xlu0.b32.cont [13/16] 0.0, 128
          %806 = vxpose.xlu0.b32.cont [14/16] 0.0, 128
          %807 = vxpose.xlu0.b32.cont [15/16] 0.0, 128
          %808 = vxpose.xlu0.b32.end [16/16] 0.0, 128
          %v809 = vpop.trf.xlu0
          %v810 = vpop.trf.xlu0
          %v811 = vpop.trf.xlu0
          %v812 = vpop.trf.xlu0
          %v813 = vpop.trf.xlu0
          %v814 = vpop.trf.xlu0
          %v815 = vpop.trf.xlu0
          %v816 = vpop.trf.xlu0
          %v817 = vpop.trf.xlu0
          %v818 = vpop.trf.xlu0
          %v819 = vpop.trf.xlu0
          %v820 = vpop.trf.xlu0
          %v821 = vpop.trf.xlu0
          %v822 = vpop.trf.xlu0
          %v823 = vpop.trf.xlu0
          %v824 = vpop.trf.xlu0
          %825 = vrot.lane.b32.xlu0 %v689, 112
          %v826 = vpop.permute.xlu0 %825
          %828 = vxpose.xlu0.b32.start [1/16] %v826, 128
          %829 = vxpose.xlu0.b32.cont [2/16] 0.0, 128
          %830 = vxpose.xlu0.b32.cont [3/16] 0.0, 128
          %831 = vxpose.xlu0.b32.cont [4/16] 0.0, 128
          %832 = vxpose.xlu0.b32.cont [5/16] 0.0, 128
          %833 = vxpose.xlu0.b32.cont [6/16] 0.0, 128
          %834 = vxpose.xlu0.b32.cont [7/16] 0.0, 128
          %835 = vxpose.xlu0.b32.cont [8/16] 0.0, 128
          %836 = vxpose.xlu0.b32.cont [9/16] 0.0, 128
          %837 = vxpose.xlu0.b32.cont [10/16] 0.0, 128
          %838 = vxpose.xlu0.b32.cont [11/16] 0.0, 128
          %839 = vxpose.xlu0.b32.cont [12/16] 0.0, 128
          %840 = vxpose.xlu0.b32.cont [13/16] 0.0, 128
          %841 = vxpose.xlu0.b32.cont [14/16] 0.0, 128
          %842 = vxpose.xlu0.b32.cont [15/16] 0.0, 128
          %843 = vxpose.xlu0.b32.end [16/16] 0.0, 128
          %v844 = vpop.trf.xlu0
          %v845 = vpop.trf.xlu0
          %v846 = vpop.trf.xlu0
          %v847 = vpop.trf.xlu0
          %v848 = vpop.trf.xlu0
          %v849 = vpop.trf.xlu0
          %v850 = vpop.trf.xlu0
          %v851 = vpop.trf.xlu0
          %v852 = vpop.trf.xlu0
          %v853 = vpop.trf.xlu0
          %v854 = vpop.trf.xlu0
          %v855 = vpop.trf.xlu0
          %v856 = vpop.trf.xlu0
          %v857 = vpop.trf.xlu0
          %v858 = vpop.trf.xlu0
          %v859 = vpop.trf.xlu0
          %860 = vrot.lane.b32.xlu0 %v689, 104
          %v861 = vpop.permute.xlu0 %860
          %863 = vxpose.xlu0.b32.start [1/16] %v861, 128
          %864 = vxpose.xlu0.b32.cont [2/16] 0.0, 128
          %865 = vxpose.xlu0.b32.cont [3/16] 0.0, 128
          %866 = vxpose.xlu0.b32.cont [4/16] 0.0, 128
          %867 = vxpose.xlu0.b32.cont [5/16] 0.0, 128
          %868 = vxpose.xlu0.b32.cont [6/16] 0.0, 128
          %869 = vxpose.xlu0.b32.cont [7/16] 0.0, 128
          %870 = vxpose.xlu0.b32.cont [8/16] 0.0, 128
          %871 = vxpose.xlu0.b32.cont [9/16] 0.0, 128
          %872 = vxpose.xlu0.b32.cont [10/16] 0.0, 128
          %873 = vxpose.xlu0.b32.cont [11/16] 0.0, 128
          %874 = vxpose.xlu0.b32.cont [12/16] 0.0, 128
          %875 = vxpose.xlu0.b32.cont [13/16] 0.0, 128
          %876 = vxpose.xlu0.b32.cont [14/16] 0.0, 128
          %877 = vxpose.xlu0.b32.cont [15/16] 0.0, 128
          %878 = vxpose.xlu0.b32.end [16/16] 0.0, 128
          %v879 = vpop.trf.xlu0
          %v880 = vpop.trf.xlu0
          %v881 = vpop.trf.xlu0
          %v882 = vpop.trf.xlu0
          %v883 = vpop.trf.xlu0
          %v884 = vpop.trf.xlu0
          %v885 = vpop.trf.xlu0
          %v886 = vpop.trf.xlu0
          %v887 = vpop.trf.xlu0
          %v888 = vpop.trf.xlu0
          %v889 = vpop.trf.xlu0
          %v890 = vpop.trf.xlu0
          %v891 = vpop.trf.xlu0
          %v892 = vpop.trf.xlu0
          %v893 = vpop.trf.xlu0
          %v894 = vpop.trf.xlu0
          %v895 = vpack.c.bf16 %v773, %v773
          %v896 = vpack.c.bf16 %v809, %v809
          %v897 = vpack.c.bf16 %v844, %v844
          %v898 = vpack.c.bf16 %v879, %v879
          %vm899 = vcmask 60416
          %900 = vst.msk [vmem:[#allocation2] sm:$0xf] %vm899, %v895
          %901 = vst.msk [vmem:[#allocation2 + $0x4] sm:$0xf] %vm899, %v896
          %902 = vst.msk [vmem:[#allocation2 + $0x8] sm:$0xf] %vm899, %v897
          %903 = vst.msk [vmem:[#allocation2 + $0xc] sm:$0xf] %vm899, %v898
          %905 = vrot.lane.b32.xlu0 %v752, 120
          %v906 = vpop.permute.xlu0 %905
          %908 = vrot.lane.b32.xlu0 %v752, 112
          %v909 = vpop.permute.xlu0 %908
          %911 = vrot.lane.b32.xlu0 %v752, 104
          %v912 = vpop.permute.xlu0 %911
          %v914 = vpack.c.bf16 %v752, %v752
          %v915 = vpack.c.bf16 %v906, %v906
          %v916 = vpack.c.bf16 %v909, %v909
          %v917 = vpack.c.bf16 %v912, %v912
          %918 = vst.msk [vmem:[#allocation3] sm:$0xf] %vm899, %v914
          %919 = vst.msk [vmem:[#allocation3 + $0x4] sm:$0xf] %vm899, %v915
          %920 = vst.msk [vmem:[#allocation3 + $0x8] sm:$0xf] %vm899, %v916
          %921 = vst.msk [vmem:[#allocation3 + $0xc] sm:$0xf] %vm899, %v917
        $region100: #{transformer_encoder.2} parent=87 // pred_fallthru
          _
        %s922 = smul.u32 %s35, 8
        %s923 = sshra.s32 %s922, 3
        %s924 = sand.u32 %s922, 7
        %s925 = smul.addr %s923, 4
        %s926 = scalar_lea.vmem %s606, %s925
        %v927 = vld [vmem:[%s926] sm:$0xf]
        %v928 = vld [vmem:[%s3] sm:$0xf]
        %v929 = vld [vmem:[%s3 + $0x4] sm:$0xf]
        %v930 = vld [vmem:[%s3 + $0x8] sm:$0xf]
        %v931 = vld [vmem:[%s3 + $0xc] sm:$0xf]
        %v932 = vld [vmem:[%s4] sm:$0x1]
        %v934 = vlaneseq
        %v935 = vshrl.u32 %v934, 7
        %v936 = vsub.s32 0, %v935
        %v937 = vrot.slane %v932, %v936
        %v943 = vunpack.c.l.b16 %v928
        %v944 = vunpack.c.l.b16 %v929
        %v945 = vunpack.c.l.b16 %v930
        %v946 = vunpack.c.l.b16 %v931
        %v947 = vpack.c.b16 %v944, %v943
        %v948 = vpack.c.b16 %v946, %v945
        %vm951 = vcmask 261120
        %v953 = vsel %vm951, %v927, 0
        %955 = vmatprep.subr.bf16.mxu0 0
        %956 = vmatpush1.bf16.msra.mxu0 %v947
        %957 = vmatprep.subr.bf16.mxu0 0
        %958 = vmatpush1.bf16.msra.mxu0 %v948
        %959 = vmatprep.subr.bf16.mxu0 0
        %960 = vmatpush1.bf16.msra.mxu0 0
        %961 = vmatprep.subr.bf16.mxu0 0
        %962 = vmatpush1.bf16.msra.mxu0 0
        %963 = vmatprep.subr.bf16.mxu0 0
        %964 = vmatpush1.bf16.msra.mxu0 0
        %965 = vmatprep.subr.bf16.mxu0 0
        %966 = vmatpush1.bf16.msra.mxu0 0
        %967 = vmatprep.subr.bf16.mxu0 0
        %968 = vmatpush1.bf16.msra.mxu0 0
        %969 = vmatprep.subr.bf16.mxu0 0
        %970 = vmatpush1.bf16.msra.mxu0 0
        %971 = vmatprep.subr.bf16.mxu0 0
        %972 = vmatpush1.bf16.msra.mxu0 0
        %973 = vmatprep.subr.bf16.mxu0 0
        %974 = vmatpush1.bf16.msra.mxu0 0
        %975 = vmatprep.subr.bf16.mxu0 0
        %976 = vmatpush1.bf16.msra.mxu0 0
        %977 = vmatprep.subr.bf16.mxu0 0
        %978 = vmatpush1.bf16.msra.mxu0 0
        %979 = vmatprep.subr.bf16.mxu0 0
        %980 = vmatpush1.bf16.msra.mxu0 0
        %981 = vmatprep.subr.bf16.mxu0 0
        %982 = vmatpush1.bf16.msra.mxu0 0
        %983 = vmatprep.subr.bf16.mxu0 0
        %984 = vmatpush1.bf16.msra.mxu0 0
        %985 = vmatprep.subr.bf16.mxu0 0
        %986 = vmatpush1.bf16.msra.mxu0 0
        %987 = vmatprep.mubr.bf16.mxu0 0
        %988 = vmatmul.mubr.bf16.gmra.mrb[0].mxu0 %v953
        %v989 = vpop.f32.mrb[0].mxu0
        %v990 = vadd.f32 %v937, %v989
        %v991 = vpop.f32.mrb[0].mxu0
        %v992 = vpop.f32.mrb[0].mxu0
        %v993 = vpop.f32.mrb[0].mxu0
        %994 = vdwg.mxu0
        %996 = vrot.lane.b32.xlu0 %v990, 120
        %v997 = vpop.permute.xlu0 %996
        %999 = vrot.lane.b32.xlu0 %v990, 112
        %v1000 = vpop.permute.xlu0 %999
        %1002 = vrot.lane.b32.xlu0 %v990, 104
        %v1003 = vpop.permute.xlu0 %1002
        %v1005 = vmul.f32 %v990, 0.35355338
        %v1006 = vmul.f32 %v997, 0.35355338
        %v1007 = vmul.f32 %v1000, 0.35355338
        %v1008 = vmul.f32 %v1003, 0.35355338
        %v1009 = vpack.c.bf16 %v1005, %v1005
        %v1010 = vpack.c.bf16 %v1006, %v1006
        %v1011 = vpack.c.bf16 %v1007, %v1007
        %v1012 = vpack.c.bf16 %v1008, %v1008
        %v1013 = vld [vmem:[%s609] sm:$0x1]
        %v1014 = vld [vmem:[#allocation2] sm:$0xf]
        %v1015 = vld [vmem:[#allocation2 + $0x4] sm:$0xf]
        %v1016 = vld [vmem:[#allocation2 + $0x8] sm:$0xf]
        %v1017 = vld [vmem:[#allocation2 + $0xc] sm:$0xf]
        %v1018 = vld [vmem:[%s613] sm:$0xff]
        %v1020 = vlaneseq
        %v1021 = vshrl.u32 %v1020, 7
        %v1022 = vsub.s32 0, %v1021
        %v1023 = vrot.slane %v1013, %v1022
        %v1025 = vadd.f32 %v1023, %v1018
        %vm1026 = vcmask 64512
        %v1028 = vsel %vm1026, %v1009, 0
        %vm1030 = vcmask 1043456
        %v1032 = vsel %vm1030, %v1014, 0
        %1034 = vmatprep.subr.bf16.mxu0 0
        %1035 = vmatpush1.bf16.msra.mxu0 %v1032
        %1036 = vmatprep.subr.bf16.mxu0 0
        %1037 = vmatpush1.bf16.msra.mxu0 0
        %1038 = vmatprep.subr.bf16.mxu0 0
        %1039 = vmatpush1.bf16.msra.mxu0 0
        %1040 = vmatprep.subr.bf16.mxu0 0
        %1041 = vmatpush1.bf16.msra.mxu0 0
        %1042 = vmatprep.subr.bf16.mxu0 0
        %1043 = vmatpush1.bf16.msra.mxu0 0
        %1044 = vmatprep.subr.bf16.mxu0 0
        %1045 = vmatpush1.bf16.msra.mxu0 0
        %1046 = vmatprep.subr.bf16.mxu0 0
        %1047 = vmatpush1.bf16.msra.mxu0 0
        %1048 = vmatprep.subr.bf16.mxu0 0
        %1049 = vmatpush1.bf16.msra.mxu0 0
        %1050 = vmatprep.subr.bf16.mxu0 0
        %1051 = vmatpush1.bf16.msra.mxu0 0
        %1052 = vmatprep.subr.bf16.mxu0 0
        %1053 = vmatpush1.bf16.msra.mxu0 0
        %1054 = vmatprep.subr.bf16.mxu0 0
        %1055 = vmatpush1.bf16.msra.mxu0 0
        %1056 = vmatprep.subr.bf16.mxu0 0
        %1057 = vmatpush1.bf16.msra.mxu0 0
        %1058 = vmatprep.subr.bf16.mxu0 0
        %1059 = vmatpush1.bf16.msra.mxu0 0
        %1060 = vmatprep.subr.bf16.mxu0 0
        %1061 = vmatpush1.bf16.msra.mxu0 0
        %1062 = vmatprep.subr.bf16.mxu0 0
        %1063 = vmatpush1.bf16.msra.mxu0 0
        %1064 = vmatprep.subr.bf16.mxu0 0
        %1065 = vmatpush1.bf16.msra.mxu0 0
        %1066 = vmatprep.mubr.bf16.mxu0 0
        %1067 = vmatmul.mubr.bf16.gmra.mrb[0].mxu0 %v1028
        %v1068 = vpop.f32.mrb[0].mxu0
        %v1069 = vadd.f32 %v1025, %v1068
        %v1070 = vpop.f32.mrb[0].mxu0
        %v1071 = vpop.f32.mrb[0].mxu0
        %v1072 = vpop.f32.mrb[0].mxu0
        %1073 = vdwg.mxu0
        %v1075 = vsel %vm1026, %v1010, 0
        %v1078 = vsel %vm1030, %v1015, 0
        %1080 = vmatprep.subr.bf16.mxu0 0
        %1081 = vmatpush1.bf16.msra.mxu0 %v1078
        %1082 = vmatprep.subr.bf16.mxu0 0
        %1083 = vmatpush1.bf16.msra.mxu0 0
        %1084 = vmatprep.subr.bf16.mxu0 0
        %1085 = vmatpush1.bf16.msra.mxu0 0
        %1086 = vmatprep.subr.bf16.mxu0 0
        %1087 = vmatpush1.bf16.msra.mxu0 0
        %1088 = vmatprep.subr.bf16.mxu0 0
        %1089 = vmatpush1.bf16.msra.mxu0 0
        %1090 = vmatprep.subr.bf16.mxu0 0
        %1091 = vmatpush1.bf16.msra.mxu0 0
        %1092 = vmatprep.subr.bf16.mxu0 0
        %1093 = vmatpush1.bf16.msra.mxu0 0
        %1094 = vmatprep.subr.bf16.mxu0 0
        %1095 = vmatpush1.bf16.msra.mxu0 0
        %1096 = vmatprep.subr.bf16.mxu0 0
        %1097 = vmatpush1.bf16.msra.mxu0 0
        %1098 = vmatprep.subr.bf16.mxu0 0
        %1099 = vmatpush1.bf16.msra.mxu0 0
        %1100 = vmatprep.subr.bf16.mxu0 0
        %1101 = vmatpush1.bf16.msra.mxu0 0
        %1102 = vmatprep.subr.bf16.mxu0 0
        %1103 = vmatpush1.bf16.msra.mxu0 0
        %1104 = vmatprep.subr.bf16.mxu0 0
        %1105 = vmatpush1.bf16.msra.mxu0 0
        %1106 = vmatprep.subr.bf16.mxu0 0
        %1107 = vmatpush1.bf16.msra.mxu0 0
        %1108 = vmatprep.subr.bf16.mxu0 0
        %1109 = vmatpush1.bf16.msra.mxu0 0
        %1110 = vmatprep.subr.bf16.mxu0 0
        %1111 = vmatpush1.bf16.msra.mxu0 0
        %1112 = vmatprep.mubr.bf16.mxu0 0
        %1113 = vmatmul.mubr.bf16.gmra.mrb[0].mxu0 %v1075
        %v1114 = vpop.f32.mrb[0].mxu0
        %v1115 = vadd.f32 %v1025, %v1114
        %v1116 = vpop.f32.mrb[0].mxu0
        %v1117 = vpop.f32.mrb[0].mxu0
        %v1118 = vpop.f32.mrb[0].mxu0
        %1119 = vdwg.mxu0
        %v1121 = vsel %vm1026, %v1011, 0
        %v1124 = vsel %vm1030, %v1016, 0
        %1126 = vmatprep.subr.bf16.mxu0 0
        %1127 = vmatpush1.bf16.msra.mxu0 %v1124
        %1128 = vmatprep.subr.bf16.mxu0 0
        %1129 = vmatpush1.bf16.msra.mxu0 0
        %1130 = vmatprep.subr.bf16.mxu0 0
        %1131 = vmatpush1.bf16.msra.mxu0 0
        %1132 = vmatprep.subr.bf16.mxu0 0
        %1133 = vmatpush1.bf16.msra.mxu0 0
        %1134 = vmatprep.subr.bf16.mxu0 0
        %1135 = vmatpush1.bf16.msra.mxu0 0
        %1136 = vmatprep.subr.bf16.mxu0 0
        %1137 = vmatpush1.bf16.msra.mxu0 0
        %1138 = vmatprep.subr.bf16.mxu0 0
        %1139 = vmatpush1.bf16.msra.mxu0 0
        %1140 = vmatprep.subr.bf16.mxu0 0
        %1141 = vmatpush1.bf16.msra.mxu0 0
        %1142 = vmatprep.subr.bf16.mxu0 0
        %1143 = vmatpush1.bf16.msra.mxu0 0
        %1144 = vmatprep.subr.bf16.mxu0 0
        %1145 = vmatpush1.bf16.msra.mxu0 0
        %1146 = vmatprep.subr.bf16.mxu0 0
        %1147 = vmatpush1.bf16.msra.mxu0 0
        %1148 = vmatprep.subr.bf16.mxu0 0
        %1149 = vmatpush1.bf16.msra.mxu0 0
        %1150 = vmatprep.subr.bf16.mxu0 0
        %1151 = vmatpush1.bf16.msra.mxu0 0
        %1152 = vmatprep.subr.bf16.mxu0 0
        %1153 = vmatpush1.bf16.msra.mxu0 0
        %1154 = vmatprep.subr.bf16.mxu0 0
        %1155 = vmatpush1.bf16.msra.mxu0 0
        %1156 = vmatprep.subr.bf16.mxu0 0
        %1157 = vmatpush1.bf16.msra.mxu0 0
        %1158 = vmatprep.mubr.bf16.mxu0 0
        %1159 = vmatmul.mubr.bf16.gmra.mrb[0].mxu0 %v1121
        %v1160 = vpop.f32.mrb[0].mxu0
        %v1161 = vadd.f32 %v1025, %v1160
        %v1162 = vpop.f32.mrb[0].mxu0
        %v1163 = vpop.f32.mrb[0].mxu0
        %v1164 = vpop.f32.mrb[0].mxu0
        %1165 = vdwg.mxu0
        %v1167 = vsel %vm1026, %v1012, 0
        %v1170 = vsel %vm1030, %v1017, 0
        %1172 = vmatprep.subr.bf16.mxu0 0
        %1173 = vmatpush1.bf16.msra.mxu0 %v1170
        %1174 = vmatprep.subr.bf16.mxu0 0
        %1175 = vmatpush1.bf16.msra.mxu0 0
        %1176 = vmatprep.subr.bf16.mxu0 0
        %1177 = vmatpush1.bf16.msra.mxu0 0
        %1178 = vmatprep.subr.bf16.mxu0 0
        %1179 = vmatpush1.bf16.msra.mxu0 0
        %1180 = vmatprep.subr.bf16.mxu0 0
        %1181 = vmatpush1.bf16.msra.mxu0 0
        %1182 = vmatprep.subr.bf16.mxu0 0
        %1183 = vmatpush1.bf16.msra.mxu0 0
        %1184 = vmatprep.subr.bf16.mxu0 0
        %1185 = vmatpush1.bf16.msra.mxu0 0
        %1186 = vmatprep.subr.bf16.mxu0 0
        %1187 = vmatpush1.bf16.msra.mxu0 0
        %1188 = vmatprep.subr.bf16.mxu0 0
        %1189 = vmatpush1.bf16.msra.mxu0 0
        %1190 = vmatprep.subr.bf16.mxu0 0
        %1191 = vmatpush1.bf16.msra.mxu0 0
        %1192 = vmatprep.subr.bf16.mxu0 0
        %1193 = vmatpush1.bf16.msra.mxu0 0
        %1194 = vmatprep.subr.bf16.mxu0 0
        %1195 = vmatpush1.bf16.msra.mxu0 0
        %1196 = vmatprep.subr.bf16.mxu0 0
        %1197 = vmatpush1.bf16.msra.mxu0 0
        %1198 = vmatprep.subr.bf16.mxu0 0
        %1199 = vmatpush1.bf16.msra.mxu0 0
        %1200 = vmatprep.subr.bf16.mxu0 0
        %1201 = vmatpush1.bf16.msra.mxu0 0
        %1202 = vmatprep.subr.bf16.mxu0 0
        %1203 = vmatpush1.bf16.msra.mxu0 0
        %1204 = vmatprep.mubr.bf16.mxu0 0
        %1205 = vmatmul.mubr.bf16.gmra.mrb[0].mxu0 %v1167
        %v1206 = vpop.f32.mrb[0].mxu0
        %v1207 = vadd.f32 %v1025, %v1206
        %v1208 = vpop.f32.mrb[0].mxu0
        %v1209 = vpop.f32.mrb[0].mxu0
        %v1210 = vpop.f32.mrb[0].mxu0
        %1211 = vdwg.mxu0
        %v1212 = vsel %vm1026, %v1069, -inf
        %1213 = vmax.xlane.f32.xlu0 %v1212
        %v1214 = vpop.xlane.xlu0 %1213
        %v1215 = vsel %vm1026, %v1115, -inf
        %1216 = vmax.xlane.f32.xlu0 %v1215
        %v1217 = vpop.xlane.xlu0 %1216
        %v1218 = vsel %vm1026, %v1161, -inf
        %1219 = vmax.xlane.f32.xlu0 %v1218
        %v1220 = vpop.xlane.xlu0 %1219
        %v1221 = vsel %vm1026, %v1207, -inf
        %1222 = vmax.xlane.f32.xlu0 %v1221
        %v1223 = vpop.xlane.xlu0 %1222
        %v1224 = vmax.f32 %v1214, -1e+30
        %v1225 = vmax.f32 %v1217, -1e+30
        %v1226 = vmax.f32 %v1220, -1e+30
        %v1227 = vmax.f32 %v1223, -1e+30
        %v1228 = vsub.f32 -1e+30, %v1224
        %v1229 = vsub.f32 -1e+30, %v1225
        %v1230 = vsub.f32 -1e+30, %v1226
        %v1231 = vsub.f32 -1e+30, %v1227
        %v1232 = vmul.f32 %v1228, 1.442695
        %v1233 = vpow.pop %v1232
        %v1234 = vmul.f32 %v1229, 1.442695
        %v1235 = vpow.pop %v1234
        %v1236 = vmul.f32 %v1230, 1.442695
        %v1237 = vpow.pop %v1236
        %v1238 = vmul.f32 %v1231, 1.442695
        %v1239 = vpow.pop %v1238
        %v1240 = vsub.f32 %v1069, %v1224
        %v1241 = vsub.f32 %v1115, %v1225
        %v1242 = vsub.f32 %v1161, %v1226
        %v1243 = vsub.f32 %v1207, %v1227
        %v1244 = vmul.f32 %v1240, 1.442695
        %v1245 = vpow.pop %v1244
        %v1246 = vmul.f32 %v1241, 1.442695
        %v1247 = vpow.pop %v1246
        %v1248 = vmul.f32 %v1242, 1.442695
        %v1249 = vpow.pop %v1248
        %v1250 = vmul.f32 %v1243, 1.442695
        %v1251 = vpow.pop %v1250
        %v1252 = vmul.f32 %v1233, 0.0
        %v1253 = vmul.f32 %v1235, 0.0
        %v1254 = vmul.f32 %v1237, 0.0
        %v1255 = vmul.f32 %v1239, 0.0
        %v1256 = vsel %vm1026, %v1245, 0.0
        %1257 = vadd.xlane.f32.xlu0 %v1256
        %v1258 = vpop.xlane.xlu0 %1257
        %v1259 = vsel %vm1026, %v1247, 0.0
        %1260 = vadd.xlane.f32.xlu0 %v1259
        %v1261 = vpop.xlane.xlu0 %1260
        %v1262 = vsel %vm1026, %v1249, 0.0
        %1263 = vadd.xlane.f32.xlu0 %v1262
        %v1264 = vpop.xlane.xlu0 %1263
        %v1265 = vsel %vm1026, %v1251, 0.0
        %1266 = vadd.xlane.f32.xlu0 %v1265
        %v1267 = vpop.xlane.xlu0 %1266
        %v1268 = vadd.f32 %v1252, %v1258
        %v1269 = vadd.f32 %v1253, %v1261
        %v1270 = vadd.f32 %v1254, %v1264
        %v1271 = vadd.f32 %v1255, %v1267
        %v1272 = vld [vmem:[#allocation3] sm:$0xf]
        %v1273 = vld [vmem:[#allocation3 + $0x4] sm:$0xf]
        %v1274 = vld [vmem:[#allocation3 + $0x8] sm:$0xf]
        %v1275 = vld [vmem:[#allocation3 + $0xc] sm:$0xf]
        %v1276 = vpack.c.bf16 %v1245, %v1245
        %v1277 = vpack.c.bf16 %v1247, %v1247
        %v1278 = vpack.c.bf16 %v1249, %v1249
        %v1279 = vpack.c.bf16 %v1251, %v1251
        %v1281 = vsel %vm1026, %v1276, 0
        %v1284 = vsel %vm1030, %v1272, 0
        %1286 = vmatprep.subr.bf16.mxu0 0
        %1287 = vmatpush1.bf16.msra.mxu0 %v1284
        %1288 = vmatprep.subr.bf16.mxu0 0
        %1289 = vmatpush1.bf16.msra.mxu0 0
        %1290 = vmatprep.subr.bf16.mxu0 0
        %1291 = vmatpush1.bf16.msra.mxu0 0
        %1292 = vmatprep.subr.bf16.mxu0 0
        %1293 = vmatpush1.bf16.msra.mxu0 0
        %1294 = vmatprep.subr.bf16.mxu0 0
        %1295 = vmatpush1.bf16.msra.mxu0 0
        %1296 = vmatprep.subr.bf16.mxu0 0
        %1297 = vmatpush1.bf16.msra.mxu0 0
        %1298 = vmatprep.subr.bf16.mxu0 0
        %1299 = vmatpush1.bf16.msra.mxu0 0
        %1300 = vmatprep.subr.bf16.mxu0 0
        %1301 = vmatpush1.bf16.msra.mxu0 0
        %1302 = vmatprep.subr.bf16.mxu0 0
        %1303 = vmatpush1.bf16.msra.mxu0 0
        %1304 = vmatprep.subr.bf16.mxu0 0
        %1305 = vmatpush1.bf16.msra.mxu0 0
        %1306 = vmatprep.subr.bf16.mxu0 0
        %1307 = vmatpush1.bf16.msra.mxu0 0
        %1308 = vmatprep.subr.bf16.mxu0 0
        %1309 = vmatpush1.bf16.msra.mxu0 0
        %1310 = vmatprep.subr.bf16.mxu0 0
        %1311 = vmatpush1.bf16.msra.mxu0 0
        %1312 = vmatprep.subr.bf16.mxu0 0
        %1313 = vmatpush1.bf16.msra.mxu0 0
        %1314 = vmatprep.subr.bf16.mxu0 0
        %1315 = vmatpush1.bf16.msra.mxu0 0
        %1316 = vmatprep.subr.bf16.mxu0 0
        %1317 = vmatpush1.bf16.msra.mxu0 0
        %1318 = vmatprep.mubr.bf16.mxu0 0
        %1319 = vmatmul.mubr.bf16.gmra.mrb[0].mxu0 %v1281
        %v1320 = vpop.f32.mrb[0].mxu0
        %v1321 = vadd.f32 0.0, %v1320
        %v1322 = vpop.f32.mrb[0].mxu0
        %v1323 = vpop.f32.mrb[0].mxu0
        %v1324 = vpop.f32.mrb[0].mxu0
        %1325 = vdwg.mxu0
        %v1327 = vsel %vm1026, %v1277, 0
        %v1330 = vsel %vm1030, %v1273, 0
        %1332 = vmatprep.subr.bf16.mxu0 0
        %1333 = vmatpush1.bf16.msra.mxu0 %v1330
        %1334 = vmatprep.subr.bf16.mxu0 0
        %1335 = vmatpush1.bf16.msra.mxu0 0
        %1336 = vmatprep.subr.bf16.mxu0 0
        %1337 = vmatpush1.bf16.msra.mxu0 0
        %1338 = vmatprep.subr.bf16.mxu0 0
        %1339 = vmatpush1.bf16.msra.mxu0 0
        %1340 = vmatprep.subr.bf16.mxu0 0
        %1341 = vmatpush1.bf16.msra.mxu0 0
        %1342 = vmatprep.subr.bf16.mxu0 0
        %1343 = vmatpush1.bf16.msra.mxu0 0
        %1344 = vmatprep.subr.bf16.mxu0 0
        %1345 = vmatpush1.bf16.msra.mxu0 0
        %1346 = vmatprep.subr.bf16.mxu0 0
        %1347 = vmatpush1.bf16.msra.mxu0 0
        %1348 = vmatprep.subr.bf16.mxu0 0
        %1349 = vmatpush1.bf16.msra.mxu0 0
        %1350 = vmatprep.subr.bf16.mxu0 0
        %1351 = vmatpush1.bf16.msra.mxu0 0
        %1352 = vmatprep.subr.bf16.mxu0 0
        %1353 = vmatpush1.bf16.msra.mxu0 0
        %1354 = vmatprep.subr.bf16.mxu0 0
        %1355 = vmatpush1.bf16.msra.mxu0 0
        %1356 = vmatprep.subr.bf16.mxu0 0
        %1357 = vmatpush1.bf16.msra.mxu0 0
        %1358 = vmatprep.subr.bf16.mxu0 0
        %1359 = vmatpush1.bf16.msra.mxu0 0
        %1360 = vmatprep.subr.bf16.mxu0 0
        %1361 = vmatpush1.bf16.msra.mxu0 0
        %1362 = vmatprep.subr.bf16.mxu0 0
        %1363 = vmatpush1.bf16.msra.mxu0 0
        %1364 = vmatprep.mubr.bf16.mxu0 0
        %1365 = vmatmul.mubr.bf16.gmra.mrb[0].mxu0 %v1327
        %v1366 = vpop.f32.mrb[0].mxu0
        %v1367 = vadd.f32 0.0, %v1366
        %v1368 = vpop.f32.mrb[0].mxu0
        %v1369 = vpop.f32.mrb[0].mxu0
        %v1370 = vpop.f32.mrb[0].mxu0
        %1371 = vdwg.mxu0
        %v1373 = vsel %vm1026, %v1278, 0
        %v1376 = vsel %vm1030, %v1274, 0
        %1378 = vmatprep.subr.bf16.mxu0 0
        %1379 = vmatpush1.bf16.msra.mxu0 %v1376
        %1380 = vmatprep.subr.bf16.mxu0 0
        %1381 = vmatpush1.bf16.msra.mxu0 0
        %1382 = vmatprep.subr.bf16.mxu0 0
        %1383 = vmatpush1.bf16.msra.mxu0 0
        %1384 = vmatprep.subr.bf16.mxu0 0
        %1385 = vmatpush1.bf16.msra.mxu0 0
        %1386 = vmatprep.subr.bf16.mxu0 0
        %1387 = vmatpush1.bf16.msra.mxu0 0
        %1388 = vmatprep.subr.bf16.mxu0 0
        %1389 = vmatpush1.bf16.msra.mxu0 0
        %1390 = vmatprep.subr.bf16.mxu0 0
        %1391 = vmatpush1.bf16.msra.mxu0 0
        %1392 = vmatprep.subr.bf16.mxu0 0
        %1393 = vmatpush1.bf16.msra.mxu0 0
        %1394 = vmatprep.subr.bf16.mxu0 0
        %1395 = vmatpush1.bf16.msra.mxu0 0
        %1396 = vmatprep.subr.bf16.mxu0 0
        %1397 = vmatpush1.bf16.msra.mxu0 0
        %1398 = vmatprep.subr.bf16.mxu0 0
        %1399 = vmatpush1.bf16.msra.mxu0 0
        %1400 = vmatprep.subr.bf16.mxu0 0
        %1401 = vmatpush1.bf16.msra.mxu0 0
        %1402 = vmatprep.subr.bf16.mxu0 0
        %1403 = vmatpush1.bf16.msra.mxu0 0
        %1404 = vmatprep.subr.bf16.mxu0 0
        %1405 = vmatpush1.bf16.msra.mxu0 0
        %1406 = vmatprep.subr.bf16.mxu0 0
        %1407 = vmatpush1.bf16.msra.mxu0 0
        %1408 = vmatprep.subr.bf16.mxu0 0
        %1409 = vmatpush1.bf16.msra.mxu0 0
        %1410 = vmatprep.mubr.bf16.mxu0 0
        %1411 = vmatmul.mubr.bf16.gmra.mrb[0].mxu0 %v1373
        %v1412 = vpop.f32.mrb[0].mxu0
        %v1413 = vadd.f32 0.0, %v1412
        %v1414 = vpop.f32.mrb[0].mxu0
        %v1415 = vpop.f32.mrb[0].mxu0
        %v1416 = vpop.f32.mrb[0].mxu0
        %1417 = vdwg.mxu0
        %v1419 = vsel %vm1026, %v1279, 0
        %v1422 = vsel %vm1030, %v1275, 0
        %1424 = vmatprep.subr.bf16.mxu0 0
        %1425 = vmatpush1.bf16.msra.mxu0 %v1422
        %1426 = vmatprep.subr.bf16.mxu0 0
        %1427 = vmatpush1.bf16.msra.mxu0 0
        %1428 = vmatprep.subr.bf16.mxu0 0
        %1429 = vmatpush1.bf16.msra.mxu0 0
        %1430 = vmatprep.subr.bf16.mxu0 0
        %1431 = vmatpush1.bf16.msra.mxu0 0
        %1432 = vmatprep.subr.bf16.mxu0 0
        %1433 = vmatpush1.bf16.msra.mxu0 0
        %1434 = vmatprep.subr.bf16.mxu0 0
        %1435 = vmatpush1.bf16.msra.mxu0 0
        %1436 = vmatprep.subr.bf16.mxu0 0
        %1437 = vmatpush1.bf16.msra.mxu0 0
        %1438 = vmatprep.subr.bf16.mxu0 0
        %1439 = vmatpush1.bf16.msra.mxu0 0
        %1440 = vmatprep.subr.bf16.mxu0 0
        %1441 = vmatpush1.bf16.msra.mxu0 0
        %1442 = vmatprep.subr.bf16.mxu0 0
        %1443 = vmatpush1.bf16.msra.mxu0 0
        %1444 = vmatprep.subr.bf16.mxu0 0
        %1445 = vmatpush1.bf16.msra.mxu0 0
        %1446 = vmatprep.subr.bf16.mxu0 0
        %1447 = vmatpush1.bf16.msra.mxu0 0
        %1448 = vmatprep.subr.bf16.mxu0 0
        %1449 = vmatpush1.bf16.msra.mxu0 0
        %1450 = vmatprep.subr.bf16.mxu0 0
        %1451 = vmatpush1.bf16.msra.mxu0 0
        %1452 = vmatprep.subr.bf16.mxu0 0
        %1453 = vmatpush1.bf16.msra.mxu0 0
        %1454 = vmatprep.subr.bf16.mxu0 0
        %1455 = vmatpush1.bf16.msra.mxu0 0
        %1456 = vmatprep.mubr.bf16.mxu0 0
        %1457 = vmatmul.mubr.bf16.gmra.mrb[0].mxu0 %v1419
        %v1458 = vpop.f32.mrb[0].mxu0
        %v1459 = vadd.f32 0.0, %v1458
        %v1460 = vpop.f32.mrb[0].mxu0
        %v1461 = vpop.f32.mrb[0].mxu0
        %v1462 = vpop.f32.mrb[0].mxu0
        %1463 = vdwg.mxu0
        %v1464 = vadd.f32 %v1252, %v1321
        %v1465 = vadd.f32 %v1253, %v1367
        %v1466 = vadd.f32 %v1254, %v1413
        %v1467 = vadd.f32 %v1255, %v1459
        %v1468 = vrcp.pop %v1268
        %v1469 = vrcp.pop %v1269
        %v1470 = vrcp.pop %v1270
        %v1471 = vrcp.pop %v1271
        %v1472 = vmul.f32 %v1464, %v1468
        %v1473 = vmul.f32 %v1465, %v1469
        %v1474 = vmul.f32 %v1466, %v1470
        %v1475 = vmul.f32 %v1467, %v1471
        %1477 = vrot.lane.b32.xlu0 %v1473, 8
        %v1478 = vpop.permute.xlu0 %1477
        %1481 = vrot.lane.b32.xlu0 %v1474, 16
        %v1482 = vpop.permute.xlu0 %1481
        %1485 = vrot.lane.b32.xlu0 %v1475, 24
        %v1486 = vpop.permute.xlu0 %1485
        %v1488 = vsel %vm1026, %v1472, %v1478
        %vm1489 = vcmask 130048
        %v1490 = vsel %vm1489, %v1488, %v1482
        %vm1491 = vcmask 195584
        %v1492 = vsel %vm1491, %v1490, %v1486
        %v1493 = vunpack.c.l.bf16 %v927
        %v1494 = vadd.f32 %v1493, %v1492
        %v1495 = vld [vmem:[%s9] sm:$0x1]
        %v1496 = vld [vmem:[%s10] sm:$0x1]
        %v1497 = vsel %vm951, %v1494, 0.0
        %1498 = vadd.xlane.f32.xlu0 %v1497
        %v1499 = vpop.xlane.xlu0 %1498
        %v1500 = vrcp.pop 32.0
        %v1501 = vmul.f32 %v1499, %v1500
        %v1502 = vsub.f32 %v1494, %v1501
        %v1503 = vmul.f32 %v1502, %v1502
        %v1504 = vsel %vm951, %v1503, 0.0
        %1505 = vadd.xlane.f32.xlu0 %v1504
        %v1506 = vpop.xlane.xlu0 %1505
        %v1507 = vmul.f32 %v1506, %v1500
        %v1508 = vadd.f32 %v1507, 1e-05
        %v1509 = vrsqrt.pop %v1508
        %v1510 = vmul.f32 %v1502, %v1509
        %v1512 = vlaneseq
        %v1513 = vshrl.u32 %v1512, 7
        %v1514 = vsub.s32 0, %v1513
        %v1515 = vrot.slane %v1495, %v1514
        %v1517 = vmul.f32 %v1510, %v1515
        %v1519 = vlaneseq
        %v1520 = vshrl.u32 %v1519, 7
        %v1521 = vsub.s32 0, %v1520
        %v1522 = vrot.slane %v1496, %v1521
        %v1524 = vadd.f32 %v1517, %v1522
        %v1525 = vpack.c.bf16 %v1524, %v1524
        %v1526 = vld [vmem:[%s11] sm:$0xf]
        %v1527 = vld [vmem:[%s11 + $0x4] sm:$0xf]
        %v1528 = vld [vmem:[%s11 + $0x8] sm:$0xf]
        %v1529 = vld [vmem:[%s11 + $0xc] sm:$0xf]
        %v1530 = vld [vmem:[#allocation4] sm:$0x1]
        %v1532 = vlaneseq
        %v1533 = vshrl.u32 %v1532, 7
        %v1534 = vsub.s32 0, %v1533
        %v1535 = vrot.slane %v1530, %v1534
        %v1541 = vunpack.c.l.b16 %v1526
        %v1542 = vunpack.c.l.b16 %v1527
        %v1543 = vunpack.c.l.b16 %v1528
        %v1544 = vunpack.c.l.b16 %v1529
        %v1545 = vpack.c.b16 %v1542, %v1541
        %v1546 = vpack.c.b16 %v1544, %v1543
        %v1550 = vsel %vm951, %v1525, 0
        %1552 = vmatprep.subr.bf16.mxu0 0
        %1553 = vmatpush1.bf16.msra.mxu0 %v1545
        %1554 = vmatprep.subr.bf16.mxu0 0
        %1555 = vmatpush1.bf16.msra.mxu0 %v1546
        %1556 = vmatprep.subr.bf16.mxu0 0
        %1557 = vmatpush1.bf16.msra.mxu0 0
        %1558 = vmatprep.subr.bf16.mxu0 0
        %1559 = vmatpush1.bf16.msra.mxu0 0
        %1560 = vmatprep.subr.bf16.mxu0 0
        %1561 = vmatpush1.bf16.msra.mxu0 0
        %1562 = vmatprep.subr.bf16.mxu0 0
        %1563 = vmatpush1.bf16.msra.mxu0 0
        %1564 = vmatprep.subr.bf16.mxu0 0
        %1565 = vmatpush1.bf16.msra.mxu0 0
        %1566 = vmatprep.subr.bf16.mxu0 0
        %1567 = vmatpush1.bf16.msra.mxu0 0
        %1568 = vmatprep.subr.bf16.mxu0 0
        %1569 = vmatpush1.bf16.msra.mxu0 0
        %1570 = vmatprep.subr.bf16.mxu0 0
        %1571 = vmatpush1.bf16.msra.mxu0 0
        %1572 = vmatprep.subr.bf16.mxu0 0
        %1573 = vmatpush1.bf16.msra.mxu0 0
        %1574 = vmatprep.subr.bf16.mxu0 0
        %1575 = vmatpush1.bf16.msra.mxu0 0
        %1576 = vmatprep.subr.bf16.mxu0 0
        %1577 = vmatpush1.bf16.msra.mxu0 0
        %1578 = vmatprep.subr.bf16.mxu0 0
        %1579 = vmatpush1.bf16.msra.mxu0 0
        %1580 = vmatprep.subr.bf16.mxu0 0
        %1581 = vmatpush1.bf16.msra.mxu0 0
        %1582 = vmatprep.subr.bf16.mxu0 0
        %1583 = vmatpush1.bf16.msra.mxu0 0
        %1584 = vmatprep.mubr.bf16.mxu0 0
        %1585 = vmatmul.mubr.bf16.gmra.mrb[0].mxu0 %v1550
        %v1586 = vpop.f32.mrb[0].mxu0
        %v1587 = vadd.f32 %v1535, %v1586
        %v1588 = vpop.f32.mrb[0].mxu0
        %v1589 = vpop.f32.mrb[0].mxu0
        %v1590 = vpop.f32.mrb[0].mxu0
        %1591 = vdwg.mxu0
        %v1592 = vmax.f32 %v1587, 0.0
        %v1593 = vpack.c.bf16 %v1592, %v1592
        %v1594 = vld [vmem:[%s13] sm:$0xf]
        %v1595 = vld [vmem:[%s13 + $0x4] sm:$0xf]
        %v1596 = vld [vmem:[%s13 + $0x8] sm:$0xf]
        %v1597 = vld [vmem:[%s13 + $0xc] sm:$0xf]
        %v1598 = vld [vmem:[%s13 + $0x10] sm:$0xf]
        %v1599 = vld [vmem:[%s13 + $0x14] sm:$0xf]
        %v1600 = vld [vmem:[%s13 + $0x18] sm:$0xf]
        %v1601 = vld [vmem:[%s13 + $0x1c] sm:$0xf]
        %v1602 = vld [vmem:[#allocation6] sm:$0x1]
        %v1604 = vlaneseq
        %v1605 = vshrl.u32 %v1604, 7
        %v1606 = vsub.s32 0, %v1605
        %v1607 = vrot.slane %v1602, %v1606
        %v1617 = vunpack.c.l.b16 %v1594
        %v1618 = vunpack.c.l.b16 %v1595
        %v1619 = vunpack.c.l.b16 %v1596
        %v1620 = vunpack.c.l.b16 %v1597
        %v1621 = vunpack.c.l.b16 %v1598
        %v1622 = vunpack.c.l.b16 %v1599
        %v1623 = vunpack.c.l.b16 %v1600
        %v1624 = vunpack.c.l.b16 %v1601
        %v1625 = vpack.c.b16 %v1618, %v1617
        %v1626 = vpack.c.b16 %v1620, %v1619
        %v1627 = vpack.c.b16 %v1622, %v1621
        %v1628 = vpack.c.b16 %v1624, %v1623
        %vm1633 = vcmask 523264
        %v1635 = vsel %vm1633, %v1593, 0
        %1637 = vmatprep.subr.bf16.mxu0 0
        %1638 = vmatpush1.bf16.msra.mxu0 %v1625
        %1639 = vmatprep.subr.bf16.mxu0 0
        %1640 = vmatpush1.bf16.msra.mxu0 %v1626
        %1641 = vmatprep.subr.bf16.mxu0 0
        %1642 = vmatpush1.bf16.msra.mxu0 %v1627
        %1643 = vmatprep.subr.bf16.mxu0 0
        %1644 = vmatpush1.bf16.msra.mxu0 %v1628
        %1645 = vmatprep.subr.bf16.mxu0 0
        %1646 = vmatpush1.bf16.msra.mxu0 0
        %1647 = vmatprep.subr.bf16.mxu0 0
        %1648 = vmatpush1.bf16.msra.mxu0 0
        %1649 = vmatprep.subr.bf16.mxu0 0
        %1650 = vmatpush1.bf16.msra.mxu0 0
        %1651 = vmatprep.subr.bf16.mxu0 0
        %1652 = vmatpush1.bf16.msra.mxu0 0
        %1653 = vmatprep.subr.bf16.mxu0 0
        %1654 = vmatpush1.bf16.msra.mxu0 0
        %1655 = vmatprep.subr.bf16.mxu0 0
        %1656 = vmatpush1.bf16.msra.mxu0 0
        %1657 = vmatprep.subr.bf16.mxu0 0
        %1658 = vmatpush1.bf16.msra.mxu0 0
        %1659 = vmatprep.subr.bf16.mxu0 0
        %1660 = vmatpush1.bf16.msra.mxu0 0
        %1661 = vmatprep.subr.bf16.mxu0 0
        %1662 = vmatpush1.bf16.msra.mxu0 0
        %1663 = vmatprep.subr.bf16.mxu0 0
        %1664 = vmatpush1.bf16.msra.mxu0 0
        %1665 = vmatprep.subr.bf16.mxu0 0
        %1666 = vmatpush1.bf16.msra.mxu0 0
        %1667 = vmatprep.subr.bf16.mxu0 0
        %1668 = vmatpush1.bf16.msra.mxu0 0
        %1669 = vmatprep.mubr.bf16.mxu0 0
        %1670 = vmatmul.mubr.bf16.gmra.mrb[0].mxu0 %v1635
        %v1671 = vpop.f32.mrb[0].mxu0
        %v1672 = vadd.f32 %v1607, %v1671
        %v1673 = vpop.f32.mrb[0].mxu0
        %v1674 = vpop.f32.mrb[0].mxu0
        %v1675 = vpop.f32.mrb[0].mxu0
        %1676 = vdwg.mxu0
        %v1677 = vadd.f32 %v1524, %v1672
        %v1678 = vld [vmem:[%s15] sm:$0x1]
        %v1679 = vld [vmem:[%s16] sm:$0x1]
        %v1680 = vsel %vm951, %v1677, 0.0
        %1681 = vadd.xlane.f32.xlu0 %v1680
        %v1682 = vpop.xlane.xlu0 %1681
        %v1683 = vmul.f32 %v1682, %v1500
        %v1684 = vsub.f32 %v1677, %v1683
        %v1685 = vmul.f32 %v1684, %v1684
        %v1686 = vsel %vm951, %v1685, 0.0
        %1687 = vadd.xlane.f32.xlu0 %v1686
        %v1688 = vpop.xlane.xlu0 %1687
        %v1689 = vmul.f32 %v1688, %v1500
        %v1690 = vadd.f32 %v1689, 1e-05
        %v1691 = vrsqrt.pop %v1690
        %v1692 = vmul.f32 %v1684, %v1691
        %v1694 = vlaneseq
        %v1695 = vshrl.u32 %v1694, 7
        %v1696 = vsub.s32 0, %v1695
        %v1697 = vrot.slane %v1678, %v1696
        %v1699 = vmul.f32 %v1692, %v1697
        %v1701 = vlaneseq
        %v1702 = vshrl.u32 %v1701, 7
        %v1703 = vsub.s32 0, %v1702
        %v1704 = vrot.slane %v1679, %v1703
        %v1706 = vadd.f32 %v1699, %v1704
        %v1707 = vpack.c.bf16 %v1706, %v1706
        %vm1708 = vcmask 257024
        %1709 = vst.msk [vmem:[%s620] sm:$0xf] %vm1708, %v1707
        %p1710 = scmp.lt.s32.totalorder %s34, 1
        %s1711 = scalar_select %p1710, %s34, 1
        %p1712 = scmp.lt.s32.totalorder %s35, 0
        %s1713 = scalar_select %p1712, %s35, 0
        %s1714 = sadd.s32 %s1713, %s1711
        %s1715 = smul.addr %s1714, 4
        %s1716 = scalar_lea.vmem %s17, %s1715
        // Predicated region
        $region101: #{transformer_encoder.2} parent=87 // pred_check
          %p1717 = pneg %p434
        $region102: #{transformer_encoder.2} parent=87 // pred_check_branch
          %1719 = sbr.rel (%p1717) target = $region104
        $region103: #{transformer_encoder.2} parent=87 // pred_region
          _
        $region104: #{transformer_encoder.2} parent=87 // pred_fallthru
          _
      $region88: #{transformer_encoder.2} parent=5 // pred_fallthru
        _
      %p1720 = scmp.le.s32.totalorder 2, %s25
      // Predicated region
      $region105: #{transformer_encoder.2} parent=5 // pred_check
        %p1721 = pneg %p1720
      $region106: #{transformer_encoder.2} parent=5 // pred_check_branch
        %1723 = sbr.rel (%p1721) target = $region108
      $region107: #{transformer_encoder.2} parent=5 // pred_region
        %s1724 = ssub.s32 %s25, 2
        // Predicated region
        $region109: #{transformer_encoder.2} parent=107 // pred_check
          %p1725 = pneg %p440
        $region110: #{transformer_encoder.2} parent=107 // pred_check_branch
          %1727 = sbr.rel (%p1725) target = $region112
        $region111: #{transformer_encoder.2} parent=107 // pred_region
          %p1728 = scmp.lt.s32.totalorder %s36, 1
          %s1729 = scalar_select %p1728, %s36, 1
          %p1730 = scmp.lt.s32.totalorder %s37, 0
          %s1731 = scalar_select %p1730, %s37, 0
          %s1732 = sadd.s32 %s1731, %s1729
          %s1733 = smul.addr %s1732, 4
          %s1734 = scalar_lea.vmem %s17, %s1733
        $region112: #{transformer_encoder.2} parent=107 // pred_fallthru
          _
      $region108: #{transformer_encoder.2} parent=5 // pred_fallthru
        _
    $region6: #{transformer_encoder.2} parent=1 // loop_footer
      %s29 = sadd.s32 1, %s25
    $region7: #{transformer_encoder.2} parent=1 // loop_footer_branch
      %24 = sbr.rel target = $region3
    $region8: #{transformer_encoder.2} parent=1 // loop_exit
      _
    %1735 = vsyncpa [#allocation5], 1
    %s1736 = scalar_lea.sflag [#allocation5], 1
    %1737 = vsyncpa %s1736, 1
    %1738 = vsyncpa [#allocation7], 1

// kernel: transformer_encoder.3
$region0: #{transformer_encoder.3}
  #allocation0 [shape = 'u32[]', space=smem, size = 0x4, offset = 0x4, fixed_abs, tag = 'smem constant byte address 0x4 - core index']
  #allocation1 [shape = 'u32[144,128]{1,0:T(1,128)}', space=vmem, size = 0x12000, scoped, tag = 'internal scratch']
  #allocation2 [shape = 'bf16[4,8,8]{2,1,0:T(8,128)(2,1)}', space=vmem, size = 0x2000, scoped, tag = 'scratch operand']
  #allocation3 [shape = 'bf16[4,8,8]{2,1,0:T(8,128)(2,1)}', space=vmem, size = 0x2000, scoped, tag = 'scratch operand']
  %s0 = inlined_call_operand.vmem [shape: bf16[2,8,32], index: 0, kind: input, shape index: {}, may-alias: {0,17}]
  %s1 = inlined_call_operand.vmem [shape: f32[2,1,8], index: 1, kind: input, shape index: {}]
  %s2 = inlined_call_operand.vmem [shape: f32[8,8], index: 2, kind: input, shape index: {}]
  %s3 = inlined_call_operand.vmem [shape: bf16[32,32], index: 3, kind: input, shape index: {}]
  %s4 = inlined_call_operand.vmem [shape: f32[1,32], index: 4, kind: input, shape index: {}]
  %s5 = inlined_call_operand.vmem [shape: bf16[32,32], index: 5, kind: input, shape index: {}]
  %s6 = inlined_call_operand.vmem [shape: f32[1,32], index: 6, kind: input, shape index: {}]
  %s7 = inlined_call_operand.vmem [shape: bf16[32,32], index: 7, kind: input, shape index: {}]
  %s8 = inlined_call_operand.vmem [shape: f32[1,32], index: 8, kind: input, shape index: {}]
  %s9 = inlined_call_operand.vmem [shape: f32[1,32], index: 9, kind: input, shape index: {}]
  %s10 = inlined_call_operand.vmem [shape: f32[1,32], index: 10, kind: input, shape index: {}]
  %s11 = inlined_call_operand.vmem [shape: bf16[32,64], index: 11, kind: input, shape index: {}]
  %s12 = inlined_call_operand.vmem [shape: f32[1,64], index: 12, kind: input, shape index: {}]
  %s13 = inlined_call_operand.vmem [shape: bf16[64,32], index: 13, kind: input, shape index: {}]
  %s14 = inlined_call_operand.vmem [shape: f32[1,32], index: 14, kind: input, shape index: {}]
  %s15 = inlined_call_operand.vmem [shape: f32[1,32], index: 15, kind: input, shape index: {}]
  %s16 = inlined_call_operand.vmem [shape: f32[1,32], index: 16, kind: input, shape index: {}]
  %s17 = inlined_call_operand.vmem [shape: bf16[2,8,32], index: 17, kind: output, shape index: {}, may-alias: {0,17}]
  %s18 = sld [smem:[#allocation0]]
  $region105: #{transformer_encoder.3} parent=0
    _
  %s20 = ssub.s32 1, %s18
  %s21 = scalar_select 0, %s20, %s18
  loop: start=0, step=1, limit=4
  $region2: #{transformer_encoder.3} parent=0 // loop_pre_header
    _
  $region3: #{transformer_encoder.3} parent=0 // loop_header
    %s23 = sphi 0, %s27
    %p24 = scmp.ge.s32.totalorder %s23, 4
    %s30 = sphi 0, %s42
    %s31 = sphi 0, %s38
    %s32 = sphi 0, %s30
    %s33 = sphi 0, %s31
    %s34 = sphi 0, %s32
    %s35 = sphi 0, %s33
    %s45 = sphi 0, %s47
    %s48 = sphi 0, %s45
    %s49 = sphi 0, %s48
    %s65 = sphi 0, %s49
    %s71 = sphi 0, %s73
    %s74 = sphi 0, %s71
    %s75 = sphi 0, %s74
    %s91 = sphi 0, %s75
    %s97 = sphi 0, %s99
    %s100 = sphi 0, %s97
    %s101 = sphi 0, %s100
    %s117 = sphi 0, %s101
    %s121 = sphi 0, %s121
    %s123 = sphi 0, %s121
    %s124 = sphi 0, %s123
    %s138 = sphi 0, %s124
    %s142 = sphi 0, %s142
    %s144 = sphi 0, %s142
    %s145 = sphi 0, %s144
    %s159 = sphi 0, %s145
    %s163 = sphi 0, %s163
    %s165 = sphi 0, %s163
    %s166 = sphi 0, %s165
    %s180 = sphi 0, %s166
    %s184 = sphi 0, %s184
    %s186 = sphi 0, %s184
    %s187 = sphi 0, %s186
    %s201 = sphi 0, %s187
    %s205 = sphi 0, %s205
    %s207 = sphi 0, %s205
    %s208 = sphi 0, %s207
    %s222 = sphi 0, %s208
    %s226 = sphi 0, %s226
    %s228 = sphi 0, %s226
    %s229 = sphi 0, %s228
    %s243 = sphi 0, %s229
    %s247 = sphi 0, %s247
    %s249 = sphi 0, %s247
    %s250 = sphi 0, %s249
    %s264 = sphi 0, %s250
    %s268 = sphi 0, %s268
    %s270 = sphi 0, %s268
    %s271 = sphi 0, %s270
    %s285 = sphi 0, %s271
    %s289 = sphi 0, %s289
    %s291 = sphi 0, %s289
    %s292 = sphi 0, %s291
    %s306 = sphi 0, %s292
    %s310 = sphi 0, %s310
    %s312 = sphi 0, %s310
    %s313 = sphi 0, %s312
    %s327 = sphi 0, %s313
    %s331 = sphi 0, %s331
    %s333 = sphi 0, %s331
    %s334 = sphi 0, %s333
    %s348 = sphi 0, %s334
    %s352 = sphi 0, %s352
    %s354 = sphi 0, %s352
    %s355 = sphi 0, %s354
    %s369 = sphi 0, %s355
    %s373 = sphi 0, %s373
    %s375 = sphi 0, %s373
    %s376 = sphi 0, %s375
    %s390 = sphi 0, %s376
    %s394 = sphi 0, %s394
    %s396 = sphi 0, %s394
    %s397 = sphi 0, %s396
    %s411 = sphi 0, %s397
    %s419 = sphi 0, %s421
    %s422 = sphi 0, %s419
    %s423 = sphi 0, %s422
    %s439 = sphi 0, %s423
  $region4: #{transformer_encoder.3} parent=0 // loop_header_branch
    %26 = sbr.rel (%p24) target = $region8
  $region5: #{transformer_encoder.3} parent=0 // loop_body
    %s28 = ssub.s32 %s23, 1
    %s29 = ssub.s32 %s23, 2
    %s36 = sadd.s32 1, %s31
    %p37 = scmp.ge.s32.totalorder %s36, 1
    %s38 = scalar_select %p37, 0, %s36
    %s39 = sadd.s32 1, %s30
    %s40 = scalar_select %p37, %s39, %s30
    %p41 = scmp.ge.s32.totalorder %s40, 2
    %s42 = scalar_select %p41, 0, %s40
    %s43 = ssub.s32 %s30, %s42
    %p44 = scmp.eq.s32.totalorder %s43, 0
    %s46 = sadd.s32 %s45, 1
    %s47 = scalar_select %p44, %s45, %s46
    %p50 = pneg %p44
    %p51 = scmp.eq.s32.totalorder %s23, 1
    %p52 = por %p50, %p51
    %p53 = scmp.ne.s32.totalorder %s45, %s48
    %p54 = scmp.eq.s32.totalorder %s23, 0
    %p55 = por %p53, %p54
    %p56 = scmp.ne.s32.totalorder %s45, %s48
    %p57 = scmp.eq.s32.totalorder %s28, 1
    %p58 = por %p56, %p57
    %p59 = scmp.ne.s32.totalorder %s48, %s49
    %p60 = scmp.eq.s32.totalorder %s28, 0
    %p61 = por %p59, %p60
    %p62 = scmp.ne.s32.totalorder %s48, %s49
    %p63 = scmp.eq.s32.totalorder %s29, 1
    %p64 = por %p62, %p63
    %p66 = scmp.ne.s32.totalorder %s49, %s65
    %p67 = scmp.eq.s32.totalorder %s29, 0
    %p68 = por %p66, %p67
    %s69 = ssub.s32 %s30, %s42
    %p70 = scmp.eq.s32.totalorder %s69, 0
    %s72 = sadd.s32 %s71, 1
    %s73 = scalar_select %p70, %s71, %s72
    %p76 = pneg %p70
    %p77 = scmp.eq.s32.totalorder %s23, 1
    %p78 = por %p76, %p77
    %p79 = scmp.ne.s32.totalorder %s71, %s74
    %p80 = scmp.eq.s32.totalorder %s23, 0
    %p81 = por %p79, %p80
    %p82 = scmp.ne.s32.totalorder %s71, %s74
    %p83 = scmp.eq.s32.totalorder %s28, 1
    %p84 = por %p82, %p83
    %p85 = scmp.ne.s32.totalorder %s74, %s75
    %p86 = scmp.eq.s32.totalorder %s28, 0
    %p87 = por %p85, %p86
    %p88 = scmp.ne.s32.totalorder %s74, %s75
    %p89 = scmp.eq.s32.totalorder %s29, 1
    %p90 = por %p88, %p89
    %p92 = scmp.ne.s32.totalorder %s75, %s91
    %p93 = scmp.eq.s32.totalorder %s29, 0
    %p94 = por %p92, %p93
    %s95 = ssub.s32 %s31, %s38
    %p96 = scmp.eq.s32.totalorder %s95, 0
    %s98 = sadd.s32 %s97, 1
    %s99 = scalar_select %p96, %s97, %s98
    %p102 = pneg %p96
    %p103 = scmp.eq.s32.totalorder %s23, 1
    %p104 = por %p102, %p103
    %p105 = scmp.ne.s32.totalorder %s97, %s100
    %p106 = scmp.eq.s32.totalorder %s23, 0
    %p107 = por %p105, %p106
    %p108 = scmp.ne.s32.totalorder %s97, %s100
    %p109 = scmp.eq.s32.totalorder %s28, 1
    %p110 = por %p108, %p109
    %p111 = scmp.ne.s32.totalorder %s100, %s101
    %p112 = scmp.eq.s32.totalorder %s28, 0
    %p113 = por %p111, %p112
    %p114 = scmp.ne.s32.totalorder %s100, %s101
    %p115 = scmp.eq.s32.totalorder %s29, 1
    %p116 = por %p114, %p115
    %p118 = scmp.ne.s32.totalorder %s101, %s117
    %p119 = scmp.eq.s32.totalorder %s29, 0
    %p120 = por %p118, %p119
    %s122 = sadd.s32 %s121, 1
    %p125 = scmp.eq.s32.totalorder %s23, 1
    %p126 = scmp.ne.s32.totalorder %s121, %s123
    %p127 = scmp.eq.s32.totalorder %s23, 0
    %p128 = por %p126, %p127
    %p129 = scmp.ne.s32.totalorder %s121, %s123
    %p130 = scmp.eq.s32.totalorder %s28, 1
    %p131 = por %p129, %p130
    %p132 = scmp.ne.s32.totalorder %s123, %s124
    %p133 = scmp.eq.s32.totalorder %s28, 0
    %p134 = por %p132, %p133
    %p135 = scmp.ne.s32.totalorder %s123, %s124
    %p136 = scmp.eq.s32.totalorder %s29, 1
    %p137 = por %p135, %p136
    %p139 = scmp.ne.s32.totalorder %s124, %s138
    %p140 = scmp.eq.s32.totalorder %s29, 0
    %p141 = por %p139, %p140
    %s143 = sadd.s32 %s142, 1
    %p146 = scmp.eq.s32.totalorder %s23, 1
    %p147 = scmp.ne.s32.totalorder %s142, %s144
    %p148 = scmp.eq.s32.totalorder %s23, 0
    %p149 = por %p147, %p148
    %p150 = scmp.ne.s32.totalorder %s142, %s144
    %p151 = scmp.eq.s32.totalorder %s28, 1
    %p152 = por %p150, %p151
    %p153 = scmp.ne.s32.totalorder %s144, %s145
    %p154 = scmp.eq.s32.totalorder %s28, 0
    %p155 = por %p153, %p154
    %p156 = scmp.ne.s32.totalorder %s144, %s145
    %p157 = scmp.eq.s32.totalorder %s29, 1
    %p158 = por %p156, %p157
    %p160 = scmp.ne.s32.totalorder %s145, %s159
    %p161 = scmp.eq.s32.totalorder %s29, 0
    %p162 = por %p160, %p161
    %s164 = sadd.s32 %s163, 1
    %p167 = scmp.eq.s32.totalorder %s23, 1
    %p168 = scmp.ne.s32.totalorder %s163, %s165
    %p169 = scmp.eq.s32.totalorder %s23, 0
    %p170 = por %p168, %p169
    %p171 = scmp.ne.s32.totalorder %s163, %s165
    %p172 = scmp.eq.s32.totalorder %s28, 1
    %p173 = por %p171, %p172
    %p174 = scmp.ne.s32.totalorder %s165, %s166
    %p175 = scmp.eq.s32.totalorder %s28, 0
    %p176 = por %p174, %p175
    %p177 = scmp.ne.s32.totalorder %s165, %s166
    %p178 = scmp.eq.s32.totalorder %s29, 1
    %p179 = por %p177, %p178
    %p181 = scmp.ne.s32.totalorder %s166, %s180
    %p182 = scmp.eq.s32.totalorder %s29, 0
    %p183 = por %p181, %p182
    %s185 = sadd.s32 %s184, 1
    %p188 = scmp.eq.s32.totalorder %s23, 1
    %p189 = scmp.ne.s32.totalorder %s184, %s186
    %p190 = scmp.eq.s32.totalorder %s23, 0
    %p191 = por %p189, %p190
    %p192 = scmp.ne.s32.totalorder %s184, %s186
    %p193 = scmp.eq.s32.totalorder %s28, 1
    %p194 = por %p192, %p193
    %p195 = scmp.ne.s32.totalorder %s186, %s187
    %p196 = scmp.eq.s32.totalorder %s28, 0
    %p197 = por %p195, %p196
    %p198 = scmp.ne.s32.totalorder %s186, %s187
    %p199 = scmp.eq.s32.totalorder %s29, 1
    %p200 = por %p198, %p199
    %p202 = scmp.ne.s32.totalorder %s187, %s201
    %p203 = scmp.eq.s32.totalorder %s29, 0
    %p204 = por %p202, %p203
    %s206 = sadd.s32 %s205, 1
    %p209 = scmp.eq.s32.totalorder %s23, 1
    %p210 = scmp.ne.s32.totalorder %s205, %s207
    %p211 = scmp.eq.s32.totalorder %s23, 0
    %p212 = por %p210, %p211
    %p213 = scmp.ne.s32.totalorder %s205, %s207
    %p214 = scmp.eq.s32.totalorder %s28, 1
    %p215 = por %p213, %p214
    %p216 = scmp.ne.s32.totalorder %s207, %s208
    %p217 = scmp.eq.s32.totalorder %s28, 0
    %p218 = por %p216, %p217
    %p219 = scmp.ne.s32.totalorder %s207, %s208
    %p220 = scmp.eq.s32.totalorder %s29, 1
    %p221 = por %p219, %p220
    %p223 = scmp.ne.s32.totalorder %s208, %s222
    %p224 = scmp.eq.s32.totalorder %s29, 0
    %p225 = por %p223, %p224
    %s227 = sadd.s32 %s226, 1
    %p230 = scmp.eq.s32.totalorder %s23, 1
    %p231 = scmp.ne.s32.totalorder %s226, %s228
    %p232 = scmp.eq.s32.totalorder %s23, 0
    %p233 = por %p231, %p232
    %p234 = scmp.ne.s32.totalorder %s226, %s228
    %p235 = scmp.eq.s32.totalorder %s28, 1
    %p236 = por %p234, %p235
    %p237 = scmp.ne.s32.totalorder %s228, %s229
    %p238 = scmp.eq.s32.totalorder %s28, 0
    %p239 = por %p237, %p238
    %p240 = scmp.ne.s32.totalorder %s228, %s229
    %p241 = scmp.eq.s32.totalorder %s29, 1
    %p242 = por %p240, %p241
    %p244 = scmp.ne.s32.totalorder %s229, %s243
    %p245 = scmp.eq.s32.totalorder %s29, 0
    %p246 = por %p244, %p245
    %s248 = sadd.s32 %s247, 1
    %p251 = scmp.eq.s32.totalorder %s23, 1
    %p252 = scmp.ne.s32.totalorder %s247, %s249
    %p253 = scmp.eq.s32.totalorder %s23, 0
    %p254 = por %p252, %p253
    %p255 = scmp.ne.s32.totalorder %s247, %s249
    %p256 = scmp.eq.s32.totalorder %s28, 1
    %p257 = por %p255, %p256
    %p258 = scmp.ne.s32.totalorder %s249, %s250
    %p259 = scmp.eq.s32.totalorder %s28, 0
    %p260 = por %p258, %p259
    %p261 = scmp.ne.s32.totalorder %s249, %s250
    %p262 = scmp.eq.s32.totalorder %s29, 1
    %p263 = por %p261, %p262
    %p265 = scmp.ne.s32.totalorder %s250, %s264
    %p266 = scmp.eq.s32.totalorder %s29, 0
    %p267 = por %p265, %p266
    %s269 = sadd.s32 %s268, 1
    %p272 = scmp.eq.s32.totalorder %s23, 1
    %p273 = scmp.ne.s32.totalorder %s268, %s270
    %p274 = scmp.eq.s32.totalorder %s23, 0
    %p275 = por %p273, %p274
    %p276 = scmp.ne.s32.totalorder %s268, %s270
    %p277 = scmp.eq.s32.totalorder %s28, 1
    %p278 = por %p276, %p277
    %p279 = scmp.ne.s32.totalorder %s270, %s271
    %p280 = scmp.eq.s32.totalorder %s28, 0
    %p281 = por %p279, %p280
    %p282 = scmp.ne.s32.totalorder %s270, %s271
    %p283 = scmp.eq.s32.totalorder %s29, 1
    %p284 = por %p282, %p283
    %p286 = scmp.ne.s32.totalorder %s271, %s285
    %p287 = scmp.eq.s32.totalorder %s29, 0
    %p288 = por %p286, %p287
    %s290 = sadd.s32 %s289, 1
    %p293 = scmp.eq.s32.totalorder %s23, 1
    %p294 = scmp.ne.s32.totalorder %s289, %s291
    %p295 = scmp.eq.s32.totalorder %s23, 0
    %p296 = por %p294, %p295
    %p297 = scmp.ne.s32.totalorder %s289, %s291
    %p298 = scmp.eq.s32.totalorder %s28, 1
    %p299 = por %p297, %p298
    %p300 = scmp.ne.s32.totalorder %s291, %s292
    %p301 = scmp.eq.s32.totalorder %s28, 0
    %p302 = por %p300, %p301
    %p303 = scmp.ne.s32.totalorder %s291, %s292
    %p304 = scmp.eq.s32.totalorder %s29, 1
    %p305 = por %p303, %p304
    %p307 = scmp.ne.s32.totalorder %s292, %s306
    %p308 = scmp.eq.s32.totalorder %s29, 0
    %p309 = por %p307, %p308
    %s311 = sadd.s32 %s310, 1
    %p314 = scmp.eq.s32.totalorder %s23, 1
    %p315 = scmp.ne.s32.totalorder %s310, %s312
    %p316 = scmp.eq.s32.totalorder %s23, 0
    %p317 = por %p315, %p316
    %p318 = scmp.ne.s32.totalorder %s310, %s312
    %p319 = scmp.eq.s32.totalorder %s28, 1
    %p320 = por %p318, %p319
    %p321 = scmp.ne.s32.totalorder %s312, %s313
    %p322 = scmp.eq.s32.totalorder %s28, 0
    %p323 = por %p321, %p322
    %p324 = scmp.ne.s32.totalorder %s312, %s313
    %p325 = scmp.eq.s32.totalorder %s29, 1
    %p326 = por %p324, %p325
    %p328 = scmp.ne.s32.totalorder %s313, %s327
    %p329 = scmp.eq.s32.totalorder %s29, 0
    %p330 = por %p328, %p329
    %s332 = sadd.s32 %s331, 1
    %p335 = scmp.eq.s32.totalorder %s23, 1
    %p336 = scmp.ne.s32.totalorder %s331, %s333
    %p337 = scmp.eq.s32.totalorder %s23, 0
    %p338 = por %p336, %p337
    %p339 = scmp.ne.s32.totalorder %s331, %s333
    %p340 = scmp.eq.s32.totalorder %s28, 1
    %p341 = por %p339, %p340
    %p342 = scmp.ne.s32.totalorder %s333, %s334
    %p343 = scmp.eq.s32.totalorder %s28, 0
    %p344 = por %p342, %p343
    %p345 = scmp.ne.s32.totalorder %s333, %s334
    %p346 = scmp.eq.s32.totalorder %s29, 1
    %p347 = por %p345, %p346
    %p349 = scmp.ne.s32.totalorder %s334, %s348
    %p350 = scmp.eq.s32.totalorder %s29, 0
    %p351 = por %p349, %p350
    %s353 = sadd.s32 %s352, 1
    %p356 = scmp.eq.s32.totalorder %s23, 1
    %p357 = scmp.ne.s32.totalorder %s352, %s354
    %p358 = scmp.eq.s32.totalorder %s23, 0
    %p359 = por %p357, %p358
    %p360 = scmp.ne.s32.totalorder %s352, %s354
    %p361 = scmp.eq.s32.totalorder %s28, 1
    %p362 = por %p360, %p361
    %p363 = scmp.ne.s32.totalorder %s354, %s355
    %p364 = scmp.eq.s32.totalorder %s28, 0
    %p365 = por %p363, %p364
    %p366 = scmp.ne.s32.totalorder %s354, %s355
    %p367 = scmp.eq.s32.totalorder %s29, 1
    %p368 = por %p366, %p367
    %p370 = scmp.ne.s32.totalorder %s355, %s369
    %p371 = scmp.eq.s32.totalorder %s29, 0
    %p372 = por %p370, %p371
    %s374 = sadd.s32 %s373, 1
    %p377 = scmp.eq.s32.totalorder %s23, 1
    %p378 = scmp.ne.s32.totalorder %s373, %s375
    %p379 = scmp.eq.s32.totalorder %s23, 0
    %p380 = por %p378, %p379
    %p381 = scmp.ne.s32.totalorder %s373, %s375
    %p382 = scmp.eq.s32.totalorder %s28, 1
    %p383 = por %p381, %p382
    %p384 = scmp.ne.s32.totalorder %s375, %s376
    %p385 = scmp.eq.s32.totalorder %s28, 0
    %p386 = por %p384, %p385
    %p387 = scmp.ne.s32.totalorder %s375, %s376
    %p388 = scmp.eq.s32.totalorder %s29, 1
    %p389 = por %p387, %p388
    %p391 = scmp.ne.s32.totalorder %s376, %s390
    %p392 = scmp.eq.s32.totalorder %s29, 0
    %p393 = por %p391, %p392
    %s395 = sadd.s32 %s394, 1
    %p398 = scmp.eq.s32.totalorder %s23, 1
    %p399 = scmp.ne.s32.totalorder %s394, %s396
    %p400 = scmp.eq.s32.totalorder %s23, 0
    %p401 = por %p399, %p400
    %p402 = scmp.ne.s32.totalorder %s394, %s396
    %p403 = scmp.eq.s32.totalorder %s28, 1
    %p404 = por %p402, %p403
    %p405 = scmp.ne.s32.totalorder %s396, %s397
    %p406 = scmp.eq.s32.totalorder %s28, 0
    %p407 = por %p405, %p406
    %p408 = scmp.ne.s32.totalorder %s396, %s397
    %p409 = scmp.eq.s32.totalorder %s29, 1
    %p410 = por %p408, %p409
    %p412 = scmp.ne.s32.totalorder %s397, %s411
    %p413 = scmp.eq.s32.totalorder %s29, 0
    %p414 = por %p412, %p413
    %s415 = ssub.s32 %s30, %s42
    %s416 = ssub.s32 %s31, %s38
    %s417 = sor.u32 %s415, %s416
    %p418 = scmp.eq.s32.totalorder %s417, 0
    %s420 = sadd.s32 %s419, 1
    %s421 = scalar_select %p418, %s419, %s420
    %p424 = pneg %p418
    %p425 = scmp.eq.s32.totalorder %s23, 1
    %p426 = por %p424, %p425
    %p427 = scmp.ne.s32.totalorder %s419, %s422
    %p428 = scmp.eq.s32.totalorder %s23, 0
    %p429 = por %p427, %p428
    %p430 = scmp.ne.s32.totalorder %s419, %s422
    %p431 = scmp.eq.s32.totalorder %s28, 1
    %p432 = por %p430, %p431
    %p433 = scmp.ne.s32.totalorder %s422, %s423
    %p434 = scmp.eq.s32.totalorder %s28, 0
    %p435 = por %p433, %p434
    %p436 = scmp.ne.s32.totalorder %s422, %s423
    %p437 = scmp.eq.s32.totalorder %s29, 1
    %p438 = por %p436, %p437
    %p440 = scmp.ne.s32.totalorder %s423, %s439
    %p441 = scmp.eq.s32.totalorder %s29, 0
    %p442 = por %p440, %p441
    %p443 = scmp.le.s32.totalorder 1, %s23
    %p444 = scmp.lt.s32.totalorder %s23, 3
    %p445 = pnand %p443, %p444
    %p446 = pneg %p445
    // Predicated region
    $region9: #{transformer_encoder.3} parent=5 // pred_check
      _
    $region10: #{transformer_encoder.3} parent=5 // pred_check_branch
      %448 = sbr.rel (%p445) target = $region12
    $region11: #{transformer_encoder.3} parent=5 // pred_region
      %s449 = ssub.s32 %s23, 1
      // Predicated region
      $region13: #{transformer_encoder.3} parent=11 // pred_check
        %p450 = pneg %p113
      $region14: #{transformer_encoder.3} parent=11 // pred_check_branch
        %452 = sbr.rel (%p450) target = $region16
      $region15: #{transformer_encoder.3} parent=11 // pred_region
        %p453 = scmp.lt.s32.totalorder %s33, 0
        %s454 = scalar_select %p453, %s33, 0
        %s455 = smul.addr %s454, 8
        %s456 = scalar_lea.vmem %s2, %s455
      $region16: #{transformer_encoder.3} parent=11 // pred_fallthru
        _
      // Predicated region
      $region17: #{transformer_encoder.3} parent=11 // pred_check
        %p457 = pneg %p134
      $region18: #{transformer_encoder.3} parent=11 // pred_check_branch
        %459 = sbr.rel (%p457) target = $region20
      $region19: #{transformer_encoder.3} parent=11 // pred_region
        _
      $region20: #{transformer_encoder.3} parent=11 // pred_fallthru
        _
      // Predicated region
      $region21: #{transformer_encoder.3} parent=11 // pred_check
        %p460 = pneg %p155
      $region22: #{transformer_encoder.3} parent=11 // pred_check_branch
        %462 = sbr.rel (%p460) target = $region24
      $region23: #{transformer_encoder.3} parent=11 // pred_region
        _
      $region24: #{transformer_encoder.3} parent=11 // pred_fallthru
        _
      // Predicated region
      $region25: #{transformer_encoder.3} parent=11 // pred_check
        %p463 = pneg %p176
      $region26: #{transformer_encoder.3} parent=11 // pred_check_branch
        %465 = sbr.rel (%p463) target = $region28
      $region27: #{transformer_encoder.3} parent=11 // pred_region
        _
      $region28: #{transformer_encoder.3} parent=11 // pred_fallthru
        _
      // Predicated region
      $region29: #{transformer_encoder.3} parent=11 // pred_check
        %p466 = pneg %p197
      $region30: #{transformer_encoder.3} parent=11 // pred_check_branch
        %468 = sbr.rel (%p466) target = $region32
      $region31: #{transformer_encoder.3} parent=11 // pred_region
        _
      $region32: #{transformer_encoder.3} parent=11 // pred_fallthru
        _
      // Predicated region
      $region33: #{transformer_encoder.3} parent=11 // pred_check
        %p469 = pneg %p218
      $region34: #{transformer_encoder.3} parent=11 // pred_check_branch
        %471 = sbr.rel (%p469) target = $region36
      $region35: #{transformer_encoder.3} parent=11 // pred_region
        _
      $region36: #{transformer_encoder.3} parent=11 // pred_fallthru
        _
      // Predicated region
      $region37: #{transformer_encoder.3} parent=11 // pred_check
        %p472 = pneg %p239
      $region38: #{transformer_encoder.3} parent=11 // pred_check_branch
        %474 = sbr.rel (%p472) target = $region40
      $region39: #{transformer_encoder.3} parent=11 // pred_region
        _
      $region40: #{transformer_encoder.3} parent=11 // pred_fallthru
        _
      // Predicated region
      $region41: #{transformer_encoder.3} parent=11 // pred_check
        %p475 = pneg %p260
      $region42: #{transformer_encoder.3} parent=11 // pred_check_branch
        %477 = sbr.rel (%p475) target = $region44
      $region43: #{transformer_encoder.3} parent=11 // pred_region
        _
      $region44: #{transformer_encoder.3} parent=11 // pred_fallthru
        _
      // Predicated region
      $region45: #{transformer_encoder.3} parent=11 // pred_check
        %p478 = pneg %p281
      $region46: #{transformer_encoder.3} parent=11 // pred_check_branch
        %480 = sbr.rel (%p478) target = $region48
      $region47: #{transformer_encoder.3} parent=11 // pred_region
        _
      $region48: #{transformer_encoder.3} parent=11 // pred_fallthru
        _
      // Predicated region
      $region49: #{transformer_encoder.3} parent=11 // pred_check
        %p481 = pneg %p302
      $region50: #{transformer_encoder.3} parent=11 // pred_check_branch
        %483 = sbr.rel (%p481) target = $region52
      $region51: #{transformer_encoder.3} parent=11 // pred_region
        _
      $region52: #{transformer_encoder.3} parent=11 // pred_fallthru
        _
      // Predicated region
      $region53: #{transformer_encoder.3} parent=11 // pred_check
        %p484 = pneg %p323
      $region54: #{transformer_encoder.3} parent=11 // pred_check_branch
        %486 = sbr.rel (%p484) target = $region56
      $region55: #{transformer_encoder.3} parent=11 // pred_region
        _
      $region56: #{transformer_encoder.3} parent=11 // pred_fallthru
        _
      // Predicated region
      $region57: #{transformer_encoder.3} parent=11 // pred_check
        %p487 = pneg %p344
      $region58: #{transformer_encoder.3} parent=11 // pred_check_branch
        %489 = sbr.rel (%p487) target = $region60
      $region59: #{transformer_encoder.3} parent=11 // pred_region
        _
      $region60: #{transformer_encoder.3} parent=11 // pred_fallthru
        _
      // Predicated region
      $region61: #{transformer_encoder.3} parent=11 // pred_check
        %p490 = pneg %p365
      $region62: #{transformer_encoder.3} parent=11 // pred_check_branch
        %492 = sbr.rel (%p490) target = $region64
      $region63: #{transformer_encoder.3} parent=11 // pred_region
        _
      $region64: #{transformer_encoder.3} parent=11 // pred_fallthru
        _
      // Predicated region
      $region65: #{transformer_encoder.3} parent=11 // pred_check
        %p493 = pneg %p386
      $region66: #{transformer_encoder.3} parent=11 // pred_check_branch
        %495 = sbr.rel (%p493) target = $region68
      $region67: #{transformer_encoder.3} parent=11 // pred_region
        _
      $region68: #{transformer_encoder.3} parent=11 // pred_fallthru
        _
      // Predicated region
      $region69: #{transformer_encoder.3} parent=11 // pred_check
        %p496 = pneg %p407
      $region70: #{transformer_encoder.3} parent=11 // pred_check_branch
        %498 = sbr.rel (%p496) target = $region72
      $region71: #{transformer_encoder.3} parent=11 // pred_region
        _
      $region72: #{transformer_encoder.3} parent=11 // pred_fallthru
        _
    $region12: #{transformer_encoder.3} parent=5 // pred_fallthru
      _
    %p499 = scmp.lt.s32.totalorder %s23, 2
    // Predicated region
    $region73: #{transformer_encoder.3} parent=5 // pred_check
      %p500 = pneg %p499
    $region74: #{transformer_encoder.3} parent=5 // pred_check_branch
      %502 = sbr.rel (%p500) target = $region76
    $region75: #{transformer_encoder.3} parent=5 // pred_region
      // Predicated region
      $region77: #{transformer_encoder.3} parent=75 // pred_check
        %p503 = pneg %p55
      $region78: #{transformer_encoder.3} parent=75 // pred_check_branch
        %505 = sbr.rel (%p503) target = $region80
      $region79: #{transformer_encoder.3} parent=75 // pred_region
        %p506 = scmp.lt.s32.totalorder %s30, 1
        %s507 = scalar_select %p506, %s30, 1
        %s508 = smul.addr %s507, 4
        %s509 = scalar_lea.vmem %s0, %s508
      $region80: #{transformer_encoder.3} parent=75 // pred_fallthru
        _
      // Predicated region
      $region81: #{transformer_encoder.3} parent=75 // pred_check
        %p510 = pneg %p81
      $region82: #{transformer_encoder.3} parent=75 // pred_check_branch
        %512 = sbr.rel (%p510) target = $region84
      $region83: #{transformer_encoder.3} parent=75 // pred_region
        %p513 = scmp.lt.s32.totalorder %s30, 1
        %s514 = scalar_select %p513, %s30, 1
        %s515 = scalar_lea.vmem %s1, %s514
      $region84: #{transformer_encoder.3} parent=75 // pred_fallthru
        _
    $region76: #{transformer_encoder.3} parent=5 // pred_fallthru
      _
    %p516 = scmp.le.s32.totalorder 1, %s23
    %p517 = scmp.lt.s32.totalorder %s23, 3
    %p518 = pnand %p516, %p517
    %p519 = pneg %p518
    // Predicated region
    $region85: #{transformer_encoder.3} parent=5 // pred_check
      _
    $region86: #{transformer_encoder.3} parent=5 // pred_check_branch
      %521 = sbr.rel (%p518) target = $region88
    $region87: #{transformer_encoder.3} parent=5 // pred_region
      %s522 = ssub.s32 %s23, 1
      %p523 = scmp.lt.s32.totalorder %s32, 1
      %s524 = scalar_select %p523, %s32, 1
      %s525 = smul.addr %s524, 4
      %s526 = scalar_lea.vmem %s0, %s525
      %p527 = pneg %p61
      %p528 = pneg %p58
      %p529 = scmp.lt.s32.totalorder %s32, 1
      %s530 = scalar_select %p529, %s32, 1
      %s531 = scalar_lea.vmem %s1, %s530
      %p532 = pneg %p87
      %p533 = pneg %p84
      %p534 = scmp.lt.s32.totalorder %s33, 0
      %s535 = scalar_select %p534, %s33, 0
      %s536 = smul.addr %s535, 8
      %s537 = scalar_lea.vmem %s2, %s536
      %p538 = pneg %p113
      %p539 = pneg %p110
      %p540 = pneg %p134
      %p541 = pneg %p131
      %p542 = pneg %p155
      %p543 = pneg %p152
      %p544 = pneg %p176
      %p545 = pneg %p173
      %p546 = pneg %p197
      %p547 = pneg %p194
      %p548 = pneg %p218
      %p549 = pneg %p215
      %p550 = pneg %p239
      %p551 = pneg %p236
      %p552 = pneg %p260
      %p553 = pneg %p257
      %p554 = pneg %p281
      %p555 = pneg %p278
      %p556 = pneg %p302
      %p557 = pneg %p299
      %p558 = pneg %p323
      %p559 = pneg %p320
      %p560 = pneg %p344
      %p561 = pneg %p341
      %p562 = pneg %p365
      %p563 = pneg %p362
      %p564 = pneg %p386
      %p565 = pneg %p383
      %p566 = pneg %p407
      %p567 = pneg %p404
      %p568 = pneg %p435
      %p569 = pneg %p432
      %p570 = scmp.lt.s32.totalorder %s32, 1
      %s571 = scalar_select %p570, %s32, 1
      %p572 = scmp.lt.s32.totalorder %s33, 0
      %s573 = scalar_select %p572, %s33, 0
      %s574 = sadd.s32 %s573, %s571
      %s575 = smul.addr %s574, 4
      %s576 = scalar_lea.vmem %s17, %s575
      %p577 = scmp.lt.s32.totalorder %s32, 1
      %s578 = scalar_select %p577, %s32, 1
      %s579 = smul.addr %s578, 4
      %s580 = scalar_lea.vmem %s0, %s579
      %p581 = scmp.lt.s32.totalorder %s32, 1
      %s582 = scalar_select %p581, %s32, 1
      %s583 = scalar_lea.vmem %s1, %s582
      %p584 = scmp.lt.s32.totalorder %s33, 0
      %s585 = scalar_select %p584, %s33, 0
      %s586 = smul.addr %s585, 8
      %s587 = scalar_lea.vmem %s2, %s586
      %p588 = scmp.lt.s32.totalorder %s32, 1
      %s589 = scalar_select %p588, %s32, 1
      %p590 = scmp.lt.s32.totalorder %s33, 0
      %s591 = scalar_select %p590, %s33, 0
      %s592 = sadd.s32 %s591, %s589
      %s593 = smul.addr %s592, 4
      %s594 = scalar_lea.vmem %s17, %s593
      %p596 = scmp.eq.s32.totalorder %s33, 0
      // Predicated region
      $region89: #{transformer_encoder.3} parent=87 // pred_check
        %p597 = pneg %p596
      $region90: #{transformer_encoder.3} parent=87 // pred_check_branch
        %599 = sbr.rel (%p597) target = $region92
      $region91: #{transformer_encoder.3} parent=87 // pred_region
        %v600 = vld [vmem:[%s580] sm:$0xf]
        %v601 = vld [vmem:[%s5] sm:$0xf]
        %v602 = vld [vmem:[%s5 + $0x4] sm:$0xf]
        %v603 = vld [vmem:[%s5 + $0x8] sm:$0xf]
        %v604 = vld [vmem:[%s5 + $0xc] sm:$0xf]
        %v605 = vld [vmem:[%s6] sm:$0x1]
        %v607 = vlaneseq
        %v608 = vshrl.u32 %v607, 7
        %v609 = vsub.s32 0, %v608
        %v610 = vrot.slane %v605, %v609
        %v616 = vunpack.c.l.b16 %v601
        %v617 = vunpack.c.l.b16 %v602
        %v618 = vunpack.c.l.b16 %v603
        %v619 = vunpack.c.l.b16 %v604
        %v620 = vpack.c.b16 %v617, %v616
        %v621 = vpack.c.b16 %v619, %v618
        %vm624 = vcmask 261120
        %v626 = vsel %vm624, %v600, 0
        %628 = vmatprep.subr.bf16.mxu0 0
        %629 = vmatpush1.bf16.msra.mxu0 %v620
        %630 = vmatprep.subr.bf16.mxu0 0
        %631 = vmatpush1.bf16.msra.mxu0 %v621
        %632 = vmatprep.subr.bf16.mxu0 0
        %633 = vmatpush1.bf16.msra.mxu0 0
        %634 = vmatprep.subr.bf16.mxu0 0
        %635 = vmatpush1.bf16.msra.mxu0 0
        %636 = vmatprep.subr.bf16.mxu0 0
        %637 = vmatpush1.bf16.msra.mxu0 0
        %638 = vmatprep.subr.bf16.mxu0 0
        %639 = vmatpush1.bf16.msra.mxu0 0
        %640 = vmatprep.subr.bf16.mxu0 0
        %641 = vmatpush1.bf16.msra.mxu0 0
        %642 = vmatprep.subr.bf16.mxu0 0
        %643 = vmatpush1.bf16.msra.mxu0 0
        %644 = vmatprep.subr.bf16.mxu0 0
        %645 = vmatpush1.bf16.msra.mxu0 0
        %646 = vmatprep.subr.bf16.mxu0 0
        %647 = vmatpush1.bf16.msra.mxu0 0
        %648 = vmatprep.subr.bf16.mxu0 0
        %649 = vmatpush1.bf16.msra.mxu0 0
        %650 = vmatprep.subr.bf16.mxu0 0
        %651 = vmatpush1.bf16.msra.mxu0 0
        %652 = vmatprep.subr.bf16.mxu0 0
        %653 = vmatpush1.bf16.msra.mxu0 0
        %654 = vmatprep.subr.bf16.mxu0 0
        %655 = vmatpush1.bf16.msra.mxu0 0
        %656 = vmatprep.subr.bf16.mxu0 0
        %657 = vmatpush1.bf16.msra.mxu0 0
        %658 = vmatprep.subr.bf16.mxu0 0
        %659 = vmatpush1.bf16.msra.mxu0 0
        %660 = vmatprep.mubr.bf16.mxu0 0
        %661 = vmatmul.mubr.bf16.gmra.mrb[0].mxu0 %v626
        %v662 = vpop.f32.mrb[0].mxu0
        %v663 = vadd.f32 %v610, %v662
        %v664 = vpop.f32.mrb[0].mxu0
        %v665 = vpop.f32.mrb[0].mxu0
        %v666 = vpop.f32.mrb[0].mxu0
        %667 = vdwg.mxu0
        %v668 = vld [vmem:[%s7] sm:$0xf]
        %v669 = vld [vmem:[%s7 + $0x4] sm:$0xf]
        %v670 = vld [vmem:[%s7 + $0x8] sm:$0xf]
        %v671 = vld [vmem:[%s7 + $0xc] sm:$0xf]
        %v672 = vld [vmem:[%s8] sm:$0x1]
        %v674 = vlaneseq
        %v675 = vshrl.u32 %v674, 7
        %v676 = vsub.s32 0, %v675
        %v677 = vrot.slane %v672, %v676
        %v683 = vunpack.c.l.b16 %v668
        %v684 = vunpack.c.l.b16 %v669
        %v685 = vunpack.c.l.b16 %v670
        %v686 = vunpack.c.l.b16 %v671
        %v687 = vpack.c.b16 %v684, %v683
        %v688 = vpack.c.b16 %v686, %v685
        %691 = vmatprep.subr.bf16.mxu0 0
        %692 = vmatpush1.bf16.msra.mxu0 %v687
        %693 = vmatprep.subr.bf16.mxu0 0
        %694 = vmatpush1.bf16.msra.mxu0 %v688
        %695 = vmatprep.subr.bf16.mxu0 0
        %696 = vmatpush1.bf16.msra.mxu0 0
        %697 = vmatprep.subr.bf16.mxu0 0
        %698 = vmatpush1.bf16.msra.mxu0 0
        %699 = vmatprep.subr.bf16.mxu0 0
        %700 = vmatpush1.bf16.msra.mxu0 0
        %701 = vmatprep.subr.bf16.mxu0 0
        %702 = vmatpush1.bf16.msra.mxu0 0
        %703 = vmatprep.subr.bf16.mxu0 0
        %704 = vmatpush1.bf16.msra.mxu0 0
        %705 = vmatprep.subr.bf16.mxu0 0
        %706 = vmatpush1.bf16.msra.mxu0 0
        %707 = vmatprep.subr.bf16.mxu0 0
        %708 = vmatpush1.bf16.msra.mxu0 0
        %709 = vmatprep.subr.bf16.mxu0 0
        %710 = vmatpush1.bf16.msra.mxu0 0
        %711 = vmatprep.subr.bf16.mxu0 0
        %712 = vmatpush1.bf16.msra.mxu0 0
        %713 = vmatprep.subr.bf16.mxu0 0
        %714 = vmatpush1.bf16.msra.mxu0 0
        %715 = vmatprep.subr.bf16.mxu0 0
        %716 = vmatpush1.bf16.msra.mxu0 0
        %717 = vmatprep.subr.bf16.mxu0 0
        %718 = vmatpush1.bf16.msra.mxu0 0
        %719 = vmatprep.subr.bf16.mxu0 0
        %720 = vmatpush1.bf16.msra.mxu0 0
        %721 = vmatprep.subr.bf16.mxu0 0
        %722 = vmatpush1.bf16.msra.mxu0 0
        %723 = vmatprep.mubr.bf16.mxu0 0
        %724 = vmatmul.mubr.bf16.gmra.mrb[0].mxu0 %v626
        %v725 = vpop.f32.mrb[0].mxu0
        %v726 = vadd.f32 %v677, %v725
        %v727 = vpop.f32.mrb[0].mxu0
        %v728 = vpop.f32.mrb[0].mxu0
        %v729 = vpop.f32.mrb[0].mxu0
        %730 = vdwg.mxu0
        %731 = vxpose.xlu0.b32.start [1/16] %v663, 128
        %732 = vxpose.xlu0.b32.cont [2/16] 0.0, 128
        %733 = vxpose.xlu0.b32.cont [3/16] 0.0, 128
        %734 = vxpose.xlu0.b32.cont [4/16] 0.0, 128
        %735 = vxpose.xlu0.b32.cont [5/16] 0.0, 128
        %736 = vxpose.xlu0.b32.cont [6/16] 0.0, 128
        %737 = vxpose.xlu0.b32.cont [7/16] 0.0, 128
        %738 = vxpose.xlu0.b32.cont [8/16] 0.0, 128
        %739 = vxpose.xlu0.b32.cont [9/16] 0.0, 128
        %740 = vxpose.xlu0.b32.cont [10/16] 0.0, 128
        %741 = vxpose.xlu0.b32.cont [11/16] 0.0, 128
        %742 = vxpose.xlu0.b32.cont [12/16] 0.0, 128
        %743 = vxpose.xlu0.b32.cont [13/16] 0.0, 128
        %744 = vxpose.xlu0.b32.cont [14/16] 0.0, 128
        %745 = vxpose.xlu0.b32.cont [15/16] 0.0, 128
        %746 = vxpose.xlu0.b32.end [16/16] 0.0, 128
        %v747 = vpop.trf.xlu0
        %v748 = vpop.trf.xlu0
        %v749 = vpop.trf.xlu0
        %v750 = vpop.trf.xlu0
        %v751 = vpop.trf.xlu0
        %v752 = vpop.trf.xlu0
        %v753 = vpop.trf.xlu0
        %v754 = vpop.trf.xlu0
        %v755 = vpop.trf.xlu0
        %v756 = vpop.trf.xlu0
        %v757 = vpop.trf.xlu0
        %v758 = vpop.trf.xlu0
        %v759 = vpop.trf.xlu0
        %v760 = vpop.trf.xlu0
        %v761 = vpop.trf.xlu0
        %v762 = vpop.trf.xlu0
        %764 = vrot.lane.b32.xlu0 %v663, 120
        %v765 = vpop.permute.xlu0 %764
        %767 = vxpose.xlu0.b32.start [1/16] %v765, 128
        %768 = vxpose.xlu0.b32.cont [2/16] 0.0, 128
        %769 = vxpose.xlu0.b32.cont [3/16] 0.0, 128
        %770 = vxpose.xlu0.b32.cont [4/16] 0.0, 128
        %771 = vxpose.xlu0.b32.cont [5/16] 0.0, 128
        %772 = vxpose.xlu0.b32.cont [6/16] 0.0, 128
        %773 = vxpose.xlu0.b32.cont [7/16] 0.0, 128
        %774 = vxpose.xlu0.b32.cont [8/16] 0.0, 128
        %775 = vxpose.xlu0.b32.cont [9/16] 0.0, 128
        %776 = vxpose.xlu0.b32.cont [10/16] 0.0, 128
        %777 = vxpose.xlu0.b32.cont [11/16] 0.0, 128
        %778 = vxpose.xlu0.b32.cont [12/16] 0.0, 128
        %779 = vxpose.xlu0.b32.cont [13/16] 0.0, 128
        %780 = vxpose.xlu0.b32.cont [14/16] 0.0, 128
        %781 = vxpose.xlu0.b32.cont [15/16] 0.0, 128
        %782 = vxpose.xlu0.b32.end [16/16] 0.0, 128
        %v783 = vpop.trf.xlu0
        %v784 = vpop.trf.xlu0
        %v785 = vpop.trf.xlu0
        %v786 = vpop.trf.xlu0
        %v787 = vpop.trf.xlu0
        %v788 = vpop.trf.xlu0
        %v789 = vpop.trf.xlu0
        %v790 = vpop.trf.xlu0
        %v791 = vpop.trf.xlu0
        %v792 = vpop.trf.xlu0
        %v793 = vpop.trf.xlu0
        %v794 = vpop.trf.xlu0
        %v795 = vpop.trf.xlu0
        %v796 = vpop.trf.xlu0
        %v797 = vpop.trf.xlu0
        %v798 = vpop.trf.xlu0
        %799 = vrot.lane.b32.xlu0 %v663, 112
        %v800 = vpop.permute.xlu0 %799
        %802 = vxpose.xlu0.b32.start [1/16] %v800, 128
        %803 = vxpose.xlu0.b32.cont [2/16] 0.0, 128
        %804 = vxpose.xlu0.b32.cont [3/16] 0.0, 128
        %805 = vxpose.xlu0.b32.cont [4/16] 0.0, 128
        %806 = vxpose.xlu0.b32.cont [5/16] 0.0, 128
        %807 = vxpose.xlu0.b32.cont [6/16] 0.0, 128
        %808 = vxpose.xlu0.b32.cont [7/16] 0.0, 128
        %809 = vxpose.xlu0.b32.cont [8/16] 0.0, 128
        %810 = vxpose.xlu0.b32.cont [9/16] 0.0, 128
        %811 = vxpose.xlu0.b32.cont [10/16] 0.0, 128
        %812 = vxpose.xlu0.b32.cont [11/16] 0.0, 128
        %813 = vxpose.xlu0.b32.cont [12/16] 0.0, 128
        %814 = vxpose.xlu0.b32.cont [13/16] 0.0, 128
        %815 = vxpose.xlu0.b32.cont [14/16] 0.0, 128
        %816 = vxpose.xlu0.b32.cont [15/16] 0.0, 128
        %817 = vxpose.xlu0.b32.end [16/16] 0.0, 128
        %v818 = vpop.trf.xlu0
        %v819 = vpop.trf.xlu0
        %v820 = vpop.trf.xlu0
        %v821 = vpop.trf.xlu0
        %v822 = vpop.trf.xlu0
        %v823 = vpop.trf.xlu0
        %v824 = vpop.trf.xlu0
        %v825 = vpop.trf.xlu0
        %v826 = vpop.trf.xlu0
        %v827 = vpop.trf.xlu0
        %v828 = vpop.trf.xlu0
        %v829 = vpop.trf.xlu0
        %v830 = vpop.trf.xlu0
        %v831 = vpop.trf.xlu0
        %v832 = vpop.trf.xlu0
        %v833 = vpop.trf.xlu0
        %834 = vrot.lane.b32.xlu0 %v663, 104
        %v835 = vpop.permute.xlu0 %834
        %837 = vxpose.xlu0.b32.start [1/16] %v835, 128
        %838 = vxpose.xlu0.b32.cont [2/16] 0.0, 128
        %839 = vxpose.xlu0.b32.cont [3/16] 0.0, 128
        %840 = vxpose.xlu0.b32.cont [4/16] 0.0, 128
        %841 = vxpose.xlu0.b32.cont [5/16] 0.0, 128
        %842 = vxpose.xlu0.b32.cont [6/16] 0.0, 128
        %843 = vxpose.xlu0.b32.cont [7/16] 0.0, 128
        %844 = vxpose.xlu0.b32.cont [8/16] 0.0, 128
        %845 = vxpose.xlu0.b32.cont [9/16] 0.0, 128
        %846 = vxpose.xlu0.b32.cont [10/16] 0.0, 128
        %847 = vxpose.xlu0.b32.cont [11/16] 0.0, 128
        %848 = vxpose.xlu0.b32.cont [12/16] 0.0, 128
        %849 = vxpose.xlu0.b32.cont [13/16] 0.0, 128
        %850 = vxpose.xlu0.b32.cont [14/16] 0.0, 128
        %851 = vxpose.xlu0.b32.cont [15/16] 0.0, 128
        %852 = vxpose.xlu0.b32.end [16/16] 0.0, 128
        %v853 = vpop.trf.xlu0
        %v854 = vpop.trf.xlu0
        %v855 = vpop.trf.xlu0
        %v856 = vpop.trf.xlu0
        %v857 = vpop.trf.xlu0
        %v858 = vpop.trf.xlu0
        %v859 = vpop.trf.xlu0
        %v860 = vpop.trf.xlu0
        %v861 = vpop.trf.xlu0
        %v862 = vpop.trf.xlu0
        %v863 = vpop.trf.xlu0
        %v864 = vpop.trf.xlu0
        %v865 = vpop.trf.xlu0
        %v866 = vpop.trf.xlu0
        %v867 = vpop.trf.xlu0
        %v868 = vpop.trf.xlu0
        %v869 = vpack.c.bf16 %v747, %v747
        %v870 = vpack.c.bf16 %v783, %v783
        %v871 = vpack.c.bf16 %v818, %v818
        %v872 = vpack.c.bf16 %v853, %v853
        %vm873 = vcmask 60416
        %874 = vst.msk [vmem:[#allocation2] sm:$0xf] %vm873, %v869
        %875 = vst.msk [vmem:[#allocation2 + $0x4] sm:$0xf] %vm873, %v870
        %876 = vst.msk [vmem:[#allocation2 + $0x8] sm:$0xf] %vm873, %v871
        %877 = vst.msk [vmem:[#allocation2 + $0xc] sm:$0xf] %vm873, %v872
        %879 = vrot.lane.b32.xlu0 %v726, 120
        %v880 = vpop.permute.xlu0 %879
        %882 = vrot.lane.b32.xlu0 %v726, 112
        %v883 = vpop.permute.xlu0 %882
        %885 = vrot.lane.b32.xlu0 %v726, 104
        %v886 = vpop.permute.xlu0 %885
        %v888 = vpack.c.bf16 %v726, %v726
        %v889 = vpack.c.bf16 %v880, %v880
        %v890 = vpack.c.bf16 %v883, %v883
        %v891 = vpack.c.bf16 %v886, %v886
        %892 = vst.msk [vmem:[#allocation3] sm:$0xf] %vm873, %v888
        %893 = vst.msk [vmem:[#allocation3 + $0x4] sm:$0xf] %vm873, %v889
        %894 = vst.msk [vmem:[#allocation3 + $0x8] sm:$0xf] %vm873, %v890
        %895 = vst.msk [vmem:[#allocation3 + $0xc] sm:$0xf] %vm873, %v891
      $region92: #{transformer_encoder.3} parent=87 // pred_fallthru
        _
      %s896 = smul.u32 %s33, 8
      %s897 = sshra.s32 %s896, 3
      %s898 = sand.u32 %s896, 7
      %s899 = smul.addr %s897, 4
      %s900 = scalar_lea.vmem %s580, %s899
      %v901 = vld [vmem:[%s900] sm:$0xf]
      %v902 = vld [vmem:[%s3] sm:$0xf]
      %v903 = vld [vmem:[%s3 + $0x4] sm:$0xf]
      %v904 = vld [vmem:[%s3 + $0x8] sm:$0xf]
      %v905 = vld [vmem:[%s3 + $0xc] sm:$0xf]
      %v906 = vld [vmem:[%s4] sm:$0x1]
      %v908 = vlaneseq
      %v909 = vshrl.u32 %v908, 7
      %v910 = vsub.s32 0, %v909
      %v911 = vrot.slane %v906, %v910
      %v917 = vunpack.c.l.b16 %v902
      %v918 = vunpack.c.l.b16 %v903
      %v919 = vunpack.c.l.b16 %v904
      %v920 = vunpack.c.l.b16 %v905
      %v921 = vpack.c.b16 %v918, %v917
      %v922 = vpack.c.b16 %v920, %v919
      %vm925 = vcmask 261120
      %v927 = vsel %vm925, %v901, 0
      %929 = vmatprep.subr.bf16.mxu0 0
      %930 = vmatpush1.bf16.msra.mxu0 %v921
      %931 = vmatprep.subr.bf16.mxu0 0
      %932 = vmatpush1.bf16.msra.mxu0 %v922
      %933 = vmatprep.subr.bf16.mxu0 0
      %934 = vmatpush1.bf16.msra.mxu0 0
      %935 = vmatprep.subr.bf16.mxu0 0
      %936 = vmatpush1.bf16.msra.mxu0 0
      %937 = vmatprep.subr.bf16.mxu0 0
      %938 = vmatpush1.bf16.msra.mxu0 0
      %939 = vmatprep.subr.bf16.mxu0 0
      %940 = vmatpush1.bf16.msra.mxu0 0
      %941 = vmatprep.subr.bf16.mxu0 0
      %942 = vmatpush1.bf16.msra.mxu0 0
      %943 = vmatprep.subr.bf16.mxu0 0
      %944 = vmatpush1.bf16.msra.mxu0 0
      %945 = vmatprep.subr.bf16.mxu0 0
      %946 = vmatpush1.bf16.msra.mxu0 0
      %947 = vmatprep.subr.bf16.mxu0 0
      %948 = vmatpush1.bf16.msra.mxu0 0
      %949 = vmatprep.subr.bf16.mxu0 0
      %950 = vmatpush1.bf16.msra.mxu0 0
      %951 = vmatprep.subr.bf16.mxu0 0
      %952 = vmatpush1.bf16.msra.mxu0 0
      %953 = vmatprep.subr.bf16.mxu0 0
      %954 = vmatpush1.bf16.msra.mxu0 0
      %955 = vmatprep.subr.bf16.mxu0 0
      %956 = vmatpush1.bf16.msra.mxu0 0
      %957 = vmatprep.subr.bf16.mxu0 0
      %958 = vmatpush1.bf16.msra.mxu0 0
      %959 = vmatprep.subr.bf16.mxu0 0
      %960 = vmatpush1.bf16.msra.mxu0 0
      %961 = vmatprep.mubr.bf16.mxu0 0
      %962 = vmatmul.mubr.bf16.gmra.mrb[0].mxu0 %v927
      %v963 = vpop.f32.mrb[0].mxu0
      %v964 = vadd.f32 %v911, %v963
      %v965 = vpop.f32.mrb[0].mxu0
      %v966 = vpop.f32.mrb[0].mxu0
      %v967 = vpop.f32.mrb[0].mxu0
      %968 = vdwg.mxu0
      %970 = vrot.lane.b32.xlu0 %v964, 120
      %v971 = vpop.permute.xlu0 %970
      %973 = vrot.lane.b32.xlu0 %v964, 112
      %v974 = vpop.permute.xlu0 %973
      %976 = vrot.lane.b32.xlu0 %v964, 104
      %v977 = vpop.permute.xlu0 %976
      %v979 = vmul.f32 %v964, 0.35355338
      %v980 = vmul.f32 %v971, 0.35355338
      %v981 = vmul.f32 %v974, 0.35355338
      %v982 = vmul.f32 %v977, 0.35355338
      %v983 = vpack.c.bf16 %v979, %v979
      %v984 = vpack.c.bf16 %v980, %v980
      %v985 = vpack.c.bf16 %v981, %v981
      %v986 = vpack.c.bf16 %v982, %v982
      %v987 = vld [vmem:[%s583] sm:$0x1]
      %v988 = vld [vmem:[#allocation2] sm:$0xf]
      %v989 = vld [vmem:[#allocation2 + $0x4] sm:$0xf]
      %v990 = vld [vmem:[#allocation2 + $0x8] sm:$0xf]
      %v991 = vld [vmem:[#allocation2 + $0xc] sm:$0xf]
      %v992 = vld [vmem:[%s587] sm:$0xff]
      %v994 = vlaneseq
      %v995 = vshrl.u32 %v994, 7
      %v996 = vsub.s32 0, %v995
      %v997 = vrot.slane %v987, %v996
      %v999 = vadd.f32 %v997, %v992
      %vm1000 = vcmask 64512
      %v1002 = vsel %vm1000, %v983, 0
      %vm1004 = vcmask 1043456
      %v1006 = vsel %vm1004, %v988, 0
      %1008 = vmatprep.subr.bf16.mxu0 0
      %1009 = vmatpush1.bf16.msra.mxu0 %v1006
      %1010 = vmatprep.subr.bf16.mxu0 0
      %1011 = vmatpush1.bf16.msra.mxu0 0
      %1012 = vmatprep.subr.bf16.mxu0 0
      %1013 = vmatpush1.bf16.msra.mxu0 0
      %1014 = vmatprep.subr.bf16.mxu0 0
      %1015 = vmatpush1.bf16.msra.mxu0 0
      %1016 = vmatprep.subr.bf16.mxu0 0
      %1017 = vmatpush1.bf16.msra.mxu0 0
      %1018 = vmatprep.subr.bf16.mxu0 0
      %1019 = vmatpush1.bf16.msra.mxu0 0
      %1020 = vmatprep.subr.bf16.mxu0 0
      %1021 = vmatpush1.bf16.msra.mxu0 0
      %1022 = vmatprep.subr.bf16.mxu0 0
      %1023 = vmatpush1.bf16.msra.mxu0 0
      %1024 = vmatprep.subr.bf16.mxu0 0
      %1025 = vmatpush1.bf16.msra.mxu0 0
      %1026 = vmatprep.subr.bf16.mxu0 0
      %1027 = vmatpush1.bf16.msra.mxu0 0
      %1028 = vmatprep.subr.bf16.mxu0 0
      %1029 = vmatpush1.bf16.msra.mxu0 0
      %1030 = vmatprep.subr.bf16.mxu0 0
      %1031 = vmatpush1.bf16.msra.mxu0 0
      %1032 = vmatprep.subr.bf16.mxu0 0
      %1033 = vmatpush1.bf16.msra.mxu0 0
      %1034 = vmatprep.subr.bf16.mxu0 0
      %1035 = vmatpush1.bf16.msra.mxu0 0
      %1036 = vmatprep.subr.bf16.mxu0 0
      %1037 = vmatpush1.bf16.msra.mxu0 0
      %1038 = vmatprep.subr.bf16.mxu0 0
      %1039 = vmatpush1.bf16.msra.mxu0 0
      %1040 = vmatprep.mubr.bf16.mxu0 0
      %1041 = vmatmul.mubr.bf16.gmra.mrb[0].mxu0 %v1002
      %v1042 = vpop.f32.mrb[0].mxu0
      %v1043 = vadd.f32 %v999, %v1042
      %v1044 = vpop.f32.mrb[0].mxu0
      %v1045 = vpop.f32.mrb[0].mxu0
      %v1046 = vpop.f32.mrb[0].mxu0
      %1047 = vdwg.mxu0
      %v1049 = vsel %vm1000, %v984, 0
      %v1052 = vsel %vm1004, %v989, 0
      %1054 = vmatprep.subr.bf16.mxu0 0
      %1055 = vmatpush1.bf16.msra.mxu0 %v1052
      %1056 = vmatprep.subr.bf16.mxu0 0
      %1057 = vmatpush1.bf16.msra.mxu0 0
      %1058 = vmatprep.subr.bf16.mxu0 0
      %1059 = vmatpush1.bf16.msra.mxu0 0
      %1060 = vmatprep.subr.bf16.mxu0 0
      %1061 = vmatpush1.bf16.msra.mxu0 0
      %1062 = vmatprep.subr.bf16.mxu0 0
      %1063 = vmatpush1.bf16.msra.mxu0 0
      %1064 = vmatprep.subr.bf16.mxu0 0
      %1065 = vmatpush1.bf16.msra.mxu0 0
      %1066 = vmatprep.subr.bf16.mxu0 0
      %1067 = vmatpush1.bf16.msra.mxu0 0
      %1068 = vmatprep.subr.bf16.mxu0 0
      %1069 = vmatpush1.bf16.msra.mxu0 0
      %1070 = vmatprep.subr.bf16.mxu0 0
      %1071 = vmatpush1.bf16.msra.mxu0 0
      %1072 = vmatprep.subr.bf16.mxu0 0
      %1073 = vmatpush1.bf16.msra.mxu0 0
      %1074 = vmatprep.subr.bf16.mxu0 0
      %1075 = vmatpush1.bf16.msra.mxu0 0
      %1076 = vmatprep.subr.bf16.mxu0 0
      %1077 = vmatpush1.bf16.msra.mxu0 0
      %1078 = vmatprep.subr.bf16.mxu0 0
      %1079 = vmatpush1.bf16.msra.mxu0 0
      %1080 = vmatprep.subr.bf16.mxu0 0
      %1081 = vmatpush1.bf16.msra.mxu0 0
      %1082 = vmatprep.subr.bf16.mxu0 0
      %1083 = vmatpush1.bf16.msra.mxu0 0
      %1084 = vmatprep.subr.bf16.mxu0 0
      %1085 = vmatpush1.bf16.msra.mxu0 0
      %1086 = vmatprep.mubr.bf16.mxu0 0
      %1087 = vmatmul.mubr.bf16.gmra.mrb[0].mxu0 %v1049
      %v1088 = vpop.f32.mrb[0].mxu0
      %v1089 = vadd.f32 %v999, %v1088
      %v1090 = vpop.f32.mrb[0].mxu0
      %v1091 = vpop.f32.mrb[0].mxu0
      %v1092 = vpop.f32.mrb[0].mxu0
      %1093 = vdwg.mxu0
      %v1095 = vsel %vm1000, %v985, 0
      %v1098 = vsel %vm1004, %v990, 0
      %1100 = vmatprep.subr.bf16.mxu0 0
      %1101 = vmatpush1.bf16.msra.mxu0 %v1098
      %1102 = vmatprep.subr.bf16.mxu0 0
      %1103 = vmatpush1.bf16.msra.mxu0 0
      %1104 = vmatprep.subr.bf16.mxu0 0
      %1105 = vmatpush1.bf16.msra.mxu0 0
      %1106 = vmatprep.subr.bf16.mxu0 0
      %1107 = vmatpush1.bf16.msra.mxu0 0
      %1108 = vmatprep.subr.bf16.mxu0 0
      %1109 = vmatpush1.bf16.msra.mxu0 0
      %1110 = vmatprep.subr.bf16.mxu0 0
      %1111 = vmatpush1.bf16.msra.mxu0 0
      %1112 = vmatprep.subr.bf16.mxu0 0
      %1113 = vmatpush1.bf16.msra.mxu0 0
      %1114 = vmatprep.subr.bf16.mxu0 0
      %1115 = vmatpush1.bf16.msra.mxu0 0
      %1116 = vmatprep.subr.bf16.mxu0 0
      %1117 = vmatpush1.bf16.msra.mxu0 0
      %1118 = vmatprep.subr.bf16.mxu0 0
      %1119 = vmatpush1.bf16.msra.mxu0 0
      %1120 = vmatprep.subr.bf16.mxu0 0
      %1121 = vmatpush1.bf16.msra.mxu0 0
      %1122 = vmatprep.subr.bf16.mxu0 0
      %1123 = vmatpush1.bf16.msra.mxu0 0
      %1124 = vmatprep.subr.bf16.mxu0 0
      %1125 = vmatpush1.bf16.msra.mxu0 0
      %1126 = vmatprep.subr.bf16.mxu0 0
      %1127 = vmatpush1.bf16.msra.mxu0 0
      %1128 = vmatprep.subr.bf16.mxu0 0
      %1129 = vmatpush1.bf16.msra.mxu0 0
      %1130 = vmatprep.subr.bf16.mxu0 0
      %1131 = vmatpush1.bf16.msra.mxu0 0
      %1132 = vmatprep.mubr.bf16.mxu0 0
      %1133 = vmatmul.mubr.bf16.gmra.mrb[0].mxu0 %v1095
      %v1134 = vpop.f32.mrb[0].mxu0
      %v1135 = vadd.f32 %v999, %v1134
      %v1136 = vpop.f32.mrb[0].mxu0
      %v1137 = vpop.f32.mrb[0].mxu0
      %v1138 = vpop.f32.mrb[0].mxu0
      %1139 = vdwg.mxu0
      %v1141 = vsel %vm1000, %v986, 0
      %v1144 = vsel %vm1004, %v991, 0
      %1146 = vmatprep.subr.bf16.mxu0 0
      %1147 = vmatpush1.bf16.msra.mxu0 %v1144
      %1148 = vmatprep.subr.bf16.mxu0 0
      %1149 = vmatpush1.bf16.msra.mxu0 0
      %1150 = vmatprep.subr.bf16.mxu0 0
      %1151 = vmatpush1.bf16.msra.mxu0 0
      %1152 = vmatprep.subr.bf16.mxu0 0
      %1153 = vmatpush1.bf16.msra.mxu0 0
      %1154 = vmatprep.subr.bf16.mxu0 0
      %1155 = vmatpush1.bf16.msra.mxu0 0
      %1156 = vmatprep.subr.bf16.mxu0 0
      %1157 = vmatpush1.bf16.msra.mxu0 0
      %1158 = vmatprep.subr.bf16.mxu0 0
      %1159 = vmatpush1.bf16.msra.mxu0 0
      %1160 = vmatprep.subr.bf16.mxu0 0
      %1161 = vmatpush1.bf16.msra.mxu0 0
      %1162 = vmatprep.subr.bf16.mxu0 0
      %1163 = vmatpush1.bf16.msra.mxu0 0
      %1164 = vmatprep.subr.bf16.mxu0 0
      %1165 = vmatpush1.bf16.msra.mxu0 0
      %1166 = vmatprep.subr.bf16.mxu0 0
      %1167 = vmatpush1.bf16.msra.mxu0 0
      %1168 = vmatprep.subr.bf16.mxu0 0
      %1169 = vmatpush1.bf16.msra.mxu0 0
      %1170 = vmatprep.subr.bf16.mxu0 0
      %1171 = vmatpush1.bf16.msra.mxu0 0
      %1172 = vmatprep.subr.bf16.mxu0 0
      %1173 = vmatpush1.bf16.msra.mxu0 0
      %1174 = vmatprep.subr.bf16.mxu0 0
      %1175 = vmatpush1.bf16.msra.mxu0 0
      %1176 = vmatprep.subr.bf16.mxu0 0
      %1177 = vmatpush1.bf16.msra.mxu0 0
      %1178 = vmatprep.mubr.bf16.mxu0 0
      %1179 = vmatmul.mubr.bf16.gmra.mrb[0].mxu0 %v1141
      %v1180 = vpop.f32.mrb[0].mxu0
      %v1181 = vadd.f32 %v999, %v1180
      %v1182 = vpop.f32.mrb[0].mxu0
      %v1183 = vpop.f32.mrb[0].mxu0
      %v1184 = vpop.f32.mrb[0].mxu0
      %1185 = vdwg.mxu0
      %v1186 = vsel %vm1000, %v1043, -inf
      %1187 = vmax.xlane.f32.xlu0 %v1186
      %v1188 = vpop.xlane.xlu0 %1187
      %v1189 = vsel %vm1000, %v1089, -inf
      %1190 = vmax.xlane.f32.xlu0 %v1189
      %v1191 = vpop.xlane.xlu0 %1190
      %v1192 = vsel %vm1000, %v1135, -inf
      %1193 = vmax.xlane.f32.xlu0 %v1192
      %v1194 = vpop.xlane.xlu0 %1193
      %v1195 = vsel %vm1000, %v1181, -inf
      %1196 = vmax.xlane.f32.xlu0 %v1195
      %v1197 = vpop.xlane.xlu0 %1196
      %v1198 = vmax.f32 %v1188, -1e+30
      %v1199 = vmax.f32 %v1191, -1e+30
      %v1200 = vmax.f32 %v1194, -1e+30
      %v1201 = vmax.f32 %v1197, -1e+30
      %v1202 = vsub.f32 -1e+30, %v1198
      %v1203 = vsub.f32 -1e+30, %v1199
      %v1204 = vsub.f32 -1e+30, %v1200
      %v1205 = vsub.f32 -1e+30, %v1201
      %v1206 = vmul.f32 %v1202, 1.442695
      %v1207 = vpow.pop %v1206
      %v1208 = vmul.f32 %v1203, 1.442695
      %v1209 = vpow.pop %v1208
      %v1210 = vmul.f32 %v1204, 1.442695
      %v1211 = vpow.pop %v1210
      %v1212 = vmul.f32 %v1205, 1.442695
      %v1213 = vpow.pop %v1212
      %v1214 = vsub.f32 %v1043, %v1198
      %v1215 = vsub.f32 %v1089, %v1199
      %v1216 = vsub.f32 %v1135, %v1200
      %v1217 = vsub.f32 %v1181, %v1201
      %v1218 = vmul.f32 %v1214, 1.442695
      %v1219 = vpow.pop %v1218
      %v1220 = vmul.f32 %v1215, 1.442695
      %v1221 = vpow.pop %v1220
      %v1222 = vmul.f32 %v1216, 1.442695
      %v1223 = vpow.pop %v1222
      %v1224 = vmul.f32 %v1217, 1.442695
      %v1225 = vpow.pop %v1224
      %v1226 = vmul.f32 %v1207, 0.0
      %v1227 = vmul.f32 %v1209, 0.0
      %v1228 = vmul.f32 %v1211, 0.0
      %v1229 = vmul.f32 %v1213, 0.0
      %v1230 = vsel %vm1000, %v1219, 0.0
      %1231 = vadd.xlane.f32.xlu0 %v1230
      %v1232 = vpop.xlane.xlu0 %1231
      %v1233 = vsel %vm1000, %v1221, 0.0
      %1234 = vadd.xlane.f32.xlu0 %v1233
      %v1235 = vpop.xlane.xlu0 %1234
      %v1236 = vsel %vm1000, %v1223, 0.0
      %1237 = vadd.xlane.f32.xlu0 %v1236
      %v1238 = vpop.xlane.xlu0 %1237
      %v1239 = vsel %vm1000, %v1225, 0.0
      %1240 = vadd.xlane.f32.xlu0 %v1239
      %v1241 = vpop.xlane.xlu0 %1240
      %v1242 = vadd.f32 %v1226, %v1232
      %v1243 = vadd.f32 %v1227, %v1235
      %v1244 = vadd.f32 %v1228, %v1238
      %v1245 = vadd.f32 %v1229, %v1241
      %v1246 = vld [vmem:[#allocation3] sm:$0xf]
      %v1247 = vld [vmem:[#allocation3 + $0x4] sm:$0xf]
      %v1248 = vld [vmem:[#allocation3 + $0x8] sm:$0xf]
      %v1249 = vld [vmem:[#allocation3 + $0xc] sm:$0xf]
      %v1250 = vpack.c.bf16 %v1219, %v1219
      %v1251 = vpack.c.bf16 %v1221, %v1221
      %v1252 = vpack.c.bf16 %v1223, %v1223
      %v1253 = vpack.c.bf16 %v1225, %v1225
      %v1255 = vsel %vm1000, %v1250, 0
      %v1258 = vsel %vm1004, %v1246, 0
      %1260 = vmatprep.subr.bf16.mxu0 0
      %1261 = vmatpush1.bf16.msra.mxu0 %v1258
      %1262 = vmatprep.subr.bf16.mxu0 0
      %1263 = vmatpush1.bf16.msra.mxu0 0
      %1264 = vmatprep.subr.bf16.mxu0 0
      %1265 = vmatpush1.bf16.msra.mxu0 0
      %1266 = vmatprep.subr.bf16.mxu0 0
      %1267 = vmatpush1.bf16.msra.mxu0 0
      %1268 = vmatprep.subr.bf16.mxu0 0
      %1269 = vmatpush1.bf16.msra.mxu0 0
      %1270 = vmatprep.subr.bf16.mxu0 0
      %1271 = vmatpush1.bf16.msra.mxu0 0
      %1272 = vmatprep.subr.bf16.mxu0 0
      %1273 = vmatpush1.bf16.msra.mxu0 0
      %1274 = vmatprep.subr.bf16.mxu0 0
      %1275 = vmatpush1.bf16.msra.mxu0 0
      %1276 = vmatprep.subr.bf16.mxu0 0
      %1277 = vmatpush1.bf16.msra.mxu0 0
      %1278 = vmatprep.subr.bf16.mxu0 0
      %1279 = vmatpush1.bf16.msra.mxu0 0
      %1280 = vmatprep.subr.bf16.mxu0 0
      %1281 = vmatpush1.bf16.msra.mxu0 0
      %1282 = vmatprep.subr.bf16.mxu0 0
      %1283 = vmatpush1.bf16.msra.mxu0 0
      %1284 = vmatprep.subr.bf16.mxu0 0
      %1285 = vmatpush1.bf16.msra.mxu0 0
      %1286 = vmatprep.subr.bf16.mxu0 0
      %1287 = vmatpush1.bf16.msra.mxu0 0
      %1288 = vmatprep.subr.bf16.mxu0 0
      %1289 = vmatpush1.bf16.msra.mxu0 0
      %1290 = vmatprep.subr.bf16.mxu0 0
      %1291 = vmatpush1.bf16.msra.mxu0 0
      %1292 = vmatprep.mubr.bf16.mxu0 0
      %1293 = vmatmul.mubr.bf16.gmra.mrb[0].mxu0 %v1255
      %v1294 = vpop.f32.mrb[0].mxu0
      %v1295 = vadd.f32 0.0, %v1294
      %v1296 = vpop.f32.mrb[0].mxu0
      %v1297 = vpop.f32.mrb[0].mxu0
      %v1298 = vpop.f32.mrb[0].mxu0
      %1299 = vdwg.mxu0
      %v1301 = vsel %vm1000, %v1251, 0
      %v1304 = vsel %vm1004, %v1247, 0
      %1306 = vmatprep.subr.bf16.mxu0 0
      %1307 = vmatpush1.bf16.msra.mxu0 %v1304
      %1308 = vmatprep.subr.bf16.mxu0 0
      %1309 = vmatpush1.bf16.msra.mxu0 0
      %1310 = vmatprep.subr.bf16.mxu0 0
      %1311 = vmatpush1.bf16.msra.mxu0 0
      %1312 = vmatprep.subr.bf16.mxu0 0
      %1313 = vmatpush1.bf16.msra.mxu0 0
      %1314 = vmatprep.subr.bf16.mxu0 0
      %1315 = vmatpush1.bf16.msra.mxu0 0
      %1316 = vmatprep.subr.bf16.mxu0 0
      %1317 = vmatpush1.bf16.msra.mxu0 0
      %1318 = vmatprep.subr.bf16.mxu0 0
      %1319 = vmatpush1.bf16.msra.mxu0 0
      %1320 = vmatprep.subr.bf16.mxu0 0
      %1321 = vmatpush1.bf16.msra.mxu0 0
      %1322 = vmatprep.subr.bf16.mxu0 0
      %1323 = vmatpush1.bf16.msra.mxu0 0
      %1324 = vmatprep.subr.bf16.mxu0 0
      %1325 = vmatpush1.bf16.msra.mxu0 0
      %1326 = vmatprep.subr.bf16.mxu0 0
      %1327 = vmatpush1.bf16.msra.mxu0 0
      %1328 = vmatprep.subr.bf16.mxu0 0
      %1329 = vmatpush1.bf16.msra.mxu0 0
      %1330 = vmatprep.subr.bf16.mxu0 0
      %1331 = vmatpush1.bf16.msra.mxu0 0
      %1332 = vmatprep.subr.bf16.mxu0 0
      %1333 = vmatpush1.bf16.msra.mxu0 0
      %1334 = vmatprep.subr.bf16.mxu0 0
      %1335 = vmatpush1.bf16.msra.mxu0 0
      %1336 = vmatprep.subr.bf16.mxu0 0
      %1337 = vmatpush1.bf16.msra.mxu0 0
      %1338 = vmatprep.mubr.bf16.mxu0 0
      %1339 = vmatmul.mubr.bf16.gmra.mrb[0].mxu0 %v1301
      %v1340 = vpop.f32.mrb[0].mxu0
      %v1341 = vadd.f32 0.0, %v1340
      %v1342 = vpop.f32.mrb[0].mxu0
      %v1343 = vpop.f32.mrb[0].mxu0
      %v1344 = vpop.f32.mrb[0].mxu0
      %1345 = vdwg.mxu0
      %v1347 = vsel %vm1000, %v1252, 0
      %v1350 = vsel %vm1004, %v1248, 0
      %1352 = vmatprep.subr.bf16.mxu0 0
      %1353 = vmatpush1.bf16.msra.mxu0 %v1350
      %1354 = vmatprep.subr.bf16.mxu0 0
      %1355 = vmatpush1.bf16.msra.mxu0 0
      %1356 = vmatprep.subr.bf16.mxu0 0
      %1357 = vmatpush1.bf16.msra.mxu0 0
      %1358 = vmatprep.subr.bf16.mxu0 0
      %1359 = vmatpush1.bf16.msra.mxu0 0
      %1360 = vmatprep.subr.bf16.mxu0 0
      %1361 = vmatpush1.bf16.msra.mxu0 0
      %1362 = vmatprep.subr.bf16.mxu0 0
      %1363 = vmatpush1.bf16.msra.mxu0 0
      %1364 = vmatprep.subr.bf16.mxu0 0
      %1365 = vmatpush1.bf16.msra.mxu0 0
      %1366 = vmatprep.subr.bf16.mxu0 0
      %1367 = vmatpush1.bf16.msra.mxu0 0
      %1368 = vmatprep.subr.bf16.mxu0 0
      %1369 = vmatpush1.bf16.msra.mxu0 0
      %1370 = vmatprep.subr.bf16.mxu0 0
      %1371 = vmatpush1.bf16.msra.mxu0 0
      %1372 = vmatprep.subr.bf16.mxu0 0
      %1373 = vmatpush1.bf16.msra.mxu0 0
      %1374 = vmatprep.subr.bf16.mxu0 0
      %1375 = vmatpush1.bf16.msra.mxu0 0
      %1376 = vmatprep.subr.bf16.mxu0 0
      %1377 = vmatpush1.bf16.msra.mxu0 0
      %1378 = vmatprep.subr.bf16.mxu0 0
      %1379 = vmatpush1.bf16.msra.mxu0 0
      %1380 = vmatprep.subr.bf16.mxu0 0
      %1381 = vmatpush1.bf16.msra.mxu0 0
      %1382 = vmatprep.subr.bf16.mxu0 0
      %1383 = vmatpush1.bf16.msra.mxu0 0
      %1384 = vmatprep.mubr.bf16.mxu0 0
      %1385 = vmatmul.mubr.bf16.gmra.mrb[0].mxu0 %v1347
      %v1386 = vpop.f32.mrb[0].mxu0
      %v1387 = vadd.f32 0.0, %v1386
      %v1388 = vpop.f32.mrb[0].mxu0
      %v1389 = vpop.f32.mrb[0].mxu0
      %v1390 = vpop.f32.mrb[0].mxu0
      %1391 = vdwg.mxu0
      %v1393 = vsel %vm1000, %v1253, 0
      %v1396 = vsel %vm1004, %v1249, 0
      %1398 = vmatprep.subr.bf16.mxu0 0
      %1399 = vmatpush1.bf16.msra.mxu0 %v1396
      %1400 = vmatprep.subr.bf16.mxu0 0
      %1401 = vmatpush1.bf16.msra.mxu0 0
      %1402 = vmatprep.subr.bf16.mxu0 0
      %1403 = vmatpush1.bf16.msra.mxu0 0
      %1404 = vmatprep.subr.bf16.mxu0 0
      %1405 = vmatpush1.bf16.msra.mxu0 0
      %1406 = vmatprep.subr.bf16.mxu0 0
      %1407 = vmatpush1.bf16.msra.mxu0 0
      %1408 = vmatprep.subr.bf16.mxu0 0
      %1409 = vmatpush1.bf16.msra.mxu0 0
      %1410 = vmatprep.subr.bf16.mxu0 0
      %1411 = vmatpush1.bf16.msra.mxu0 0
      %1412 = vmatprep.subr.bf16.mxu0 0
      %1413 = vmatpush1.bf16.msra.mxu0 0
      %1414 = vmatprep.subr.bf16.mxu0 0
      %1415 = vmatpush1.bf16.msra.mxu0 0
      %1416 = vmatprep.subr.bf16.mxu0 0
      %1417 = vmatpush1.bf16.msra.mxu0 0
      %1418 = vmatprep.subr.bf16.mxu0 0
      %1419 = vmatpush1.bf16.msra.mxu0 0
      %1420 = vmatprep.subr.bf16.mxu0 0
      %1421 = vmatpush1.bf16.msra.mxu0 0
      %1422 = vmatprep.subr.bf16.mxu0 0
      %1423 = vmatpush1.bf16.msra.mxu0 0
      %1424 = vmatprep.subr.bf16.mxu0 0
      %1425 = vmatpush1.bf16.msra.mxu0 0
      %1426 = vmatprep.subr.bf16.mxu0 0
      %1427 = vmatpush1.bf16.msra.mxu0 0
      %1428 = vmatprep.subr.bf16.mxu0 0
      %1429 = vmatpush1.bf16.msra.mxu0 0
      %1430 = vmatprep.mubr.bf16.mxu0 0
      %1431 = vmatmul.mubr.bf16.gmra.mrb[0].mxu0 %v1393
      %v1432 = vpop.f32.mrb[0].mxu0
      %v1433 = vadd.f32 0.0, %v1432
      %v1434 = vpop.f32.mrb[0].mxu0
      %v1435 = vpop.f32.mrb[0].mxu0
      %v1436 = vpop.f32.mrb[0].mxu0
      %1437 = vdwg.mxu0
      %v1438 = vadd.f32 %v1226, %v1295
      %v1439 = vadd.f32 %v1227, %v1341
      %v1440 = vadd.f32 %v1228, %v1387
      %v1441 = vadd.f32 %v1229, %v1433
      %v1442 = vrcp.pop %v1242
      %v1443 = vrcp.pop %v1243
      %v1444 = vrcp.pop %v1244
      %v1445 = vrcp.pop %v1245
      %v1446 = vmul.f32 %v1438, %v1442
      %v1447 = vmul.f32 %v1439, %v1443
      %v1448 = vmul.f32 %v1440, %v1444
      %v1449 = vmul.f32 %v1441, %v1445
      %1451 = vrot.lane.b32.xlu0 %v1447, 8
      %v1452 = vpop.permute.xlu0 %1451
      %1455 = vrot.lane.b32.xlu0 %v1448, 16
      %v1456 = vpop.permute.xlu0 %1455
      %1459 = vrot.lane.b32.xlu0 %v1449, 24
      %v1460 = vpop.permute.xlu0 %1459
      %v1462 = vsel %vm1000, %v1446, %v1452
      %vm1463 = vcmask 130048
      %v1464 = vsel %vm1463, %v1462, %v1456
      %vm1465 = vcmask 195584
      %v1466 = vsel %vm1465, %v1464, %v1460
      %v1467 = vunpack.c.l.bf16 %v901
      %v1468 = vadd.f32 %v1467, %v1466
      %v1469 = vld [vmem:[%s9] sm:$0x1]
      %v1470 = vld [vmem:[%s10] sm:$0x1]
      %v1471 = vsel %vm925, %v1468, 0.0
      %1472 = vadd.xlane.f32.xlu0 %v1471
      %v1473 = vpop.xlane.xlu0 %1472
      %v1474 = vrcp.pop 32.0
      %v1475 = vmul.f32 %v1473, %v1474
      %v1476 = vsub.f32 %v1468, %v1475
      %v1477 = vmul.f32 %v1476, %v1476
      %v1478 = vsel %vm925, %v1477, 0.0
      %1479 = vadd.xlane.f32.xlu0 %v1478
      %v1480 = vpop.xlane.xlu0 %1479
      %v1481 = vmul.f32 %v1480, %v1474
      %v1482 = vadd.f32 %v1481, 1e-05
      %v1483 = vrsqrt.pop %v1482
      %v1484 = vmul.f32 %v1476, %v1483
      %v1486 = vlaneseq
      %v1487 = vshrl.u32 %v1486, 7
      %v1488 = vsub.s32 0, %v1487
      %v1489 = vrot.slane %v1469, %v1488
      %v1491 = vmul.f32 %v1484, %v1489
      %v1493 = vlaneseq
      %v1494 = vshrl.u32 %v1493, 7
      %v1495 = vsub.s32 0, %v1494
      %v1496 = vrot.slane %v1470, %v1495
      %v1498 = vadd.f32 %v1491, %v1496
      %v1499 = vpack.c.bf16 %v1498, %v1498
      %v1500 = vld [vmem:[%s11] sm:$0xf]
      %v1501 = vld [vmem:[%s11 + $0x4] sm:$0xf]
      %v1502 = vld [vmem:[%s11 + $0x8] sm:$0xf]
      %v1503 = vld [vmem:[%s11 + $0xc] sm:$0xf]
      %v1504 = vld [vmem:[%s12] sm:$0x1]
      %v1506 = vlaneseq
      %v1507 = vshrl.u32 %v1506, 7
      %v1508 = vsub.s32 0, %v1507
      %v1509 = vrot.slane %v1504, %v1508
      %v1515 = vunpack.c.l.b16 %v1500
      %v1516 = vunpack.c.l.b16 %v1501
      %v1517 = vunpack.c.l.b16 %v1502
      %v1518 = vunpack.c.l.b16 %v1503
      %v1519 = vpack.c.b16 %v1516, %v1515
      %v1520 = vpack.c.b16 %v1518, %v1517
      %v1524 = vsel %vm925, %v1499, 0
      %1526 = vmatprep.subr.bf16.mxu0 0
      %1527 = vmatpush1.bf16.msra.mxu0 %v1519
      %1528 = vmatprep.subr.bf16.mxu0 0
      %1529 = vmatpush1.bf16.msra.mxu0 %v1520
      %1530 = vmatprep.subr.bf16.mxu0 0
      %1531 = vmatpush1.bf16.msra.mxu0 0
      %1532 = vmatprep.subr.bf16.mxu0 0
      %1533 = vmatpush1.bf16.msra.mxu0 0
      %1534 = vmatprep.subr.bf16.mxu0 0
      %1535 = vmatpush1.bf16.msra.mxu0 0
      %1536 = vmatprep.subr.bf16.mxu0 0
      %1537 = vmatpush1.bf16.msra.mxu0 0
      %1538 = vmatprep.subr.bf16.mxu0 0
      %1539 = vmatpush1.bf16.msra.mxu0 0
      %1540 = vmatprep.subr.bf16.mxu0 0
      %1541 = vmatpush1.bf16.msra.mxu0 0
      %1542 = vmatprep.subr.bf16.mxu0 0
      %1543 = vmatpush1.bf16.msra.mxu0 0
      %1544 = vmatprep.subr.bf16.mxu0 0
      %1545 = vmatpush1.bf16.msra.mxu0 0
      %1546 = vmatprep.subr.bf16.mxu0 0
      %1547 = vmatpush1.bf16.msra.mxu0 0
      %1548 = vmatprep.subr.bf16.mxu0 0
      %1549 = vmatpush1.bf16.msra.mxu0 0
      %1550 = vmatprep.subr.bf16.mxu0 0
      %1551 = vmatpush1.bf16.msra.mxu0 0
      %1552 = vmatprep.subr.bf16.mxu0 0
      %1553 = vmatpush1.bf16.msra.mxu0 0
      %1554 = vmatprep.subr.bf16.mxu0 0
      %1555 = vmatpush1.bf16.msra.mxu0 0
      %1556 = vmatprep.subr.bf16.mxu0 0
      %1557 = vmatpush1.bf16.msra.mxu0 0
      %1558 = vmatprep.mubr.bf16.mxu0 0
      %1559 = vmatmul.mubr.bf16.gmra.mrb[0].mxu0 %v1524
      %v1560 = vpop.f32.mrb[0].mxu0
      %v1561 = vadd.f32 %v1509, %v1560
      %v1562 = vpop.f32.mrb[0].mxu0
      %v1563 = vpop.f32.mrb[0].mxu0
      %v1564 = vpop.f32.mrb[0].mxu0
      %1565 = vdwg.mxu0
      %v1566 = vmax.f32 %v1561, 0.0
      %v1567 = vpack.c.bf16 %v1566, %v1566
      %v1568 = vld [vmem:[%s13] sm:$0xf]
      %v1569 = vld [vmem:[%s13 + $0x4] sm:$0xf]
      %v1570 = vld [vmem:[%s13 + $0x8] sm:$0xf]
      %v1571 = vld [vmem:[%s13 + $0xc] sm:$0xf]
      %v1572 = vld [vmem:[%s13 + $0x10] sm:$0xf]
      %v1573 = vld [vmem:[%s13 + $0x14] sm:$0xf]
      %v1574 = vld [vmem:[%s13 + $0x18] sm:$0xf]
      %v1575 = vld [vmem:[%s13 + $0x1c] sm:$0xf]
      %v1576 = vld [vmem:[%s14] sm:$0x1]
      %v1578 = vlaneseq
      %v1579 = vshrl.u32 %v1578, 7
      %v1580 = vsub.s32 0, %v1579
      %v1581 = vrot.slane %v1576, %v1580
      %v1591 = vunpack.c.l.b16 %v1568
      %v1592 = vunpack.c.l.b16 %v1569
      %v1593 = vunpack.c.l.b16 %v1570
      %v1594 = vunpack.c.l.b16 %v1571
      %v1595 = vunpack.c.l.b16 %v1572
      %v1596 = vunpack.c.l.b16 %v1573
      %v1597 = vunpack.c.l.b16 %v1574
      %v1598 = vunpack.c.l.b16 %v1575
      %v1599 = vpack.c.b16 %v1592, %v1591
      %v1600 = vpack.c.b16 %v1594, %v1593
      %v1601 = vpack.c.b16 %v1596, %v1595
      %v1602 = vpack.c.b16 %v1598, %v1597
      %vm1607 = vcmask 523264
      %v1609 = vsel %vm1607, %v1567, 0
      %1611 = vmatprep.subr.bf16.mxu0 0
      %1612 = vmatpush1.bf16.msra.mxu0 %v1599
      %1613 = vmatprep.subr.bf16.mxu0 0
      %1614 = vmatpush1.bf16.msra.mxu0 %v1600
      %1615 = vmatprep.subr.bf16.mxu0 0
      %1616 = vmatpush1.bf16.msra.mxu0 %v1601
      %1617 = vmatprep.subr.bf16.mxu0 0
      %1618 = vmatpush1.bf16.msra.mxu0 %v1602
      %1619 = vmatprep.subr.bf16.mxu0 0
      %1620 = vmatpush1.bf16.msra.mxu0 0
      %1621 = vmatprep.subr.bf16.mxu0 0
      %1622 = vmatpush1.bf16.msra.mxu0 0
      %1623 = vmatprep.subr.bf16.mxu0 0
      %1624 = vmatpush1.bf16.msra.mxu0 0
      %1625 = vmatprep.subr.bf16.mxu0 0
      %1626 = vmatpush1.bf16.msra.mxu0 0
      %1627 = vmatprep.subr.bf16.mxu0 0
      %1628 = vmatpush1.bf16.msra.mxu0 0
      %1629 = vmatprep.subr.bf16.mxu0 0
      %1630 = vmatpush1.bf16.msra.mxu0 0
      %1631 = vmatprep.subr.bf16.mxu0 0
      %1632 = vmatpush1.bf16.msra.mxu0 0
      %1633 = vmatprep.subr.bf16.mxu0 0
      %1634 = vmatpush1.bf16.msra.mxu0 0
      %1635 = vmatprep.subr.bf16.mxu0 0
      %1636 = vmatpush1.bf16.msra.mxu0 0
      %1637 = vmatprep.subr.bf16.mxu0 0
      %1638 = vmatpush1.bf16.msra.mxu0 0
      %1639 = vmatprep.subr.bf16.mxu0 0
      %1640 = vmatpush1.bf16.msra.mxu0 0
      %1641 = vmatprep.subr.bf16.mxu0 0
      %1642 = vmatpush1.bf16.msra.mxu0 0
      %1643 = vmatprep.mubr.bf16.mxu0 0
      %1644 = vmatmul.mubr.bf16.gmra.mrb[0].mxu0 %v1609
      %v1645 = vpop.f32.mrb[0].mxu0
      %v1646 = vadd.f32 %v1581, %v1645
      %v1647 = vpop.f32.mrb[0].mxu0
      %v1648 = vpop.f32.mrb[0].mxu0
      %v1649 = vpop.f32.mrb[0].mxu0
      %1650 = vdwg.mxu0
      %v1651 = vadd.f32 %v1498, %v1646
      %v1652 = vld [vmem:[%s15] sm:$0x1]
      %v1653 = vld [vmem:[%s16] sm:$0x1]
      %v1654 = vsel %vm925, %v1651, 0.0
      %1655 = vadd.xlane.f32.xlu0 %v1654
      %v1656 = vpop.xlane.xlu0 %1655
      %v1657 = vmul.f32 %v1656, %v1474
      %v1658 = vsub.f32 %v1651, %v1657
      %v1659 = vmul.f32 %v1658, %v1658
      %v1660 = vsel %vm925, %v1659, 0.0
      %1661 = vadd.xlane.f32.xlu0 %v1660
      %v1662 = vpop.xlane.xlu0 %1661
      %v1663 = vmul.f32 %v1662, %v1474
      %v1664 = vadd.f32 %v1663, 1e-05
      %v1665 = vrsqrt.pop %v1664
      %v1666 = vmul.f32 %v1658, %v1665
      %v1668 = vlaneseq
      %v1669 = vshrl.u32 %v1668, 7
      %v1670 = vsub.s32 0, %v1669
      %v1671 = vrot.slane %v1652, %v1670
      %v1673 = vmul.f32 %v1666, %v1671
      %v1675 = vlaneseq
      %v1676 = vshrl.u32 %v1675, 7
      %v1677 = vsub.s32 0, %v1676
      %v1678 = vrot.slane %v1653, %v1677
      %v1680 = vadd.f32 %v1673, %v1678
      %v1681 = vpack.c.bf16 %v1680, %v1680
      %vm1682 = vcmask 257024
      %1683 = vst.msk [vmem:[%s594] sm:$0xf] %vm1682, %v1681
      %p1684 = scmp.lt.s32.totalorder %s32, 1
      %s1685 = scalar_select %p1684, %s32, 1
      %p1686 = scmp.lt.s32.totalorder %s33, 0
      %s1687 = scalar_select %p1686, %s33, 0
      %s1688 = sadd.s32 %s1687, %s1685
      %s1689 = smul.addr %s1688, 4
      %s1690 = scalar_lea.vmem %s17, %s1689
      // Predicated region
      $region93: #{transformer_encoder.3} parent=87 // pred_check
        %p1691 = pneg %p432
      $region94: #{transformer_encoder.3} parent=87 // pred_check_branch
        %1693 = sbr.rel (%p1691) target = $region96
      $region95: #{transformer_encoder.3} parent=87 // pred_region
        _
      $region96: #{transformer_encoder.3} parent=87 // pred_fallthru
        _
    $region88: #{transformer_encoder.3} parent=5 // pred_fallthru
      _
    %p1694 = scmp.le.s32.totalorder 2, %s23
    // Predicated region
    $region97: #{transformer_encoder.3} parent=5 // pred_check
      %p1695 = pneg %p1694
    $region98: #{transformer_encoder.3} parent=5 // pred_check_branch
      %1697 = sbr.rel (%p1695) target = $region100
    $region99: #{transformer_encoder.3} parent=5 // pred_region
      %s1698 = ssub.s32 %s23, 2
      // Predicated region
      $region101: #{transformer_encoder.3} parent=99 // pred_check
        %p1699 = pneg %p438
      $region102: #{transformer_encoder.3} parent=99 // pred_check_branch
        %1701 = sbr.rel (%p1699) target = $region104
      $region103: #{transformer_encoder.3} parent=99 // pred_region
        %p1702 = scmp.lt.s32.totalorder %s34, 1
        %s1703 = scalar_select %p1702, %s34, 1
        %p1704 = scmp.lt.s32.totalorder %s35, 0
        %s1705 = scalar_select %p1704, %s35, 0
        %s1706 = sadd.s32 %s1705, %s1703
        %s1707 = smul.addr %s1706, 4
        %s1708 = scalar_lea.vmem %s17, %s1707
      $region104: #{transformer_encoder.3} parent=99 // pred_fallthru
        _
    $region100: #{transformer_encoder.3} parent=5 // pred_fallthru
      _
  $region6: #{transformer_encoder.3} parent=0 // loop_footer
    %s27 = sadd.s32 1, %s23
  $region7: #{transformer_encoder.3} parent=0 // loop_footer_branch
    %22 = sbr.rel target = $region3
  $region8: #{transformer_encoder.3} parent=0 // loop_exit
    _

</llo_original>
